<compile_context>
chip_gen: v7x
topology: tpu7x:2x2x1
jax: 0.10.0
libtpu: 0.0.40
codegen_flags: <defaults>
</compile_context>

<pallas_src>
import jax
import jax.numpy as jnp
from jax import lax
from jax.experimental import pallas as pl
from jax.experimental.pallas import tpu as pltpu


def _pick_tile(n, target):
    """Largest lane-friendly tile <= target that divides n (else the full n)."""
    if n <= target:
        return n
    for t in range(target - target % 128, 0, -128):
        if n % t == 0:
            return t
    return n   # full extent is always layout-legal


def _vmem_limit(*block_bytes):
    """Double-buffered block footprint + headroom, clamped to a v7x-safe cap."""
    need = 2 * sum(int(b) for b in block_bytes) + (4 << 20)
    return int(min(max(need, 16 << 20), 48 << 20))


# ----------------------------------------------------------------------------
# Kernel 1: GroupNorm statistics (sum / sum-of-squares per channel over HW).
# ----------------------------------------------------------------------------
def gn_stats_kernel(f_ref, s1_ref, s2_ref):
    @pl.when(pl.program_id(1) == 0)
    def _():
        s1_ref[...] = jnp.zeros_like(s1_ref)
        s2_ref[...] = jnp.zeros_like(s2_ref)

    f = f_ref[0]                                            # (C, t) f32
    s1_ref[0] += jnp.sum(f, axis=1, keepdims=True)          # (C, 1)
    s2_ref[0] += jnp.sum(f * f, axis=1, keepdims=True)


# ----------------------------------------------------------------------------
# Kernel 2: GroupNorm-apply + SpatialNorm + fused q/k/v 1x1 convs (bf16 MXU).
# ----------------------------------------------------------------------------
def qkv_kernel(f_ref, zq_ref, a_ref, b_ref, wyb_ref, byb_ref,
               wqkv_ref, bqkv_ref, qkv_ref):
    f = f_ref[0]                                            # (C, t)  f32
    zq = zq_ref[0]                                          # (ZC, t) bf16
    c = f.shape[0]

    # GroupNorm folded into per-channel scale/shift computed from pass 1.
    norm_f = f * a_ref[0] + b_ref[0]                        # (C, t) f32

    # SpatialNorm: one concatenated 1x1 conv of zq -> [conv_y ; conv_b].
    yb = jnp.dot(wyb_ref[...], zq,
                 preferred_element_type=jnp.float32) + byb_ref[...]   # (2C, t)
    h = (norm_f * yb[:c] + yb[c:]).astype(jnp.bfloat16)     # (C, t)

    # Concatenated q/k/v 1x1 conv; q rows pre-scaled by C**-0.5 in the wrapper.
    qkv = jnp.dot(wqkv_ref[...], h,
                  preferred_element_type=jnp.float32) + bqkv_ref[...]  # (3C, t)
    qkv_ref[0] = qkv.astype(jnp.bfloat16)                   # single lane-dense store


# ----------------------------------------------------------------------------
# Kernel 3: attention (K/V VMEM-resident, full-row softmax) + proj_out + residual.
# ----------------------------------------------------------------------------
def attn_kernel(q_ref, k_ref, v_ref, f_ref, wp_ref, bp_ref, out_ref):
    q = q_ref[0]                                            # (C, tq) bf16, pre-scaled
    k = k_ref[0]                                            # (C, HW) bf16, resident
    v = v_ref[0]                                            # (C, HW) bf16, resident

    # scores over the full key row; only relayout left is this small per-tile q.T
    s = jnp.dot(q.T, k, preferred_element_type=jnp.float32)   # (tq, HW) f32
    m = jnp.max(s, axis=-1, keepdims=True)
    p = jnp.exp(s - m)
    l = jnp.sum(p, axis=-1, keepdims=True)
    p = (p * pl.reciprocal(l, approx=True)).astype(jnp.bfloat16)

    # channels-first PV: contract the kv axes -> (C, tq); keeps proj/output standard.
    attn = lax.dot_general(v, p, (((1,), (1,)), ((), ())),
                           preferred_element_type=jnp.float32)          # (C, tq)
    proj = jnp.dot(wp_ref[...], attn.astype(jnp.bfloat16),
                   preferred_element_type=jnp.float32)                  # (C, tq)
    out_ref[0] = f_ref[0] + proj + bp_ref[...]


# ----------------------------------------------------------------------------
# Wrapper
# ----------------------------------------------------------------------------
def decoder_attn_block(x, zq, params, *, num_groups=32, eps=1e-6):
    """x: (B, C, H, W) f32; zq: (B, ZC, Hz, Wz) f32.  1x1-conv weights are
    (out, in) matrices (== PyTorch conv.weight[:, :, 0, 0]); biases are (C,)."""
    gamma, beta, wy, by, wb, bb, wq, bq, wk, bk, wv, bv, wp, bp = params
    B, C, H, W = x.shape
    _, ZC, Hz, Wz = zq.shape
    HW = H * W
    bf = jnp.bfloat16

    # Nearest-neighbour upsample of zq to (H, W) (torch 'nearest': floor); bf16
    # to halve the HBM traffic of the modulation input.
    ih = (jnp.arange(H) * Hz) // H
    iw = (jnp.arange(W) * Wz) // W
    zq_up = zq[:, :, ih, :][:, :, :, iw]
    # TODO(synk): add_conv=True 3x3-conv branch of SpatialNorm not implemented
    # (module default is add_conv=False).
    zq_f = zq_up.reshape(B, ZC, HW).astype(bf)

    f = x.reshape(B, C, HW)              # channels-first; no HBM transposes

    ts = _pick_tile(HW, 1024)            # spatial tile for stats / qkv
    tq = _pick_tile(HW, 512)             # query tile for attention

    # ---- pass 1: GroupNorm statistics over the full spatial extent ----------
    s1, s2 = pl.pallas_call(
        gn_stats_kernel,
        out_shape=(jax.ShapeDtypeStruct((B, C, 1), jnp.float32),
                   jax.ShapeDtypeStruct((B, C, 1), jnp.float32)),
        grid=(B, HW // ts),
        in_specs=[pl.BlockSpec((1, C, ts), lambda b, t: (b, 0, t))],
        out_specs=(pl.BlockSpec((1, C, 1), lambda b, t: (b, 0, 0)),
                   pl.BlockSpec((1, C, 1), lambda b, t: (b, 0, 0))),
        compiler_params=pltpu.CompilerParams(
            dimension_semantics=("parallel", "arbitrary"),
            vmem_limit_bytes=_vmem_limit(C * ts * 4, 2 * C * 4)),
    )(f)

    # Tiny per-group math on (B, C); fold the GroupNorm affine in as well.
    cg = C // num_groups
    cnt = float(HW * cg)
    g1 = jnp.sum(s1[:, :, 0].reshape(B, num_groups, cg), axis=-1) / cnt
    g2 = jnp.sum(s2[:, :, 0].reshape(B, num_groups, cg), axis=-1) / cnt
    # E[x^2]-E[x]^2 in f32, clamped >= 0; fine under the block's bf16 tolerance.
    var = jnp.maximum(g2 - g1 * g1, 0.0)
    rstd = lax.rsqrt(var + eps)
    mean_c = jnp.repeat(g1, cg, axis=1)            # (B, C)
    rstd_c = jnp.repeat(rstd, cg, axis=1)
    a_c = (gamma[None, :] * rstd_c)[:, :, None]                        # (B, C, 1)
    b_c = (beta[None, :] - gamma[None, :] * rstd_c * mean_c)[:, :, None]

    # Concatenated bf16 weights (single MXU launches); f32 bias columns.
    scale = float(C) ** (-0.5)
    wyb = jnp.concatenate([wy, wb], axis=0).astype(bf)                 # (2C, ZC)
    byb = jnp.concatenate([by, bb]).reshape(-1, 1).astype(jnp.float32)
    wqkv = jnp.concatenate([wq * scale, wk, wv], axis=0).astype(bf)    # (3C, C)
    bqkv = jnp.concatenate([bq * scale, bk, bv]).reshape(-1, 1).astype(jnp.float32)
    wp_b = wp.astype(bf)
    bp_c = bp.reshape(-1, 1).astype(jnp.float32)

    # ---- pass 2: GroupNorm-apply + SpatialNorm + fused q/k/v projection -----
    p2_bytes = (C * ts * 4, ZC * ts * 2, C * 4, C * 4,
                2 * C * ZC * 2, 2 * C * 4, 3 * C * C * 2, 3 * C * 4,
                3 * C * ts * 2)
    qkv_cf = pl.pallas_call(
        qkv_kernel,
        out_shape=jax.ShapeDtypeStruct((B, 3 * C, HW), bf),
        grid=(B, HW // ts),
        in_specs=[
            pl.BlockSpec((1, C, ts), lambda b, t: (b, 0, t)),      # f
            pl.BlockSpec((1, ZC, ts), lambda b, t: (b, 0, t)),     # zq (upsampled)
            pl.BlockSpec((1, C, 1), lambda b, t: (b, 0, 0)),       # GN scale
            pl.BlockSpec((1, C, 1), lambda b, t: (b, 0, 0)),       # GN shift
            pl.BlockSpec((2 * C, ZC), lambda b, t: (0, 0)),        # [wy; wb]
            pl.BlockSpec((2 * C, 1), lambda b, t: (0, 0)),
            pl.BlockSpec((3 * C, C), lambda b, t: (0, 0)),         # [wq*s; wk; wv]
            pl.BlockSpec((3 * C, 1), lambda b, t: (0, 0)),
        ],
        out_specs=pl.BlockSpec((1, 3 * C, ts), lambda b, t: (b, 0, t)),
        compiler_params=pltpu.CompilerParams(
            dimension_semantics=("parallel", "parallel"),
            vmem_limit_bytes=_vmem_limit(*p2_bytes)),
    )(f, zq_f, a_c, b_c, wyb, byb, wqkv, bqkv)

    # ---- pass 3: attention (K/V resident) + proj_out + residual -------------
    p3_bytes = (C * tq * 2, C * HW * 2, C * HW * 2, C * tq * 4,
                C * C * 2, C * 4, C * tq * 4, 2 * tq * HW * 4)
    out = pl.pallas_call(
        attn_kernel,
        out_shape=jax.ShapeDtypeStruct((B, C, HW), jnp.float32),
        grid=(B, HW // tq),
        in_specs=[
            pl.BlockSpec((1, C, tq), lambda b, i: (b, 0, i)),      # q tile (rows 0:C)
            pl.BlockSpec((1, C, HW), lambda b, i: (b, 1, 0)),      # K resident (C:2C)
            pl.BlockSpec((1, C, HW), lambda b, i: (b, 2, 0)),      # V resident (2C:3C)
            pl.BlockSpec((1, C, tq), lambda b, i: (b, 0, i)),      # x residual
            pl.BlockSpec((C, C), lambda b, i: (0, 0)),             # proj_out W
            pl.BlockSpec((C, 1), lambda b, i: (0, 0)),             # proj_out b
        ],
        out_specs=pl.BlockSpec((1, C, tq), lambda b, i: (b, 0, i)),
        compiler_params=pltpu.CompilerParams(
            dimension_semantics=("parallel", "parallel"),
            vmem_limit_bytes=_vmem_limit(*p3_bytes)),
    )(qkv_cf, qkv_cf, qkv_cf, f, wp_b, bp_c)

    return out.reshape(B, C, H, W)


# ----------------------------------------------------------------------------
# Pure-JAX f32 reference of the PyTorch forward (NCHW throughout).
# ----------------------------------------------------------------------------
def reference(x, zq, params, *, num_groups=32, eps=1e-6):
    gamma, beta, wy, by, wb, bb, wq, bq, wk, bk, wv, bv, wp, bp = params
    B, C, H, W = x.shape
    _, ZC, Hz, Wz = zq.shape
    HW = H * W
    ih = (jnp.arange(H) * Hz) // H
    iw = (jnp.arange(W) * Wz) // W
    zq_up = zq[:, :, ih, :][:, :, :, iw]

    def conv1x1(wt, bs, t):
        return jnp.einsum('oi,bihw->bohw', wt, t) + bs.reshape(1, -1, 1, 1)

    xg = x.reshape(B, num_groups, C // num_groups, H, W)
    mean = xg.mean(axis=(2, 3, 4), keepdims=True)
    var = xg.var(axis=(2, 3, 4), keepdims=True)
    nf = ((xg - mean) / jnp.sqrt(var + eps)).reshape(B, C, H, W)
    nf = nf * gamma.reshape(1, C, 1, 1) + beta.reshape(1, C, 1, 1)
    h = nf * conv1x1(wy, by, zq_up) + conv1x1(wb, bb, zq_up)
    q = conv1x1(wq, bq, h).reshape(B, C, HW)
    k = conv1x1(wk, bk, h).reshape(B, C, HW)
    v = conv1x1(wv, bv, h).reshape(B, C, HW)
    w_ = jnp.einsum('bcq,bck->bqk', q, k) * (float(C) ** -0.5)
    w_ = jax.nn.softmax(w_, axis=-1)
    attn = jnp.einsum('bck,bqk->bcq', v, w_).reshape(B, C, H, W)
    return x + conv1x1(wp, bp, attn)


def init_params(key, C, ZC):
    """Synthetic parameters: 1x1-conv weights (out, in); biases/affine (C,)."""
    ks = jax.random.split(key, 14)

    def w(k, out_c, in_c):
        return jax.random.normal(k, (out_c, in_c), jnp.float32) / jnp.sqrt(in_c)

    def b(k, n):
        return 0.1 * jax.random.normal(k, (n,), jnp.float32)

    gamma = 1.0 + 0.1 * jax.random.normal(ks[0], (C,), jnp.float32)
    beta = b(ks[1], C)
    wy, by = w(ks[2], C, ZC), b(ks[3], C)
    wb, bb = w(ks[4], C, ZC), b(ks[5], C)
    wq, bq = w(ks[6], C, C), b(ks[7], C)
    wk, bk = w(ks[8], C, C), b(ks[9], C)
    wv, bv = w(ks[10], C, C), b(ks[11], C)
    wp, bp = w(ks[12], C, C), b(ks[13], C)
    return (gamma, beta, wy, by, wb, bb, wq, bq, wk, bk, wv, bv, wp, bp)


if __name__ == "__main__":
    B, C, H, W = 2, 64, 16, 16     # in_channels divisible by 32 (GroupNorm)
    ZC, Hz, Wz = 32, 8, 8          # zq_ch; lower-res latent, nearest-upsampled

    key = jax.random.PRNGKey(0)
    kx, kz, kp = jax.random.split(key, 3)
    x = jax.random.normal(kx, (B, C, H, W), jnp.float32)
    zq = jax.random.normal(kz, (B, ZC, Hz, Wz), jnp.float32)
    params = init_params(kp, C, ZC)

    out = jax.jit(decoder_attn_block)(x, zq, params)
    out = jax.block_until_ready(out)

    ref = reference(x, zq, params)
    assert out.shape == (B, C, H, W)
    err = float(jnp.max(jnp.abs(out - ref)))
    # bf16 MXU matmuls (f32 accumulation) + approx softmax reciprocal vs the
    # pure-f32 reference -> loosened tolerance.
    assert jnp.allclose(out, ref, atol=1e-1, rtol=1e-1), f"max abs err={err}"
    print("KERNEL_OK")
</pallas_src>

<mosaic_0001>
module attributes {stable_mosaic.version = 11 : i64} {
  func.func @gn_stats_kernel(%arg0: i32, %arg1: i32, %arg2: memref<1x64x256xf32, #tpu.memory_space<vmem>>, %arg3: memref<1x64x1xf32, #tpu.memory_space<vmem>>, %arg4: memref<1x64x1xf32, #tpu.memory_space<vmem>>) attributes {dimension_semantics = [#tpu.dimension_semantics<parallel>, #tpu.dimension_semantics<arbitrary>], iteration_bounds = array<i64: 2, 1>, scalar_prefetch = 0 : i64, scratch_operands = 0 : i64, tpu.core_type = #tpu.core_type<tc>, window_params = [{transform_indices = @transform_0, window_bounds = array<i64: 1, 64, 256>}, {transform_indices = @transform_1, window_bounds = array<i64: 1, 64, 1>}, {transform_indices = @transform_2, window_bounds = array<i64: 1, 64, 1>}]} {
    %c0_i32 = arith.constant 0 : i32
    %0 = arith.cmpi eq, %arg1, %c0_i32 : i32
    %1 = arith.extui %0 : i1 to i32
    %c0_i32_0 = arith.constant 0 : i32
    %2 = arith.cmpi ne, %1, %c0_i32_0 : i32
    scf.if %2 {
      %cst_16 = arith.constant 0.000000e+00 : f32
      %22 = vector.broadcast %cst_16 : f32 to vector<1x64x1xf32>
      %c0_17 = arith.constant 0 : index
      %c0_18 = arith.constant 0 : index
      %c0_19 = arith.constant 0 : index
      %23 = vector.load %arg3[%c0_17, %c0_18, %c0_19] : memref<1x64x1xf32, #tpu.memory_space<vmem>>, vector<1x64x1xf32>
      tpu.vector_store %arg3[%c0_17, %c0_18, %c0_19], %22 {strides = array<i32>} : memref<1x64x1xf32, #tpu.memory_space<vmem>>, vector<1x64x1xf32>,
      %cst_20 = arith.constant 0.000000e+00 : f32
      %24 = vector.broadcast %cst_20 : f32 to vector<1x64x1xf32>
      %c0_21 = arith.constant 0 : index
      %c0_22 = arith.constant 0 : index
      %c0_23 = arith.constant 0 : index
      %25 = vector.load %arg4[%c0_21, %c0_22, %c0_23] : memref<1x64x1xf32, #tpu.memory_space<vmem>>, vector<1x64x1xf32>
      tpu.vector_store %arg4[%c0_21, %c0_22, %c0_23], %24 {strides = array<i32>} : memref<1x64x1xf32, #tpu.memory_space<vmem>>, vector<1x64x1xf32>,
    } else {
    }
    %c0 = arith.constant 0 : index
    %c0_1 = arith.constant 0 : index
    %c0_2 = arith.constant 0 : index
    %3 = vector.load %arg2[%c0, %c0_1, %c0_2] : memref<1x64x256xf32, #tpu.memory_space<vmem>>, vector<1x64x256xf32>
    %4 = vector.shape_cast %3 : vector<1x64x256xf32> to vector<64x256xf32>
    %c0_3 = arith.constant 0 : index
    %c0_4 = arith.constant 0 : index
    %c0_5 = arith.constant 0 : index
    %5 = vector.load %arg3[%c0_3, %c0_4, %c0_5] : memref<1x64x1xf32, #tpu.memory_space<vmem>>, vector<1x64x1xf32>
    %6 = vector.shape_cast %5 : vector<1x64x1xf32> to vector<64x1xf32>
    %cst = arith.constant dense<0.000000e+00> : vector<64xf32>
    %7 = vector.multi_reduction <add>, %4, %cst [1] : vector<64x256xf32> to vector<64xf32>
    %8 = vector.shape_cast %7 : vector<64xf32> to vector<64x1xf32>
    %9 = arith.addf %6, %8 : vector<64x1xf32>
    %c0_6 = arith.constant 0 : index
    %c0_7 = arith.constant 0 : index
    %c0_8 = arith.constant 0 : index
    %10 = vector.load %arg3[%c0_6, %c0_7, %c0_8] : memref<1x64x1xf32, #tpu.memory_space<vmem>>, vector<1x64x1xf32>
    %11 = vector.shape_cast %10 : vector<1x64x1xf32> to vector<64x1xf32>
    %12 = vector.shape_cast %9 : vector<64x1xf32> to vector<1x64x1xf32>
    tpu.vector_store %arg3[%c0_6, %c0_7, %c0_8], %12 {strides = array<i32>} : memref<1x64x1xf32, #tpu.memory_space<vmem>>, vector<1x64x1xf32>,
    %c0_9 = arith.constant 0 : index
    %c0_10 = arith.constant 0 : index
    %c0_11 = arith.constant 0 : index
    %13 = vector.load %arg4[%c0_9, %c0_10, %c0_11] : memref<1x64x1xf32, #tpu.memory_space<vmem>>, vector<1x64x1xf32>
    %14 = vector.shape_cast %13 : vector<1x64x1xf32> to vector<64x1xf32>
    %15 = arith.mulf %4, %4 : vector<64x256xf32>
    %cst_12 = arith.constant dense<0.000000e+00> : vector<64xf32>
    %16 = vector.multi_reduction <add>, %15, %cst_12 [1] : vector<64x256xf32> to vector<64xf32>
    %17 = vector.shape_cast %16 : vector<64xf32> to vector<64x1xf32>
    %18 = arith.addf %14, %17 : vector<64x1xf32>
    %c0_13 = arith.constant 0 : index
    %c0_14 = arith.constant 0 : index
    %c0_15 = arith.constant 0 : index
    %19 = vector.load %arg4[%c0_13, %c0_14, %c0_15] : memref<1x64x1xf32, #tpu.memory_space<vmem>>, vector<1x64x1xf32>
    %20 = vector.shape_cast %19 : vector<1x64x1xf32> to vector<64x1xf32>
    %21 = vector.shape_cast %18 : vector<64x1xf32> to vector<1x64x1xf32>
    tpu.vector_store %arg4[%c0_13, %c0_14, %c0_15], %21 {strides = array<i32>} : memref<1x64x1xf32, #tpu.memory_space<vmem>>, vector<1x64x1xf32>,
    return
  }
  func.func @transform_0(%arg0: i32, %arg1: i32) -> (i32, i32, i32) {
    %c0_i32 = arith.constant 0 : i32
    %c0_i32_0 = arith.constant 0 : i32
    return %arg0, %c0_i32, %arg1 : i32, i32, i32
  }
  func.func @transform_1(%arg0: i32, %arg1: i32) -> (i32, i32, i32) {
    %c0_i32 = arith.constant 0 : i32
    %c0_i32_0 = arith.constant 0 : i32
    %c0_i32_1 = arith.constant 0 : i32
    return %arg0, %c0_i32, %c0_i32_0 : i32, i32, i32
  }
  func.func @transform_2(%arg0: i32, %arg1: i32) -> (i32, i32, i32) {
    %c0_i32 = arith.constant 0 : i32
    %c0_i32_0 = arith.constant 0 : i32
    %c0_i32_1 = arith.constant 0 : i32
    return %arg0, %c0_i32, %c0_i32_0 : i32, i32, i32
  }
}

module attributes {stable_mosaic.version = 11 : i64} {
  func.func @qkv_kernel(%arg0: i32, %arg1: i32, %arg2: memref<1x64x256xf32, #tpu.memory_space<vmem>>, %arg3: memref<1x32x256xbf16, #tpu.memory_space<vmem>>, %arg4: memref<1x64x1xf32, #tpu.memory_space<vmem>>, %arg5: memref<1x64x1xf32, #tpu.memory_space<vmem>>, %arg6: memref<128x32xbf16, #tpu.memory_space<vmem>>, %arg7: memref<128x1xf32, #tpu.memory_space<vmem>>, %arg8: memref<192x64xbf16, #tpu.memory_space<vmem>>, %arg9: memref<192x1xf32, #tpu.memory_space<vmem>>, %arg10: memref<1x192x256xbf16, #tpu.memory_space<vmem>>) attributes {dimension_semantics = [#tpu.dimension_semantics<parallel>, #tpu.dimension_semantics<parallel>], iteration_bounds = array<i64: 2, 1>, scalar_prefetch = 0 : i64, scratch_operands = 0 : i64, tpu.core_type = #tpu.core_type<tc>, window_params = [{transform_indices = @transform_0, window_bounds = array<i64: 1, 64, 256>}, {transform_indices = @transform_1, window_bounds = array<i64: 1, 32, 256>}, {transform_indices = @transform_2, window_bounds = array<i64: 1, 64, 1>}, {transform_indices = @transform_3, window_bounds = array<i64: 1, 64, 1>}, {pipeline_mode = #tpu.pipeline_mode<synchronous>, transform_indices = @transform_4, window_bounds = array<i64: 128, 32>}, {pipeline_mode = #tpu.pipeline_mode<synchronous>, transform_indices = @transform_5, window_bounds = array<i64: 128, 1>}, {pipeline_mode = #tpu.pipeline_mode<synchronous>, transform_indices = @transform_6, window_bounds = array<i64: 192, 64>}, {pipeline_mode = #tpu.pipeline_mode<synchronous>, transform_indices = @transform_7, window_bounds = array<i64: 192, 1>}, {transform_indices = @transform_8, window_bounds = array<i64: 1, 192, 256>}]} {
    %c0 = arith.constant 0 : index
    %c0_0 = arith.constant 0 : index
    %c0_1 = arith.constant 0 : index
    %0 = vector.load %arg2[%c0, %c0_0, %c0_1] : memref<1x64x256xf32, #tpu.memory_space<vmem>>, vector<1x64x256xf32>
    %1 = vector.shape_cast %0 : vector<1x64x256xf32> to vector<64x256xf32>
    %c0_2 = arith.constant 0 : index
    %c0_3 = arith.constant 0 : index
    %c0_4 = arith.constant 0 : index
    %2 = vector.load %arg3[%c0_2, %c0_3, %c0_4] : memref<1x32x256xbf16, #tpu.memory_space<vmem>>, vector<1x32x256xbf16>
    %3 = vector.shape_cast %2 : vector<1x32x256xbf16> to vector<32x256xbf16>
    %c0_5 = arith.constant 0 : index
    %c0_6 = arith.constant 0 : index
    %c0_7 = arith.constant 0 : index
    %4 = vector.load %arg4[%c0_5, %c0_6, %c0_7] : memref<1x64x1xf32, #tpu.memory_space<vmem>>, vector<1x64x1xf32>
    %5 = vector.shape_cast %4 : vector<1x64x1xf32> to vector<64x1xf32>
    %6 = vector.broadcast %5 : vector<64x1xf32> to vector<64x256xf32>
    %7 = arith.mulf %1, %6 : vector<64x256xf32>
    %c0_8 = arith.constant 0 : index
    %c0_9 = arith.constant 0 : index
    %c0_10 = arith.constant 0 : index
    %8 = vector.load %arg5[%c0_8, %c0_9, %c0_10] : memref<1x64x1xf32, #tpu.memory_space<vmem>>, vector<1x64x1xf32>
    %9 = vector.shape_cast %8 : vector<1x64x1xf32> to vector<64x1xf32>
    %10 = vector.broadcast %9 : vector<64x1xf32> to vector<64x256xf32>
    %11 = arith.addf %7, %10 : vector<64x256xf32>
    %c0_11 = arith.constant 0 : index
    %c0_12 = arith.constant 0 : index
    %12 = vector.load %arg6[%c0_11, %c0_12] : memref<128x32xbf16, #tpu.memory_space<vmem>>, vector<128x32xbf16>
    %cst = arith.constant dense<0.000000e+00> : vector<128x256xf32>
    %13 = tpu.matmul %12, %3, %cst {dimension_numbers = #tpu.dot_dimension_numbers<[1], [0], [0], [1], [0, 0, 1, 1], [], []>} : vector<128x32xbf16>, vector<32x256xbf16>, vector<128x256xf32> -> vector<128x256xf32>
    %c0_13 = arith.constant 0 : index
    %c0_14 = arith.constant 0 : index
    %14 = vector.load %arg7[%c0_13, %c0_14] : memref<128x1xf32, #tpu.memory_space<vmem>>, vector<128x1xf32>
    %15 = vector.broadcast %14 : vector<128x1xf32> to vector<128x256xf32>
    %16 = arith.addf %13, %15 : vector<128x256xf32>
    %17 = vector.extract_strided_slice %16 {offsets = [0, 0], sizes = [64, 256], strides = [1, 1]} : vector<128x256xf32> to vector<64x256xf32>
    %18 = arith.mulf %11, %17 : vector<64x256xf32>
    %19 = vector.extract_strided_slice %16 {offsets = [64, 0], sizes = [64, 256], strides = [1, 1]} : vector<128x256xf32> to vector<64x256xf32>
    %20 = arith.addf %18, %19 : vector<64x256xf32>
    %21 = arith.truncf %20 : vector<64x256xf32> to vector<64x256xbf16>
    %c0_15 = arith.constant 0 : index
    %c0_16 = arith.constant 0 : index
    %22 = vector.load %arg8[%c0_15, %c0_16] : memref<192x64xbf16, #tpu.memory_space<vmem>>, vector<192x64xbf16>
    %cst_17 = arith.constant dense<0.000000e+00> : vector<192x256xf32>
    %23 = tpu.matmul %22, %21, %cst_17 {dimension_numbers = #tpu.dot_dimension_numbers<[1], [0], [0], [1], [0, 0, 1, 1], [], []>} : vector<192x64xbf16>, vector<64x256xbf16>, vector<192x256xf32> -> vector<192x256xf32>
    %c0_18 = arith.constant 0 : index
    %c0_19 = arith.constant 0 : index
    %24 = vector.load %arg9[%c0_18, %c0_19] : memref<192x1xf32, #tpu.memory_space<vmem>>, vector<192x1xf32>
    %25 = vector.broadcast %24 : vector<192x1xf32> to vector<192x256xf32>
    %26 = arith.addf %23, %25 : vector<192x256xf32>
    %27 = arith.truncf %26 : vector<192x256xf32> to vector<192x256xbf16>
    %c0_20 = arith.constant 0 : index
    %c0_21 = arith.constant 0 : index
    %c0_22 = arith.constant 0 : index
    %28 = vector.load %arg10[%c0_20, %c0_21, %c0_22] : memref<1x192x256xbf16, #tpu.memory_space<vmem>>, vector<1x192x256xbf16>
    %29 = vector.shape_cast %28 : vector<1x192x256xbf16> to vector<192x256xbf16>
    %30 = vector.shape_cast %27 : vector<192x256xbf16> to vector<1x192x256xbf16>
    tpu.vector_store %arg10[%c0_20, %c0_21, %c0_22], %30 {strides = array<i32>} : memref<1x192x256xbf16, #tpu.memory_space<vmem>>, vector<1x192x256xbf16>,
    return
  }
  func.func @transform_0(%arg0: i32, %arg1: i32) -> (i32, i32, i32) {
    %c0_i32 = arith.constant 0 : i32
    %c0_i32_0 = arith.constant 0 : i32
    return %arg0, %c0_i32, %arg1 : i32, i32, i32
  }
  func.func @transform_1(%arg0: i32, %arg1: i32) -> (i32, i32, i32) {
    %c0_i32 = arith.constant 0 : i32
    %c0_i32_0 = arith.constant 0 : i32
    return %arg0, %c0_i32, %arg1 : i32, i32, i32
  }
  func.func @transform_2(%arg0: i32, %arg1: i32) -> (i32, i32, i32) {
    %c0_i32 = arith.constant 0 : i32
    %c0_i32_0 = arith.constant 0 : i32
    %c0_i32_1 = arith.constant 0 : i32
    return %arg0, %c0_i32, %c0_i32_0 : i32, i32, i32
  }
  func.func @transform_3(%arg0: i32, %arg1: i32) -> (i32, i32, i32) {
    %c0_i32 = arith.constant 0 : i32
    %c0_i32_0 = arith.constant 0 : i32
    %c0_i32_1 = arith.constant 0 : i32
    return %arg0, %c0_i32, %c0_i32_0 : i32, i32, i32
  }
  func.func @transform_4(%arg0: i32, %arg1: i32) -> (i32, i32) {
    %c0_i32 = arith.constant 0 : i32
    %c0_i32_0 = arith.constant 0 : i32
    %c0_i32_1 = arith.constant 0 : i32
    return %c0_i32, %c0_i32_0 : i32, i32
  }
  func.func @transform_5(%arg0: i32, %arg1: i32) -> (i32, i32) {
    %c0_i32 = arith.constant 0 : i32
    %c0_i32_0 = arith.constant 0 : i32
    %c0_i32_1 = arith.constant 0 : i32
    return %c0_i32, %c0_i32_0 : i32, i32
  }
  func.func @transform_6(%arg0: i32, %arg1: i32) -> (i32, i32) {
    %c0_i32 = arith.constant 0 : i32
    %c0_i32_0 = arith.constant 0 : i32
    %c0_i32_1 = arith.constant 0 : i32
    return %c0_i32, %c0_i32_0 : i32, i32
  }
  func.func @transform_7(%arg0: i32, %arg1: i32) -> (i32, i32) {
    %c0_i32 = arith.constant 0 : i32
    %c0_i32_0 = arith.constant 0 : i32
    %c0_i32_1 = arith.constant 0 : i32
    return %c0_i32, %c0_i32_0 : i32, i32
  }
  func.func @transform_8(%arg0: i32, %arg1: i32) -> (i32, i32, i32) {
    %c0_i32 = arith.constant 0 : i32
    %c0_i32_0 = arith.constant 0 : i32
    return %arg0, %c0_i32, %arg1 : i32, i32, i32
  }
}

module attributes {stable_mosaic.version = 11 : i64} {
  func.func @attn_kernel(%arg0: i32, %arg1: i32, %arg2: memref<1x64x256xbf16, #tpu.memory_space<vmem>>, %arg3: memref<1x64x256xbf16, #tpu.memory_space<vmem>>, %arg4: memref<1x64x256xbf16, #tpu.memory_space<vmem>>, %arg5: memref<1x64x256xf32, #tpu.memory_space<vmem>>, %arg6: memref<64x64xbf16, #tpu.memory_space<vmem>>, %arg7: memref<64x1xf32, #tpu.memory_space<vmem>>, %arg8: memref<1x64x256xf32, #tpu.memory_space<vmem>>) attributes {dimension_semantics = [#tpu.dimension_semantics<parallel>, #tpu.dimension_semantics<parallel>], iteration_bounds = array<i64: 2, 1>, scalar_prefetch = 0 : i64, scratch_operands = 0 : i64, tpu.core_type = #tpu.core_type<tc>, window_params = [{transform_indices = @transform_0, window_bounds = array<i64: 1, 64, 256>}, {transform_indices = @transform_1, window_bounds = array<i64: 1, 64, 256>}, {transform_indices = @transform_2, window_bounds = array<i64: 1, 64, 256>}, {transform_indices = @transform_3, window_bounds = array<i64: 1, 64, 256>}, {pipeline_mode = #tpu.pipeline_mode<synchronous>, transform_indices = @transform_4, window_bounds = array<i64: 64, 64>}, {pipeline_mode = #tpu.pipeline_mode<synchronous>, transform_indices = @transform_5, window_bounds = array<i64: 64, 1>}, {transform_indices = @transform_6, window_bounds = array<i64: 1, 64, 256>}]} {
    %c0 = arith.constant 0 : index
    %c0_0 = arith.constant 0 : index
    %c0_1 = arith.constant 0 : index
    %0 = vector.load %arg2[%c0, %c0_0, %c0_1] : memref<1x64x256xbf16, #tpu.memory_space<vmem>>, vector<1x64x256xbf16>
    %1 = vector.shape_cast %0 : vector<1x64x256xbf16> to vector<64x256xbf16>
    %c0_2 = arith.constant 0 : index
    %c0_3 = arith.constant 0 : index
    %c0_4 = arith.constant 0 : index
    %2 = vector.load %arg3[%c0_2, %c0_3, %c0_4] : memref<1x64x256xbf16, #tpu.memory_space<vmem>>, vector<1x64x256xbf16>
    %3 = vector.shape_cast %2 : vector<1x64x256xbf16> to vector<64x256xbf16>
    %c0_5 = arith.constant 0 : index
    %c0_6 = arith.constant 0 : index
    %c0_7 = arith.constant 0 : index
    %4 = vector.load %arg4[%c0_5, %c0_6, %c0_7] : memref<1x64x256xbf16, #tpu.memory_space<vmem>>, vector<1x64x256xbf16>
    %5 = vector.shape_cast %4 : vector<1x64x256xbf16> to vector<64x256xbf16>
    %6 = tpu.transpose %1, [1, 0] : vector<64x256xbf16> -> vector<256x64xbf16>
    %cst = arith.constant dense<0.000000e+00> : vector<256x256xf32>
    %7 = tpu.matmul %6, %3, %cst {dimension_numbers = #tpu.dot_dimension_numbers<[1], [0], [0], [1], [0, 0, 1, 1], [], []>} : vector<256x64xbf16>, vector<64x256xbf16>, vector<256x256xf32> -> vector<256x256xf32>
    %cst_8 = arith.constant dense<0xFF800000> : vector<256xf32>
    %8 = vector.multi_reduction <maximumf>, %7, %cst_8 [1] : vector<256x256xf32> to vector<256xf32>
    %9 = vector.shape_cast %8 : vector<256xf32> to vector<256x1xf32>
    %10 = vector.broadcast %9 : vector<256x1xf32> to vector<256x256xf32>
    %11 = arith.subf %7, %10 : vector<256x256xf32>
    %12 = math.exp %11 : vector<256x256xf32>
    %cst_9 = arith.constant dense<0.000000e+00> : vector<256xf32>
    %13 = vector.multi_reduction <add>, %12, %cst_9 [1] : vector<256x256xf32> to vector<256xf32>
    %14 = vector.shape_cast %13 : vector<256xf32> to vector<256x1xf32>
    %15 = tpu.reciprocal %14 {approx = true} : vector<256x1xf32> -> vector<256x1xf32>
    %16 = vector.broadcast %15 : vector<256x1xf32> to vector<256x256xf32>
    %17 = arith.mulf %12, %16 : vector<256x256xf32>
    %18 = arith.truncf %17 : vector<256x256xf32> to vector<256x256xbf16>
    %cst_10 = arith.constant dense<0.000000e+00> : vector<64x256xf32>
    %19 = tpu.matmul %5, %18, %cst_10 {dimension_numbers = #tpu.dot_dimension_numbers<[1], [1], [0], [0], [0, 0, 1, 0], [], []>} : vector<64x256xbf16>, vector<256x256xbf16>, vector<64x256xf32> -> vector<64x256xf32>
    %c0_11 = arith.constant 0 : index
    %c0_12 = arith.constant 0 : index
    %20 = vector.load %arg6[%c0_11, %c0_12] : memref<64x64xbf16, #tpu.memory_space<vmem>>, vector<64x64xbf16>
    %21 = arith.truncf %19 : vector<64x256xf32> to vector<64x256xbf16>
    %cst_13 = arith.constant dense<0.000000e+00> : vector<64x256xf32>
    %22 = tpu.matmul %20, %21, %cst_13 {dimension_numbers = #tpu.dot_dimension_numbers<[1], [0], [0], [1], [0, 0, 1, 1], [], []>} : vector<64x64xbf16>, vector<64x256xbf16>, vector<64x256xf32> -> vector<64x256xf32>
    %c0_14 = arith.constant 0 : index
    %c0_15 = arith.constant 0 : index
    %c0_16 = arith.constant 0 : index
    %23 = vector.load %arg5[%c0_14, %c0_15, %c0_16] : memref<1x64x256xf32, #tpu.memory_space<vmem>>, vector<1x64x256xf32>
    %24 = vector.shape_cast %23 : vector<1x64x256xf32> to vector<64x256xf32>
    %25 = arith.addf %24, %22 : vector<64x256xf32>
    %c0_17 = arith.constant 0 : index
    %c0_18 = arith.constant 0 : index
    %26 = vector.load %arg7[%c0_17, %c0_18] : memref<64x1xf32, #tpu.memory_space<vmem>>, vector<64x1xf32>
    %27 = vector.broadcast %26 : vector<64x1xf32> to vector<64x256xf32>
    %28 = arith.addf %25, %27 : vector<64x256xf32>
    %c0_19 = arith.constant 0 : index
    %c0_20 = arith.constant 0 : index
    %c0_21 = arith.constant 0 : index
    %29 = vector.load %arg8[%c0_19, %c0_20, %c0_21] : memref<1x64x256xf32, #tpu.memory_space<vmem>>, vector<1x64x256xf32>
    %30 = vector.shape_cast %29 : vector<1x64x256xf32> to vector<64x256xf32>
    %31 = vector.shape_cast %28 : vector<64x256xf32> to vector<1x64x256xf32>
    tpu.vector_store %arg8[%c0_19, %c0_20, %c0_21], %31 {strides = array<i32>} : memref<1x64x256xf32, #tpu.memory_space<vmem>>, vector<1x64x256xf32>,
    return
  }
  func.func @transform_0(%arg0: i32, %arg1: i32) -> (i32, i32, i32) {
    %c0_i32 = arith.constant 0 : i32
    %c0_i32_0 = arith.constant 0 : i32
    return %arg0, %c0_i32, %arg1 : i32, i32, i32
  }
  func.func @transform_1(%arg0: i32, %arg1: i32) -> (i32, i32, i32) {
    %c1_i32 = arith.constant 1 : i32
    %c0_i32 = arith.constant 0 : i32
    %c0_i32_0 = arith.constant 0 : i32
    return %arg0, %c1_i32, %c0_i32 : i32, i32, i32
  }
  func.func @transform_2(%arg0: i32, %arg1: i32) -> (i32, i32, i32) {
    %c2_i32 = arith.constant 2 : i32
    %c0_i32 = arith.constant 0 : i32
    %c0_i32_0 = arith.constant 0 : i32
    return %arg0, %c2_i32, %c0_i32 : i32, i32, i32
  }
  func.func @transform_3(%arg0: i32, %arg1: i32) -> (i32, i32, i32) {
    %c0_i32 = arith.constant 0 : i32
    %c0_i32_0 = arith.constant 0 : i32
    return %arg0, %c0_i32, %arg1 : i32, i32, i32
  }
  func.func @transform_4(%arg0: i32, %arg1: i32) -> (i32, i32) {
    %c0_i32 = arith.constant 0 : i32
    %c0_i32_0 = arith.constant 0 : i32
    %c0_i32_1 = arith.constant 0 : i32
    return %c0_i32, %c0_i32_0 : i32, i32
  }
  func.func @transform_5(%arg0: i32, %arg1: i32) -> (i32, i32) {
    %c0_i32 = arith.constant 0 : i32
    %c0_i32_0 = arith.constant 0 : i32
    %c0_i32_1 = arith.constant 0 : i32
    return %c0_i32, %c0_i32_0 : i32, i32
  }
  func.func @transform_6(%arg0: i32, %arg1: i32) -> (i32, i32, i32) {
    %c0_i32 = arith.constant 0 : i32
    %c0_i32_0 = arith.constant 0 : i32
    return %arg0, %c0_i32, %arg1 : i32, i32, i32
  }
}

</mosaic_0001>

<llo_original>
// kernel: squeeze.2
$region0: #{squeeze.2}
  %s0 = inlined_call_operand.vmem [shape: f32[2,64], index: 0, kind: input, shape index: {}]
  %s1 = inlined_call_operand.vmem [shape: f32[2,32,2], index: 1, kind: output, shape index: {}]
  $region1: #{squeeze.2} parent=0
    #allocation0 [shape = 'u8[4096]{0}', space=vmem, size = 0x1000, scoped, tag = 'scoped mem for input reshape']
    %s3 = sshllo.u32 0, 2
    %v4 = vld [vmem:[%s0] sm:%s3]
    %5 = vst [vmem:[#allocation0] sm:%s3] %v4
    %v6 = vld [vmem:[#allocation0] sm:$0x3]
    %vm7 = vcmask 15360
    %8 = vst.msk [vmem:[%s1] sm:$0x1] %vm7, %v6
    %s9 = scalar_lea.vmem %s1, 31
    %10 = vst.msk [vmem:[%s9] sm:$0x2] %vm7, %v6
    %v11 = vld [vmem:[#allocation0] sm:$0x3]
    %12 = vrot.lane.b32.xlu0 %v11, 126
    %v13 = vpop.permute.xlu0 %12
    %vm14 = vcmask 15360
    %s15 = scalar_lea.vmem %s1, 1
    %16 = vst.msk [vmem:[%s15] sm:$0x1] %vm14, %v13
    %s17 = scalar_lea.vmem %s1, 32
    %18 = vst.msk [vmem:[%s17] sm:$0x2] %vm14, %v13
    %v19 = vld [vmem:[#allocation0] sm:$0x3]
    %20 = vrot.lane.b32.xlu0 %v19, 124
    %v21 = vpop.permute.xlu0 %20
    %vm22 = vcmask 15360
    %s23 = scalar_lea.vmem %s1, 2
    %24 = vst.msk [vmem:[%s23] sm:$0x1] %vm22, %v21
    %s25 = scalar_lea.vmem %s1, 33
    %26 = vst.msk [vmem:[%s25] sm:$0x2] %vm22, %v21
    %v27 = vld [vmem:[#allocation0] sm:$0x3]
    %28 = vrot.lane.b32.xlu0 %v27, 122
    %v29 = vpop.permute.xlu0 %28
    %vm30 = vcmask 15360
    %s31 = scalar_lea.vmem %s1, 3
    %32 = vst.msk [vmem:[%s31] sm:$0x1] %vm30, %v29
    %s33 = scalar_lea.vmem %s1, 34
    %34 = vst.msk [vmem:[%s33] sm:$0x2] %vm30, %v29
    %v35 = vld [vmem:[#allocation0] sm:$0x3]
    %36 = vrot.lane.b32.xlu0 %v35, 120
    %v37 = vpop.permute.xlu0 %36
    %vm38 = vcmask 15360
    %s39 = scalar_lea.vmem %s1, 4
    %40 = vst.msk [vmem:[%s39] sm:$0x1] %vm38, %v37
    %s41 = scalar_lea.vmem %s1, 35
    %42 = vst.msk [vmem:[%s41] sm:$0x2] %vm38, %v37
    %v43 = vld [vmem:[#allocation0] sm:$0x3]
    %44 = vrot.lane.b32.xlu0 %v43, 118
    %v45 = vpop.permute.xlu0 %44
    %vm46 = vcmask 15360
    %s47 = scalar_lea.vmem %s1, 5
    %48 = vst.msk [vmem:[%s47] sm:$0x1] %vm46, %v45
    %s49 = scalar_lea.vmem %s1, 36
    %50 = vst.msk [vmem:[%s49] sm:$0x2] %vm46, %v45
    %v51 = vld [vmem:[#allocation0] sm:$0x3]
    %52 = vrot.lane.b32.xlu0 %v51, 116
    %v53 = vpop.permute.xlu0 %52
    %vm54 = vcmask 15360
    %s55 = scalar_lea.vmem %s1, 6
    %56 = vst.msk [vmem:[%s55] sm:$0x1] %vm54, %v53
    %s57 = scalar_lea.vmem %s1, 37
    %58 = vst.msk [vmem:[%s57] sm:$0x2] %vm54, %v53
    %v59 = vld [vmem:[#allocation0] sm:$0x3]
    %60 = vrot.lane.b32.xlu0 %v59, 114
    %v61 = vpop.permute.xlu0 %60
    %vm62 = vcmask 15360
    %s63 = scalar_lea.vmem %s1, 7
    %64 = vst.msk [vmem:[%s63] sm:$0x1] %vm62, %v61
    %s65 = scalar_lea.vmem %s1, 38
    %66 = vst.msk [vmem:[%s65] sm:$0x2] %vm62, %v61
    %v67 = vld [vmem:[#allocation0] sm:$0x3]
    %68 = vrot.lane.b32.xlu0 %v67, 112
    %v69 = vpop.permute.xlu0 %68
    %vm70 = vcmask 15360
    %s71 = scalar_lea.vmem %s1, 8
    %72 = vst.msk [vmem:[%s71] sm:$0x1] %vm70, %v69
    %s73 = scalar_lea.vmem %s1, 39
    %74 = vst.msk [vmem:[%s73] sm:$0x2] %vm70, %v69
    %v75 = vld [vmem:[#allocation0] sm:$0x3]
    %76 = vrot.lane.b32.xlu0 %v75, 110
    %v77 = vpop.permute.xlu0 %76
    %vm78 = vcmask 15360
    %s79 = scalar_lea.vmem %s1, 9
    %80 = vst.msk [vmem:[%s79] sm:$0x1] %vm78, %v77
    %s81 = scalar_lea.vmem %s1, 40
    %82 = vst.msk [vmem:[%s81] sm:$0x2] %vm78, %v77
    %v83 = vld [vmem:[#allocation0] sm:$0x3]
    %84 = vrot.lane.b32.xlu0 %v83, 108
    %v85 = vpop.permute.xlu0 %84
    %vm86 = vcmask 15360
    %s87 = scalar_lea.vmem %s1, 10
    %88 = vst.msk [vmem:[%s87] sm:$0x1] %vm86, %v85
    %s89 = scalar_lea.vmem %s1, 41
    %90 = vst.msk [vmem:[%s89] sm:$0x2] %vm86, %v85
    %v91 = vld [vmem:[#allocation0] sm:$0x3]
    %92 = vrot.lane.b32.xlu0 %v91, 106
    %v93 = vpop.permute.xlu0 %92
    %vm94 = vcmask 15360
    %s95 = scalar_lea.vmem %s1, 11
    %96 = vst.msk [vmem:[%s95] sm:$0x1] %vm94, %v93
    %s97 = scalar_lea.vmem %s1, 42
    %98 = vst.msk [vmem:[%s97] sm:$0x2] %vm94, %v93
    %v99 = vld [vmem:[#allocation0] sm:$0x3]
    %100 = vrot.lane.b32.xlu0 %v99, 104
    %v101 = vpop.permute.xlu0 %100
    %vm102 = vcmask 15360
    %s103 = scalar_lea.vmem %s1, 12
    %104 = vst.msk [vmem:[%s103] sm:$0x1] %vm102, %v101
    %s105 = scalar_lea.vmem %s1, 43
    %106 = vst.msk [vmem:[%s105] sm:$0x2] %vm102, %v101
    %v107 = vld [vmem:[#allocation0] sm:$0x3]
    %108 = vrot.lane.b32.xlu0 %v107, 102
    %v109 = vpop.permute.xlu0 %108
    %vm110 = vcmask 15360
    %s111 = scalar_lea.vmem %s1, 13
    %112 = vst.msk [vmem:[%s111] sm:$0x1] %vm110, %v109
    %s113 = scalar_lea.vmem %s1, 44
    %114 = vst.msk [vmem:[%s113] sm:$0x2] %vm110, %v109
    %v115 = vld [vmem:[#allocation0] sm:$0x3]
    %116 = vrot.lane.b32.xlu0 %v115, 100
    %v117 = vpop.permute.xlu0 %116
    %vm118 = vcmask 15360
    %s119 = scalar_lea.vmem %s1, 14
    %120 = vst.msk [vmem:[%s119] sm:$0x1] %vm118, %v117
    %s121 = scalar_lea.vmem %s1, 45
    %122 = vst.msk [vmem:[%s121] sm:$0x2] %vm118, %v117
    %v123 = vld [vmem:[#allocation0] sm:$0x3]
    %124 = vrot.lane.b32.xlu0 %v123, 98
    %v125 = vpop.permute.xlu0 %124
    %vm126 = vcmask 15360
    %s127 = scalar_lea.vmem %s1, 15
    %128 = vst.msk [vmem:[%s127] sm:$0x1] %vm126, %v125
    %s129 = scalar_lea.vmem %s1, 46
    %130 = vst.msk [vmem:[%s129] sm:$0x2] %vm126, %v125
    %v131 = vld [vmem:[#allocation0] sm:$0x3]
    %132 = vrot.lane.b32.xlu0 %v131, 96
    %v133 = vpop.permute.xlu0 %132
    %vm134 = vcmask 15360
    %s135 = scalar_lea.vmem %s1, 16
    %136 = vst.msk [vmem:[%s135] sm:$0x1] %vm134, %v133
    %s137 = scalar_lea.vmem %s1, 47
    %138 = vst.msk [vmem:[%s137] sm:$0x2] %vm134, %v133
    %v139 = vld [vmem:[#allocation0] sm:$0x3]
    %140 = vrot.lane.b32.xlu0 %v139, 94
    %v141 = vpop.permute.xlu0 %140
    %vm142 = vcmask 15360
    %s143 = scalar_lea.vmem %s1, 17
    %144 = vst.msk [vmem:[%s143] sm:$0x1] %vm142, %v141
    %s145 = scalar_lea.vmem %s1, 48
    %146 = vst.msk [vmem:[%s145] sm:$0x2] %vm142, %v141
    %v147 = vld [vmem:[#allocation0] sm:$0x3]
    %148 = vrot.lane.b32.xlu0 %v147, 92
    %v149 = vpop.permute.xlu0 %148
    %vm150 = vcmask 15360
    %s151 = scalar_lea.vmem %s1, 18
    %152 = vst.msk [vmem:[%s151] sm:$0x1] %vm150, %v149
    %s153 = scalar_lea.vmem %s1, 49
    %154 = vst.msk [vmem:[%s153] sm:$0x2] %vm150, %v149
    %v155 = vld [vmem:[#allocation0] sm:$0x3]
    %156 = vrot.lane.b32.xlu0 %v155, 90
    %v157 = vpop.permute.xlu0 %156
    %vm158 = vcmask 15360
    %s159 = scalar_lea.vmem %s1, 19
    %160 = vst.msk [vmem:[%s159] sm:$0x1] %vm158, %v157
    %s161 = scalar_lea.vmem %s1, 50
    %162 = vst.msk [vmem:[%s161] sm:$0x2] %vm158, %v157
    %v163 = vld [vmem:[#allocation0] sm:$0x3]
    %164 = vrot.lane.b32.xlu0 %v163, 88
    %v165 = vpop.permute.xlu0 %164
    %vm166 = vcmask 15360
    %s167 = scalar_lea.vmem %s1, 20
    %168 = vst.msk [vmem:[%s167] sm:$0x1] %vm166, %v165
    %s169 = scalar_lea.vmem %s1, 51
    %170 = vst.msk [vmem:[%s169] sm:$0x2] %vm166, %v165
    %v171 = vld [vmem:[#allocation0] sm:$0x3]
    %172 = vrot.lane.b32.xlu0 %v171, 86
    %v173 = vpop.permute.xlu0 %172
    %vm174 = vcmask 15360
    %s175 = scalar_lea.vmem %s1, 21
    %176 = vst.msk [vmem:[%s175] sm:$0x1] %vm174, %v173
    %s177 = scalar_lea.vmem %s1, 52
    %178 = vst.msk [vmem:[%s177] sm:$0x2] %vm174, %v173
    %v179 = vld [vmem:[#allocation0] sm:$0x3]
    %180 = vrot.lane.b32.xlu0 %v179, 84
    %v181 = vpop.permute.xlu0 %180
    %vm182 = vcmask 15360
    %s183 = scalar_lea.vmem %s1, 22
    %184 = vst.msk [vmem:[%s183] sm:$0x1] %vm182, %v181
    %s185 = scalar_lea.vmem %s1, 53
    %186 = vst.msk [vmem:[%s185] sm:$0x2] %vm182, %v181
    %v187 = vld [vmem:[#allocation0] sm:$0x3]
    %188 = vrot.lane.b32.xlu0 %v187, 82
    %v189 = vpop.permute.xlu0 %188
    %vm190 = vcmask 15360
    %s191 = scalar_lea.vmem %s1, 23
    %192 = vst.msk [vmem:[%s191] sm:$0x1] %vm190, %v189
    %s193 = scalar_lea.vmem %s1, 54
    %194 = vst.msk [vmem:[%s193] sm:$0x2] %vm190, %v189
    %v195 = vld [vmem:[#allocation0] sm:$0x3]
    %196 = vrot.lane.b32.xlu0 %v195, 80
    %v197 = vpop.permute.xlu0 %196
    %vm198 = vcmask 15360
    %s199 = scalar_lea.vmem %s1, 24
    %200 = vst.msk [vmem:[%s199] sm:$0x1] %vm198, %v197
    %s201 = scalar_lea.vmem %s1, 55
    %202 = vst.msk [vmem:[%s201] sm:$0x2] %vm198, %v197
    %v203 = vld [vmem:[#allocation0] sm:$0x3]
    %204 = vrot.lane.b32.xlu0 %v203, 78
    %v205 = vpop.permute.xlu0 %204
    %vm206 = vcmask 15360
    %s207 = scalar_lea.vmem %s1, 25
    %208 = vst.msk [vmem:[%s207] sm:$0x1] %vm206, %v205
    %s209 = scalar_lea.vmem %s1, 56
    %210 = vst.msk [vmem:[%s209] sm:$0x2] %vm206, %v205
    %v211 = vld [vmem:[#allocation0] sm:$0x3]
    %212 = vrot.lane.b32.xlu0 %v211, 76
    %v213 = vpop.permute.xlu0 %212
    %vm214 = vcmask 15360
    %s215 = scalar_lea.vmem %s1, 26
    %216 = vst.msk [vmem:[%s215] sm:$0x1] %vm214, %v213
    %s217 = scalar_lea.vmem %s1, 57
    %218 = vst.msk [vmem:[%s217] sm:$0x2] %vm214, %v213
    %v219 = vld [vmem:[#allocation0] sm:$0x3]
    %220 = vrot.lane.b32.xlu0 %v219, 74
    %v221 = vpop.permute.xlu0 %220
    %vm222 = vcmask 15360
    %s223 = scalar_lea.vmem %s1, 27
    %224 = vst.msk [vmem:[%s223] sm:$0x1] %vm222, %v221
    %s225 = scalar_lea.vmem %s1, 58
    %226 = vst.msk [vmem:[%s225] sm:$0x2] %vm222, %v221
    %v227 = vld [vmem:[#allocation0] sm:$0x3]
    %228 = vrot.lane.b32.xlu0 %v227, 72
    %v229 = vpop.permute.xlu0 %228
    %vm230 = vcmask 15360
    %s231 = scalar_lea.vmem %s1, 28
    %232 = vst.msk [vmem:[%s231] sm:$0x1] %vm230, %v229
    %s233 = scalar_lea.vmem %s1, 59
    %234 = vst.msk [vmem:[%s233] sm:$0x2] %vm230, %v229
    %v235 = vld [vmem:[#allocation0] sm:$0x3]
    %236 = vrot.lane.b32.xlu0 %v235, 70
    %v237 = vpop.permute.xlu0 %236
    %vm238 = vcmask 15360
    %s239 = scalar_lea.vmem %s1, 29
    %240 = vst.msk [vmem:[%s239] sm:$0x1] %vm238, %v237
    %s241 = scalar_lea.vmem %s1, 60
    %242 = vst.msk [vmem:[%s241] sm:$0x2] %vm238, %v237
    %v243 = vld [vmem:[#allocation0] sm:$0x3]
    %244 = vrot.lane.b32.xlu0 %v243, 68
    %v245 = vpop.permute.xlu0 %244
    %vm246 = vcmask 15360
    %s247 = scalar_lea.vmem %s1, 30
    %248 = vst.msk [vmem:[%s247] sm:$0x1] %vm246, %v245
    %s249 = scalar_lea.vmem %s1, 61
    %250 = vst.msk [vmem:[%s249] sm:$0x2] %vm246, %v245
    %v251 = vld [vmem:[#allocation0] sm:$0x3]
    %252 = vrot.lane.b32.xlu0 %v251, 66
    %v253 = vpop.permute.xlu0 %252
    %vm254 = vcmask 15360
    %s255 = scalar_lea.vmem %s1, 31
    %256 = vst.msk [vmem:[%s255] sm:$0x1] %vm254, %v253
    %s257 = scalar_lea.vmem %s1, 62
    %258 = vst.msk [vmem:[%s257] sm:$0x2] %vm254, %v253

// kernel: decoder_attn_block.3
$region0: #{decoder_attn_block.3}
  #allocation0 [shape = 'u32[]', space=smem, size = 0x4, offset = 0x4, fixed_abs, tag = 'smem constant byte address 0x4 - core index']
  #allocation1 [shape = 'u32[144,128]{1,0:T(1,128)}', space=vmem, size = 0x12000, scoped, tag = 'internal scratch']
  %s0 = inlined_call_operand.vmem [shape: f32[2,64,256], index: 0, kind: input, shape index: {}]
  %s1 = inlined_call_operand.vmem [shape: f32[2,64,1], index: 1, kind: output, shape index: {0}]
  %s2 = inlined_call_operand.vmem [shape: f32[2,64,1], index: 2, kind: output, shape index: {1}]
  %3 = xla_tuple %s1, %s2
  %s4 = sld [smem:[#allocation0]]
  $region49: #{decoder_attn_block.3} parent=0
    _
  %s6 = ssub.s32 1, %s4
  %s7 = scalar_select 0, %s6, %s4
  loop: start=0, step=1, limit=4
  $region2: #{decoder_attn_block.3} parent=0 // loop_pre_header
    _
  $region3: #{decoder_attn_block.3} parent=0 // loop_header
    %s9 = sphi 0, %s13
    %p10 = scmp.ge.s32.totalorder %s9, 4
    %s16 = sphi 0, %s28
    %s17 = sphi 0, %s24
    %s18 = sphi 0, %s16
    %s19 = sphi 0, %s17
    %s20 = sphi 0, %s18
    %s21 = sphi 0, %s19
    %s33 = sphi 0, %s35
    %s36 = sphi 0, %s33
    %s37 = sphi 0, %s36
    %s53 = sphi 0, %s37
    %s59 = sphi 0, %s61
    %s62 = sphi 0, %s59
    %s63 = sphi 0, %s62
    %s79 = sphi 0, %s63
    %s85 = sphi 0, %s87
    %s88 = sphi 0, %s85
    %s89 = sphi 0, %s88
    %s105 = sphi 0, %s89
  $region4: #{decoder_attn_block.3} parent=0 // loop_header_branch
    %12 = sbr.rel (%p10) target = $region8
  $region5: #{decoder_attn_block.3} parent=0 // loop_body
    %s14 = ssub.s32 %s9, 1
    %s15 = ssub.s32 %s9, 2
    %s22 = sadd.s32 1, %s17
    %p23 = scmp.ge.s32.totalorder %s22, 1
    %s24 = scalar_select %p23, 0, %s22
    %s25 = sadd.s32 1, %s16
    %s26 = scalar_select %p23, %s25, %s16
    %p27 = scmp.ge.s32.totalorder %s26, 2
    %s28 = scalar_select %p27, 0, %s26
    %s29 = ssub.s32 %s16, %s28
    %s30 = ssub.s32 %s17, %s24
    %s31 = sor.u32 %s29, %s30
    %p32 = scmp.eq.s32.totalorder %s31, 0
    %s34 = sadd.s32 %s33, 1
    %s35 = scalar_select %p32, %s33, %s34
    %p38 = pneg %p32
    %p39 = scmp.eq.s32.totalorder %s9, 1
    %p40 = por %p38, %p39
    %p41 = scmp.ne.s32.totalorder %s33, %s36
    %p42 = scmp.eq.s32.totalorder %s9, 0
    %p43 = por %p41, %p42
    %p44 = scmp.ne.s32.totalorder %s33, %s36
    %p45 = scmp.eq.s32.totalorder %s14, 1
    %p46 = por %p44, %p45
    %p47 = scmp.ne.s32.totalorder %s36, %s37
    %p48 = scmp.eq.s32.totalorder %s14, 0
    %p49 = por %p47, %p48
    %p50 = scmp.ne.s32.totalorder %s36, %s37
    %p51 = scmp.eq.s32.totalorder %s15, 1
    %p52 = por %p50, %p51
    %p54 = scmp.ne.s32.totalorder %s37, %s53
    %p55 = scmp.eq.s32.totalorder %s15, 0
    %p56 = por %p54, %p55
    %s57 = ssub.s32 %s16, %s28
    %p58 = scmp.eq.s32.totalorder %s57, 0
    %s60 = sadd.s32 %s59, 1
    %s61 = scalar_select %p58, %s59, %s60
    %p64 = pneg %p58
    %p65 = scmp.eq.s32.totalorder %s9, 1
    %p66 = por %p64, %p65
    %p67 = scmp.ne.s32.totalorder %s59, %s62
    %p68 = scmp.eq.s32.totalorder %s9, 0
    %p69 = por %p67, %p68
    %p70 = scmp.ne.s32.totalorder %s59, %s62
    %p71 = scmp.eq.s32.totalorder %s14, 1
    %p72 = por %p70, %p71
    %p73 = scmp.ne.s32.totalorder %s62, %s63
    %p74 = scmp.eq.s32.totalorder %s14, 0
    %p75 = por %p73, %p74
    %p76 = scmp.ne.s32.totalorder %s62, %s63
    %p77 = scmp.eq.s32.totalorder %s15, 1
    %p78 = por %p76, %p77
    %p80 = scmp.ne.s32.totalorder %s63, %s79
    %p81 = scmp.eq.s32.totalorder %s15, 0
    %p82 = por %p80, %p81
    %s83 = ssub.s32 %s16, %s28
    %p84 = scmp.eq.s32.totalorder %s83, 0
    %s86 = sadd.s32 %s85, 1
    %s87 = scalar_select %p84, %s85, %s86
    %p90 = pneg %p84
    %p91 = scmp.eq.s32.totalorder %s9, 1
    %p92 = por %p90, %p91
    %p93 = scmp.ne.s32.totalorder %s85, %s88
    %p94 = scmp.eq.s32.totalorder %s9, 0
    %p95 = por %p93, %p94
    %p96 = scmp.ne.s32.totalorder %s85, %s88
    %p97 = scmp.eq.s32.totalorder %s14, 1
    %p98 = por %p96, %p97
    %p99 = scmp.ne.s32.totalorder %s88, %s89
    %p100 = scmp.eq.s32.totalorder %s14, 0
    %p101 = por %p99, %p100
    %p102 = scmp.ne.s32.totalorder %s88, %s89
    %p103 = scmp.eq.s32.totalorder %s15, 1
    %p104 = por %p102, %p103
    %p106 = scmp.ne.s32.totalorder %s89, %s105
    %p107 = scmp.eq.s32.totalorder %s15, 0
    %p108 = por %p106, %p107
    %p109 = scmp.le.s32.totalorder 1, %s9
    %p110 = scmp.lt.s32.totalorder %s9, 3
    %p111 = pnand %p109, %p110
    %p112 = pneg %p111
    // Predicated region
    $region9: #{decoder_attn_block.3} parent=5 // pred_check
      _
    $region10: #{decoder_attn_block.3} parent=5 // pred_check_branch
      %114 = sbr.rel (%p111) target = $region12
    $region11: #{decoder_attn_block.3} parent=5 // pred_region
      %s115 = ssub.s32 %s9, 1
    $region12: #{decoder_attn_block.3} parent=5 // pred_fallthru
      _
    %p116 = scmp.lt.s32.totalorder %s9, 2
    // Predicated region
    $region13: #{decoder_attn_block.3} parent=5 // pred_check
      %p117 = pneg %p116
    $region14: #{decoder_attn_block.3} parent=5 // pred_check_branch
      %119 = sbr.rel (%p117) target = $region16
    $region15: #{decoder_attn_block.3} parent=5 // pred_region
      // Predicated region
      $region17: #{decoder_attn_block.3} parent=15 // pred_check
        %p120 = pneg %p43
      $region18: #{decoder_attn_block.3} parent=15 // pred_check_branch
        %122 = sbr.rel (%p120) target = $region20
      $region19: #{decoder_attn_block.3} parent=15 // pred_region
        %s123 = smul.u32 2, %s17
        %p124 = scmp.lt.s32.totalorder %s16, 1
        %s125 = scalar_select %p124, %s16, 1
        %p126 = scmp.lt.s32.totalorder %s123, 1
        %s127 = scalar_select %p126, %s123, 1
        %s128 = smul.addr %s125, 16
        %s129 = sadd.s32 %s127, %s128
        %s130 = smul.addr %s129, 8
        %s131 = scalar_lea.vmem %s0, %s130
        %s132 = smul.u32 2, %s17
      $region20: #{decoder_attn_block.3} parent=15 // pred_fallthru
        _
    $region16: #{decoder_attn_block.3} parent=5 // pred_fallthru
      _
    %p133 = scmp.le.s32.totalorder 1, %s9
    %p134 = scmp.lt.s32.totalorder %s9, 3
    %p135 = pnand %p133, %p134
    %p136 = pneg %p135
    // Predicated region
    $region21: #{decoder_attn_block.3} parent=5 // pred_check
      _
    $region22: #{decoder_attn_block.3} parent=5 // pred_check_branch
      %138 = sbr.rel (%p135) target = $region24
    $region23: #{decoder_attn_block.3} parent=5 // pred_region
      %s139 = ssub.s32 %s9, 1
      %s140 = smul.u32 2, %s19
      %p141 = scmp.lt.s32.totalorder %s18, 1
      %s142 = scalar_select %p141, %s18, 1
      %p143 = scmp.lt.s32.totalorder %s140, 1
      %s144 = scalar_select %p143, %s140, 1
      %s145 = smul.addr %s142, 16
      %s146 = sadd.s32 %s144, %s145
      %s147 = smul.addr %s146, 8
      %s148 = scalar_lea.vmem %s0, %s147
      %p149 = pneg %p49
      %p150 = pneg %p46
      %p151 = pneg %p75
      %p152 = pneg %p72
      %p153 = scmp.lt.s32.totalorder %s18, 1
      %s154 = scalar_select %p153, %s18, 1
      %s155 = smul.addr %s154, 8
      %s156 = smul.addr %s155, 8
      %s157 = scalar_lea.vmem %s1, %s156
      %p158 = pneg %p101
      %p159 = pneg %p98
      %p160 = scmp.lt.s32.totalorder %s18, 1
      %s161 = scalar_select %p160, %s18, 1
      %s162 = smul.addr %s161, 8
      %s163 = smul.addr %s162, 8
      %s164 = scalar_lea.vmem %s2, %s163
      %s165 = smul.u32 2, %s19
      %p166 = scmp.lt.s32.totalorder %s18, 1
      %s167 = scalar_select %p166, %s18, 1
      %p168 = scmp.lt.s32.totalorder %s165, 1
      %s169 = scalar_select %p168, %s165, 1
      %s170 = smul.addr %s167, 16
      %s171 = sadd.s32 %s169, %s170
      %s172 = smul.addr %s171, 8
      %s173 = scalar_lea.vmem %s0, %s172
      %s174 = smul.u32 2, %s19
      %p175 = scmp.lt.s32.totalorder %s18, 1
      %s176 = scalar_select %p175, %s18, 1
      %s177 = smul.addr %s176, 8
      %s178 = smul.addr %s177, 8
      %s179 = scalar_lea.vmem %s1, %s178
      %p180 = scmp.lt.s32.totalorder %s18, 1
      %s181 = scalar_select %p180, %s18, 1
      %s182 = smul.addr %s181, 8
      %s183 = smul.addr %s182, 8
      %s184 = scalar_lea.vmem %s2, %s183
      %p185 = scmp.eq.s32.totalorder %s19, 0
      // Predicated region
      $region25: #{decoder_attn_block.3} parent=23 // pred_check
        %p186 = pneg %p185
      $region26: #{decoder_attn_block.3} parent=23 // pred_check_branch
        %188 = sbr.rel (%p186) target = $region28
      $region27: #{decoder_attn_block.3} parent=23 // pred_region
        %vm189 = vcmask 7168
        %190 = vst.msk [vmem:[%s179] sm:$0xff] %vm189, 0.0
        %191 = vst.msk [vmem:[%s179 + $0x8] sm:$0xff] %vm189, 0.0
        %192 = vst.msk [vmem:[%s179 + $0x10] sm:$0xff] %vm189, 0.0
        %193 = vst.msk [vmem:[%s179 + $0x18] sm:$0xff] %vm189, 0.0
        %194 = vst.msk [vmem:[%s179 + $0x20] sm:$0xff] %vm189, 0.0
        %195 = vst.msk [vmem:[%s179 + $0x28] sm:$0xff] %vm189, 0.0
        %196 = vst.msk [vmem:[%s179 + $0x30] sm:$0xff] %vm189, 0.0
        %197 = vst.msk [vmem:[%s179 + $0x38] sm:$0xff] %vm189, 0.0
        %198 = vst.msk [vmem:[%s184] sm:$0xff] %vm189, 0.0
        %199 = vst.msk [vmem:[%s184 + $0x8] sm:$0xff] %vm189, 0.0
        %200 = vst.msk [vmem:[%s184 + $0x10] sm:$0xff] %vm189, 0.0
        %201 = vst.msk [vmem:[%s184 + $0x18] sm:$0xff] %vm189, 0.0
        %202 = vst.msk [vmem:[%s184 + $0x20] sm:$0xff] %vm189, 0.0
        %203 = vst.msk [vmem:[%s184 + $0x28] sm:$0xff] %vm189, 0.0
        %204 = vst.msk [vmem:[%s184 + $0x30] sm:$0xff] %vm189, 0.0
        %205 = vst.msk [vmem:[%s184 + $0x38] sm:$0xff] %vm189, 0.0
      $region28: #{decoder_attn_block.3} parent=23 // pred_fallthru
        _
      %v206 = vld [vmem:[%s173] sm:$0xff]
      %v207 = vld [vmem:[%s173 + $0x8] sm:$0xff]
      %v208 = vld [vmem:[%s173 + $0x10] sm:$0xff]
      %v209 = vld [vmem:[%s173 + $0x18] sm:$0xff]
      %v210 = vld [vmem:[%s173 + $0x20] sm:$0xff]
      %v211 = vld [vmem:[%s173 + $0x28] sm:$0xff]
      %v212 = vld [vmem:[%s173 + $0x30] sm:$0xff]
      %v213 = vld [vmem:[%s173 + $0x38] sm:$0xff]
      %v214 = vld [vmem:[%s173 + $0x40] sm:$0xff]
      %v215 = vld [vmem:[%s173 + $0x48] sm:$0xff]
      %v216 = vld [vmem:[%s173 + $0x50] sm:$0xff]
      %v217 = vld [vmem:[%s173 + $0x58] sm:$0xff]
      %v218 = vld [vmem:[%s173 + $0x60] sm:$0xff]
      %v219 = vld [vmem:[%s173 + $0x68] sm:$0xff]
      %v220 = vld [vmem:[%s173 + $0x70] sm:$0xff]
      %v221 = vld [vmem:[%s173 + $0x78] sm:$0xff]
      %v222 = vld [vmem:[%s179] sm:$0xff]
      %v223 = vld [vmem:[%s179 + $0x8] sm:$0xff]
      %v224 = vld [vmem:[%s179 + $0x10] sm:$0xff]
      %v225 = vld [vmem:[%s179 + $0x18] sm:$0xff]
      %v226 = vld [vmem:[%s179 + $0x20] sm:$0xff]
      %v227 = vld [vmem:[%s179 + $0x28] sm:$0xff]
      %v228 = vld [vmem:[%s179 + $0x30] sm:$0xff]
      %v229 = vld [vmem:[%s179 + $0x38] sm:$0xff]
      %v230 = vadd.f32 %v206, %v207
      %231 = vadd.xlane.f32.xlu0 %v230
      %v232 = vpop.xlane.xlu0 %231
      %v233 = vadd.f32 %v208, %v209
      %234 = vadd.xlane.f32.xlu0 %v233
      %v235 = vpop.xlane.xlu0 %234
      %v236 = vadd.f32 %v210, %v211
      %237 = vadd.xlane.f32.xlu0 %v236
      %v238 = vpop.xlane.xlu0 %237
      %v239 = vadd.f32 %v212, %v213
      %240 = vadd.xlane.f32.xlu0 %v239
      %v241 = vpop.xlane.xlu0 %240
      %v242 = vadd.f32 %v214, %v215
      %243 = vadd.xlane.f32.xlu0 %v242
      %v244 = vpop.xlane.xlu0 %243
      %v245 = vadd.f32 %v216, %v217
      %246 = vadd.xlane.f32.xlu0 %v245
      %v247 = vpop.xlane.xlu0 %246
      %v248 = vadd.f32 %v218, %v219
      %249 = vadd.xlane.f32.xlu0 %v248
      %v250 = vpop.xlane.xlu0 %249
      %v251 = vadd.f32 %v220, %v221
      %252 = vadd.xlane.f32.xlu0 %v251
      %v253 = vpop.xlane.xlu0 %252
      %v254 = vadd.f32 %v222, %v232
      %v255 = vadd.f32 %v223, %v235
      %v256 = vadd.f32 %v224, %v238
      %v257 = vadd.f32 %v225, %v241
      %v258 = vadd.f32 %v226, %v244
      %v259 = vadd.f32 %v227, %v247
      %v260 = vadd.f32 %v228, %v250
      %v261 = vadd.f32 %v229, %v253
      %vm262 = vcmask 7168
      %263 = vst.msk [vmem:[%s179] sm:$0xff] %vm262, %v254
      %264 = vst.msk [vmem:[%s179 + $0x8] sm:$0xff] %vm262, %v255
      %265 = vst.msk [vmem:[%s179 + $0x10] sm:$0xff] %vm262, %v256
      %266 = vst.msk [vmem:[%s179 + $0x18] sm:$0xff] %vm262, %v257
      %267 = vst.msk [vmem:[%s179 + $0x20] sm:$0xff] %vm262, %v258
      %268 = vst.msk [vmem:[%s179 + $0x28] sm:$0xff] %vm262, %v259
      %269 = vst.msk [vmem:[%s179 + $0x30] sm:$0xff] %vm262, %v260
      %270 = vst.msk [vmem:[%s179 + $0x38] sm:$0xff] %vm262, %v261
      %v271 = vld [vmem:[%s184] sm:$0xff]
      %v272 = vld [vmem:[%s184 + $0x8] sm:$0xff]
      %v273 = vld [vmem:[%s184 + $0x10] sm:$0xff]
      %v274 = vld [vmem:[%s184 + $0x18] sm:$0xff]
      %v275 = vld [vmem:[%s184 + $0x20] sm:$0xff]
      %v276 = vld [vmem:[%s184 + $0x28] sm:$0xff]
      %v277 = vld [vmem:[%s184 + $0x30] sm:$0xff]
      %v278 = vld [vmem:[%s184 + $0x38] sm:$0xff]
      %v279 = vmul.f32 %v206, %v206
      %v280 = vmul.f32 %v207, %v207
      %v281 = vmul.f32 %v208, %v208
      %v282 = vmul.f32 %v209, %v209
      %v283 = vmul.f32 %v210, %v210
      %v284 = vmul.f32 %v211, %v211
      %v285 = vmul.f32 %v212, %v212
      %v286 = vmul.f32 %v213, %v213
      %v287 = vmul.f32 %v214, %v214
      %v288 = vmul.f32 %v215, %v215
      %v289 = vmul.f32 %v216, %v216
      %v290 = vmul.f32 %v217, %v217
      %v291 = vmul.f32 %v218, %v218
      %v292 = vmul.f32 %v219, %v219
      %v293 = vmul.f32 %v220, %v220
      %v294 = vmul.f32 %v221, %v221
      %v295 = vadd.f32 %v279, %v280
      %296 = vadd.xlane.f32.xlu0 %v295
      %v297 = vpop.xlane.xlu0 %296
      %v298 = vadd.f32 %v281, %v282
      %299 = vadd.xlane.f32.xlu0 %v298
      %v300 = vpop.xlane.xlu0 %299
      %v301 = vadd.f32 %v283, %v284
      %302 = vadd.xlane.f32.xlu0 %v301
      %v303 = vpop.xlane.xlu0 %302
      %v304 = vadd.f32 %v285, %v286
      %305 = vadd.xlane.f32.xlu0 %v304
      %v306 = vpop.xlane.xlu0 %305
      %v307 = vadd.f32 %v287, %v288
      %308 = vadd.xlane.f32.xlu0 %v307
      %v309 = vpop.xlane.xlu0 %308
      %v310 = vadd.f32 %v289, %v290
      %311 = vadd.xlane.f32.xlu0 %v310
      %v312 = vpop.xlane.xlu0 %311
      %v313 = vadd.f32 %v291, %v292
      %314 = vadd.xlane.f32.xlu0 %v313
      %v315 = vpop.xlane.xlu0 %314
      %v316 = vadd.f32 %v293, %v294
      %317 = vadd.xlane.f32.xlu0 %v316
      %v318 = vpop.xlane.xlu0 %317
      %v319 = vadd.f32 %v271, %v297
      %v320 = vadd.f32 %v272, %v300
      %v321 = vadd.f32 %v273, %v303
      %v322 = vadd.f32 %v274, %v306
      %v323 = vadd.f32 %v275, %v309
      %v324 = vadd.f32 %v276, %v312
      %v325 = vadd.f32 %v277, %v315
      %v326 = vadd.f32 %v278, %v318
      %327 = vst.msk [vmem:[%s184] sm:$0xff] %vm262, %v319
      %328 = vst.msk [vmem:[%s184 + $0x8] sm:$0xff] %vm262, %v320
      %329 = vst.msk [vmem:[%s184 + $0x10] sm:$0xff] %vm262, %v321
      %330 = vst.msk [vmem:[%s184 + $0x18] sm:$0xff] %vm262, %v322
      %331 = vst.msk [vmem:[%s184 + $0x20] sm:$0xff] %vm262, %v323
      %332 = vst.msk [vmem:[%s184 + $0x28] sm:$0xff] %vm262, %v324
      %333 = vst.msk [vmem:[%s184 + $0x30] sm:$0xff] %vm262, %v325
      %334 = vst.msk [vmem:[%s184 + $0x38] sm:$0xff] %vm262, %v326
      %p335 = scmp.lt.s32.totalorder %s18, 1
      %s336 = scalar_select %p335, %s18, 1
      %s337 = smul.addr %s336, 8
      %s338 = smul.addr %s337, 8
      %s339 = scalar_lea.vmem %s1, %s338
      %p340 = scmp.lt.s32.totalorder %s18, 1
      %s341 = scalar_select %p340, %s18, 1
      %s342 = smul.addr %s341, 8
      %s343 = smul.addr %s342, 8
      %s344 = scalar_lea.vmem %s2, %s343
      // Predicated region
      $region29: #{decoder_attn_block.3} parent=23 // pred_check
        %p345 = pneg %p72
      $region30: #{decoder_attn_block.3} parent=23 // pred_check_branch
        %347 = sbr.rel (%p345) target = $region32
      $region31: #{decoder_attn_block.3} parent=23 // pred_region
        _
      $region32: #{decoder_attn_block.3} parent=23 // pred_fallthru
        _
      // Predicated region
      $region33: #{decoder_attn_block.3} parent=23 // pred_check
        %p348 = pneg %p98
      $region34: #{decoder_attn_block.3} parent=23 // pred_check_branch
        %350 = sbr.rel (%p348) target = $region36
      $region35: #{decoder_attn_block.3} parent=23 // pred_region
        _
      $region36: #{decoder_attn_block.3} parent=23 // pred_fallthru
        _
    $region24: #{decoder_attn_block.3} parent=5 // pred_fallthru
      _
    %p351 = scmp.le.s32.totalorder 2, %s9
    // Predicated region
    $region37: #{decoder_attn_block.3} parent=5 // pred_check
      %p352 = pneg %p351
    $region38: #{decoder_attn_block.3} parent=5 // pred_check_branch
      %354 = sbr.rel (%p352) target = $region40
    $region39: #{decoder_attn_block.3} parent=5 // pred_region
      %s355 = ssub.s32 %s9, 2
      // Predicated region
      $region41: #{decoder_attn_block.3} parent=39 // pred_check
        %p356 = pneg %p78
      $region42: #{decoder_attn_block.3} parent=39 // pred_check_branch
        %358 = sbr.rel (%p356) target = $region44
      $region43: #{decoder_attn_block.3} parent=39 // pred_region
        %p359 = scmp.lt.s32.totalorder %s20, 1
        %s360 = scalar_select %p359, %s20, 1
        %s361 = smul.addr %s360, 8
        %s362 = smul.addr %s361, 8
        %s363 = scalar_lea.vmem %s1, %s362
      $region44: #{decoder_attn_block.3} parent=39 // pred_fallthru
        _
      // Predicated region
      $region45: #{decoder_attn_block.3} parent=39 // pred_check
        %p364 = pneg %p104
      $region46: #{decoder_attn_block.3} parent=39 // pred_check_branch
        %366 = sbr.rel (%p364) target = $region48
      $region47: #{decoder_attn_block.3} parent=39 // pred_region
        %p367 = scmp.lt.s32.totalorder %s20, 1
        %s368 = scalar_select %p367, %s20, 1
        %s369 = smul.addr %s368, 8
        %s370 = smul.addr %s369, 8
        %s371 = scalar_lea.vmem %s2, %s370
      $region48: #{decoder_attn_block.3} parent=39 // pred_fallthru
        _
    $region40: #{decoder_attn_block.3} parent=5 // pred_fallthru
      _
  $region6: #{decoder_attn_block.3} parent=0 // loop_footer
    %s13 = sadd.s32 1, %s9
  $region7: #{decoder_attn_block.3} parent=0 // loop_footer_branch
    %8 = sbr.rel target = $region3
  $region8: #{decoder_attn_block.3} parent=0 // loop_exit
    _

// kernel: decoder_attn_block.4
$region0: #{decoder_attn_block.4}
  #allocation0 [shape = 'u32[]', space=smem, size = 0x4, offset = 0x4, fixed_abs, tag = 'smem constant byte address 0x4 - core index']
  #allocation1 [shape = 'u32[144,128]{1,0:T(1,128)}', space=vmem, size = 0x12000, scoped, tag = 'internal scratch']
  %s0 = inlined_call_operand.vmem [shape: f32[2,64,256], index: 0, kind: input, shape index: {}]
  %s1 = inlined_call_operand.vmem [shape: bf16[2,32,256], index: 1, kind: input, shape index: {}]
  %s2 = inlined_call_operand.vmem [shape: f32[2,64,1], index: 2, kind: input, shape index: {}]
  %s3 = inlined_call_operand.vmem [shape: f32[2,64,1], index: 3, kind: input, shape index: {}]
  %s4 = inlined_call_operand.vmem [shape: bf16[128,32], index: 4, kind: input, shape index: {}]
  %s5 = inlined_call_operand.vmem [shape: f32[128,1], index: 5, kind: input, shape index: {}]
  %s6 = inlined_call_operand.vmem [shape: bf16[192,64], index: 6, kind: input, shape index: {}]
  %s7 = inlined_call_operand.vmem [shape: f32[192,1], index: 7, kind: input, shape index: {}]
  %s8 = inlined_call_operand.vmem [shape: bf16[2,192,256], index: 8, kind: output, shape index: {}]
  %s9 = sld [smem:[#allocation0]]
  $region65: #{decoder_attn_block.4} parent=0
    _
  %s11 = ssub.s32 1, %s9
  %s12 = scalar_select 0, %s11, %s9
  loop: start=0, step=1, limit=4
  $region2: #{decoder_attn_block.4} parent=0 // loop_pre_header
    _
  $region3: #{decoder_attn_block.4} parent=0 // loop_header
    %s14 = sphi 0, %s18
    %p15 = scmp.ge.s32.totalorder %s14, 4
    %s21 = sphi 0, %s33
    %s22 = sphi 0, %s29
    %s23 = sphi 0, %s21
    %s24 = sphi 0, %s22
    %s25 = sphi 0, %s23
    %s26 = sphi 0, %s24
    %s38 = sphi 0, %s40
    %s41 = sphi 0, %s38
    %s42 = sphi 0, %s41
    %s58 = sphi 0, %s42
    %s66 = sphi 0, %s68
    %s69 = sphi 0, %s66
    %s70 = sphi 0, %s69
    %s86 = sphi 0, %s70
    %s92 = sphi 0, %s94
    %s95 = sphi 0, %s92
    %s96 = sphi 0, %s95
    %s112 = sphi 0, %s96
    %s118 = sphi 0, %s120
    %s121 = sphi 0, %s118
    %s122 = sphi 0, %s121
    %s138 = sphi 0, %s122
    %s142 = sphi 0, %s142
    %s144 = sphi 0, %s142
    %s145 = sphi 0, %s144
    %s159 = sphi 0, %s145
    %s163 = sphi 0, %s163
    %s165 = sphi 0, %s163
    %s166 = sphi 0, %s165
    %s180 = sphi 0, %s166
    %s184 = sphi 0, %s184
    %s186 = sphi 0, %s184
    %s187 = sphi 0, %s186
    %s201 = sphi 0, %s187
    %s205 = sphi 0, %s205
    %s207 = sphi 0, %s205
    %s208 = sphi 0, %s207
    %s222 = sphi 0, %s208
    %s230 = sphi 0, %s232
    %s233 = sphi 0, %s230
    %s234 = sphi 0, %s233
    %s250 = sphi 0, %s234
  $region4: #{decoder_attn_block.4} parent=0 // loop_header_branch
    %17 = sbr.rel (%p15) target = $region8
  $region5: #{decoder_attn_block.4} parent=0 // loop_body
    %s19 = ssub.s32 %s14, 1
    %s20 = ssub.s32 %s14, 2
    %s27 = sadd.s32 1, %s22
    %p28 = scmp.ge.s32.totalorder %s27, 1
    %s29 = scalar_select %p28, 0, %s27
    %s30 = sadd.s32 1, %s21
    %s31 = scalar_select %p28, %s30, %s21
    %p32 = scmp.ge.s32.totalorder %s31, 2
    %s33 = scalar_select %p32, 0, %s31
    %s34 = ssub.s32 %s21, %s33
    %s35 = ssub.s32 %s22, %s29
    %s36 = sor.u32 %s34, %s35
    %p37 = scmp.eq.s32.totalorder %s36, 0
    %s39 = sadd.s32 %s38, 1
    %s40 = scalar_select %p37, %s38, %s39
    %p43 = pneg %p37
    %p44 = scmp.eq.s32.totalorder %s14, 1
    %p45 = por %p43, %p44
    %p46 = scmp.ne.s32.totalorder %s38, %s41
    %p47 = scmp.eq.s32.totalorder %s14, 0
    %p48 = por %p46, %p47
    %p49 = scmp.ne.s32.totalorder %s38, %s41
    %p50 = scmp.eq.s32.totalorder %s19, 1
    %p51 = por %p49, %p50
    %p52 = scmp.ne.s32.totalorder %s41, %s42
    %p53 = scmp.eq.s32.totalorder %s19, 0
    %p54 = por %p52, %p53
    %p55 = scmp.ne.s32.totalorder %s41, %s42
    %p56 = scmp.eq.s32.totalorder %s20, 1
    %p57 = por %p55, %p56
    %p59 = scmp.ne.s32.totalorder %s42, %s58
    %p60 = scmp.eq.s32.totalorder %s20, 0
    %p61 = por %p59, %p60
    %s62 = ssub.s32 %s21, %s33
    %s63 = ssub.s32 %s22, %s29
    %s64 = sor.u32 %s62, %s63
    %p65 = scmp.eq.s32.totalorder %s64, 0
    %s67 = sadd.s32 %s66, 1
    %s68 = scalar_select %p65, %s66, %s67
    %p71 = pneg %p65
    %p72 = scmp.eq.s32.totalorder %s14, 1
    %p73 = por %p71, %p72
    %p74 = scmp.ne.s32.totalorder %s66, %s69
    %p75 = scmp.eq.s32.totalorder %s14, 0
    %p76 = por %p74, %p75
    %p77 = scmp.ne.s32.totalorder %s66, %s69
    %p78 = scmp.eq.s32.totalorder %s19, 1
    %p79 = por %p77, %p78
    %p80 = scmp.ne.s32.totalorder %s69, %s70
    %p81 = scmp.eq.s32.totalorder %s19, 0
    %p82 = por %p80, %p81
    %p83 = scmp.ne.s32.totalorder %s69, %s70
    %p84 = scmp.eq.s32.totalorder %s20, 1
    %p85 = por %p83, %p84
    %p87 = scmp.ne.s32.totalorder %s70, %s86
    %p88 = scmp.eq.s32.totalorder %s20, 0
    %p89 = por %p87, %p88
    %s90 = ssub.s32 %s21, %s33
    %p91 = scmp.eq.s32.totalorder %s90, 0
    %s93 = sadd.s32 %s92, 1
    %s94 = scalar_select %p91, %s92, %s93
    %p97 = pneg %p91
    %p98 = scmp.eq.s32.totalorder %s14, 1
    %p99 = por %p97, %p98
    %p100 = scmp.ne.s32.totalorder %s92, %s95
    %p101 = scmp.eq.s32.totalorder %s14, 0
    %p102 = por %p100, %p101
    %p103 = scmp.ne.s32.totalorder %s92, %s95
    %p104 = scmp.eq.s32.totalorder %s19, 1
    %p105 = por %p103, %p104
    %p106 = scmp.ne.s32.totalorder %s95, %s96
    %p107 = scmp.eq.s32.totalorder %s19, 0
    %p108 = por %p106, %p107
    %p109 = scmp.ne.s32.totalorder %s95, %s96
    %p110 = scmp.eq.s32.totalorder %s20, 1
    %p111 = por %p109, %p110
    %p113 = scmp.ne.s32.totalorder %s96, %s112
    %p114 = scmp.eq.s32.totalorder %s20, 0
    %p115 = por %p113, %p114
    %s116 = ssub.s32 %s21, %s33
    %p117 = scmp.eq.s32.totalorder %s116, 0
    %s119 = sadd.s32 %s118, 1
    %s120 = scalar_select %p117, %s118, %s119
    %p123 = pneg %p117
    %p124 = scmp.eq.s32.totalorder %s14, 1
    %p125 = por %p123, %p124
    %p126 = scmp.ne.s32.totalorder %s118, %s121
    %p127 = scmp.eq.s32.totalorder %s14, 0
    %p128 = por %p126, %p127
    %p129 = scmp.ne.s32.totalorder %s118, %s121
    %p130 = scmp.eq.s32.totalorder %s19, 1
    %p131 = por %p129, %p130
    %p132 = scmp.ne.s32.totalorder %s121, %s122
    %p133 = scmp.eq.s32.totalorder %s19, 0
    %p134 = por %p132, %p133
    %p135 = scmp.ne.s32.totalorder %s121, %s122
    %p136 = scmp.eq.s32.totalorder %s20, 1
    %p137 = por %p135, %p136
    %p139 = scmp.ne.s32.totalorder %s122, %s138
    %p140 = scmp.eq.s32.totalorder %s20, 0
    %p141 = por %p139, %p140
    %s143 = sadd.s32 %s142, 1
    %p146 = scmp.eq.s32.totalorder %s14, 1
    %p147 = scmp.ne.s32.totalorder %s142, %s144
    %p148 = scmp.eq.s32.totalorder %s14, 0
    %p149 = por %p147, %p148
    %p150 = scmp.ne.s32.totalorder %s142, %s144
    %p151 = scmp.eq.s32.totalorder %s19, 1
    %p152 = por %p150, %p151
    %p153 = scmp.ne.s32.totalorder %s144, %s145
    %p154 = scmp.eq.s32.totalorder %s19, 0
    %p155 = por %p153, %p154
    %p156 = scmp.ne.s32.totalorder %s144, %s145
    %p157 = scmp.eq.s32.totalorder %s20, 1
    %p158 = por %p156, %p157
    %p160 = scmp.ne.s32.totalorder %s145, %s159
    %p161 = scmp.eq.s32.totalorder %s20, 0
    %p162 = por %p160, %p161
    %s164 = sadd.s32 %s163, 1
    %p167 = scmp.eq.s32.totalorder %s14, 1
    %p168 = scmp.ne.s32.totalorder %s163, %s165
    %p169 = scmp.eq.s32.totalorder %s14, 0
    %p170 = por %p168, %p169
    %p171 = scmp.ne.s32.totalorder %s163, %s165
    %p172 = scmp.eq.s32.totalorder %s19, 1
    %p173 = por %p171, %p172
    %p174 = scmp.ne.s32.totalorder %s165, %s166
    %p175 = scmp.eq.s32.totalorder %s19, 0
    %p176 = por %p174, %p175
    %p177 = scmp.ne.s32.totalorder %s165, %s166
    %p178 = scmp.eq.s32.totalorder %s20, 1
    %p179 = por %p177, %p178
    %p181 = scmp.ne.s32.totalorder %s166, %s180
    %p182 = scmp.eq.s32.totalorder %s20, 0
    %p183 = por %p181, %p182
    %s185 = sadd.s32 %s184, 1
    %p188 = scmp.eq.s32.totalorder %s14, 1
    %p189 = scmp.ne.s32.totalorder %s184, %s186
    %p190 = scmp.eq.s32.totalorder %s14, 0
    %p191 = por %p189, %p190
    %p192 = scmp.ne.s32.totalorder %s184, %s186
    %p193 = scmp.eq.s32.totalorder %s19, 1
    %p194 = por %p192, %p193
    %p195 = scmp.ne.s32.totalorder %s186, %s187
    %p196 = scmp.eq.s32.totalorder %s19, 0
    %p197 = por %p195, %p196
    %p198 = scmp.ne.s32.totalorder %s186, %s187
    %p199 = scmp.eq.s32.totalorder %s20, 1
    %p200 = por %p198, %p199
    %p202 = scmp.ne.s32.totalorder %s187, %s201
    %p203 = scmp.eq.s32.totalorder %s20, 0
    %p204 = por %p202, %p203
    %s206 = sadd.s32 %s205, 1
    %p209 = scmp.eq.s32.totalorder %s14, 1
    %p210 = scmp.ne.s32.totalorder %s205, %s207
    %p211 = scmp.eq.s32.totalorder %s14, 0
    %p212 = por %p210, %p211
    %p213 = scmp.ne.s32.totalorder %s205, %s207
    %p214 = scmp.eq.s32.totalorder %s19, 1
    %p215 = por %p213, %p214
    %p216 = scmp.ne.s32.totalorder %s207, %s208
    %p217 = scmp.eq.s32.totalorder %s19, 0
    %p218 = por %p216, %p217
    %p219 = scmp.ne.s32.totalorder %s207, %s208
    %p220 = scmp.eq.s32.totalorder %s20, 1
    %p221 = por %p219, %p220
    %p223 = scmp.ne.s32.totalorder %s208, %s222
    %p224 = scmp.eq.s32.totalorder %s20, 0
    %p225 = por %p223, %p224
    %s226 = ssub.s32 %s21, %s33
    %s227 = ssub.s32 %s22, %s29
    %s228 = sor.u32 %s226, %s227
    %p229 = scmp.eq.s32.totalorder %s228, 0
    %s231 = sadd.s32 %s230, 1
    %s232 = scalar_select %p229, %s230, %s231
    %p235 = pneg %p229
    %p236 = scmp.eq.s32.totalorder %s14, 1
    %p237 = por %p235, %p236
    %p238 = scmp.ne.s32.totalorder %s230, %s233
    %p239 = scmp.eq.s32.totalorder %s14, 0
    %p240 = por %p238, %p239
    %p241 = scmp.ne.s32.totalorder %s230, %s233
    %p242 = scmp.eq.s32.totalorder %s19, 1
    %p243 = por %p241, %p242
    %p244 = scmp.ne.s32.totalorder %s233, %s234
    %p245 = scmp.eq.s32.totalorder %s19, 0
    %p246 = por %p244, %p245
    %p247 = scmp.ne.s32.totalorder %s233, %s234
    %p248 = scmp.eq.s32.totalorder %s20, 1
    %p249 = por %p247, %p248
    %p251 = scmp.ne.s32.totalorder %s234, %s250
    %p252 = scmp.eq.s32.totalorder %s20, 0
    %p253 = por %p251, %p252
    %p254 = scmp.le.s32.totalorder 1, %s14
    %p255 = scmp.lt.s32.totalorder %s14, 3
    %p256 = pnand %p254, %p255
    %p257 = pneg %p256
    // Predicated region
    $region9: #{decoder_attn_block.4} parent=5 // pred_check
      _
    $region10: #{decoder_attn_block.4} parent=5 // pred_check_branch
      %259 = sbr.rel (%p256) target = $region12
    $region11: #{decoder_attn_block.4} parent=5 // pred_region
      %s260 = ssub.s32 %s14, 1
      // Predicated region
      $region13: #{decoder_attn_block.4} parent=11 // pred_check
        %p261 = pneg %p155
      $region14: #{decoder_attn_block.4} parent=11 // pred_check_branch
        %263 = sbr.rel (%p261) target = $region16
      $region15: #{decoder_attn_block.4} parent=11 // pred_region
        _
      $region16: #{decoder_attn_block.4} parent=11 // pred_fallthru
        _
      // Predicated region
      $region17: #{decoder_attn_block.4} parent=11 // pred_check
        %p264 = pneg %p176
      $region18: #{decoder_attn_block.4} parent=11 // pred_check_branch
        %266 = sbr.rel (%p264) target = $region20
      $region19: #{decoder_attn_block.4} parent=11 // pred_region
        _
      $region20: #{decoder_attn_block.4} parent=11 // pred_fallthru
        _
      // Predicated region
      $region21: #{decoder_attn_block.4} parent=11 // pred_check
        %p267 = pneg %p197
      $region22: #{decoder_attn_block.4} parent=11 // pred_check_branch
        %269 = sbr.rel (%p267) target = $region24
      $region23: #{decoder_attn_block.4} parent=11 // pred_region
        _
      $region24: #{decoder_attn_block.4} parent=11 // pred_fallthru
        _
      // Predicated region
      $region25: #{decoder_attn_block.4} parent=11 // pred_check
        %p270 = pneg %p218
      $region26: #{decoder_attn_block.4} parent=11 // pred_check_branch
        %272 = sbr.rel (%p270) target = $region28
      $region27: #{decoder_attn_block.4} parent=11 // pred_region
        _
      $region28: #{decoder_attn_block.4} parent=11 // pred_fallthru
        _
    $region12: #{decoder_attn_block.4} parent=5 // pred_fallthru
      _
    %p273 = scmp.lt.s32.totalorder %s14, 2
    // Predicated region
    $region29: #{decoder_attn_block.4} parent=5 // pred_check
      %p274 = pneg %p273
    $region30: #{decoder_attn_block.4} parent=5 // pred_check_branch
      %276 = sbr.rel (%p274) target = $region32
    $region31: #{decoder_attn_block.4} parent=5 // pred_region
      // Predicated region
      $region33: #{decoder_attn_block.4} parent=31 // pred_check
        %p277 = pneg %p48
      $region34: #{decoder_attn_block.4} parent=31 // pred_check_branch
        %279 = sbr.rel (%p277) target = $region36
      $region35: #{decoder_attn_block.4} parent=31 // pred_region
        %s280 = smul.u32 2, %s22
        %p281 = scmp.lt.s32.totalorder %s21, 1
        %s282 = scalar_select %p281, %s21, 1
        %p283 = scmp.lt.s32.totalorder %s280, 1
        %s284 = scalar_select %p283, %s280, 1
        %s285 = smul.addr %s282, 16
        %s286 = sadd.s32 %s284, %s285
        %s287 = smul.addr %s286, 8
        %s288 = scalar_lea.vmem %s0, %s287
        %s289 = smul.u32 2, %s22
      $region36: #{decoder_attn_block.4} parent=31 // pred_fallthru
        _
      // Predicated region
      $region37: #{decoder_attn_block.4} parent=31 // pred_check
        %p290 = pneg %p76
      $region38: #{decoder_attn_block.4} parent=31 // pred_check_branch
        %292 = sbr.rel (%p290) target = $region40
      $region39: #{decoder_attn_block.4} parent=31 // pred_region
        %s293 = smul.u32 2, %s22
        %p294 = scmp.lt.s32.totalorder %s21, 1
        %s295 = scalar_select %p294, %s21, 1
        %p296 = scmp.lt.s32.totalorder %s293, 1
        %s297 = scalar_select %p296, %s293, 1
        %s298 = smul.addr %s295, 8
        %s299 = sadd.s32 %s297, %s298
        %s300 = smul.addr %s299, 4
        %s301 = scalar_lea.vmem %s1, %s300
        %s302 = smul.u32 2, %s22
      $region40: #{decoder_attn_block.4} parent=31 // pred_fallthru
        _
      // Predicated region
      $region41: #{decoder_attn_block.4} parent=31 // pred_check
        %p303 = pneg %p102
      $region42: #{decoder_attn_block.4} parent=31 // pred_check_branch
        %305 = sbr.rel (%p303) target = $region44
      $region43: #{decoder_attn_block.4} parent=31 // pred_region
        %p306 = scmp.lt.s32.totalorder %s21, 1
        %s307 = scalar_select %p306, %s21, 1
        %s308 = smul.addr %s307, 8
        %s309 = smul.addr %s308, 8
        %s310 = scalar_lea.vmem %s2, %s309
      $region44: #{decoder_attn_block.4} parent=31 // pred_fallthru
        _
      // Predicated region
      $region45: #{decoder_attn_block.4} parent=31 // pred_check
        %p311 = pneg %p128
      $region46: #{decoder_attn_block.4} parent=31 // pred_check_branch
        %313 = sbr.rel (%p311) target = $region48
      $region47: #{decoder_attn_block.4} parent=31 // pred_region
        %p314 = scmp.lt.s32.totalorder %s21, 1
        %s315 = scalar_select %p314, %s21, 1
        %s316 = smul.addr %s315, 8
        %s317 = smul.addr %s316, 8
        %s318 = scalar_lea.vmem %s3, %s317
      $region48: #{decoder_attn_block.4} parent=31 // pred_fallthru
        _
    $region32: #{decoder_attn_block.4} parent=5 // pred_fallthru
      _
    %p319 = scmp.le.s32.totalorder 1, %s14
    %p320 = scmp.lt.s32.totalorder %s14, 3
    %p321 = pnand %p319, %p320
    %p322 = pneg %p321
    // Predicated region
    $region49: #{decoder_attn_block.4} parent=5 // pred_check
      _
    $region50: #{decoder_attn_block.4} parent=5 // pred_check_branch
      %324 = sbr.rel (%p321) target = $region52
    $region51: #{decoder_attn_block.4} parent=5 // pred_region
      %s325 = ssub.s32 %s14, 1
      %s326 = smul.u32 2, %s24
      %p327 = scmp.lt.s32.totalorder %s23, 1
      %s328 = scalar_select %p327, %s23, 1
      %p329 = scmp.lt.s32.totalorder %s326, 1
      %s330 = scalar_select %p329, %s326, 1
      %s331 = smul.addr %s328, 16
      %s332 = sadd.s32 %s330, %s331
      %s333 = smul.addr %s332, 8
      %s334 = scalar_lea.vmem %s0, %s333
      %p335 = pneg %p54
      %p336 = pneg %p51
      %s337 = smul.u32 2, %s24
      %p338 = scmp.lt.s32.totalorder %s23, 1
      %s339 = scalar_select %p338, %s23, 1
      %p340 = scmp.lt.s32.totalorder %s337, 1
      %s341 = scalar_select %p340, %s337, 1
      %s342 = smul.addr %s339, 8
      %s343 = sadd.s32 %s341, %s342
      %s344 = smul.addr %s343, 4
      %s345 = scalar_lea.vmem %s1, %s344
      %p346 = pneg %p82
      %p347 = pneg %p79
      %p348 = scmp.lt.s32.totalorder %s23, 1
      %s349 = scalar_select %p348, %s23, 1
      %s350 = smul.addr %s349, 8
      %s351 = smul.addr %s350, 8
      %s352 = scalar_lea.vmem %s2, %s351
      %p353 = pneg %p108
      %p354 = pneg %p105
      %p355 = scmp.lt.s32.totalorder %s23, 1
      %s356 = scalar_select %p355, %s23, 1
      %s357 = smul.addr %s356, 8
      %s358 = smul.addr %s357, 8
      %s359 = scalar_lea.vmem %s3, %s358
      %p360 = pneg %p134
      %p361 = pneg %p131
      %p362 = pneg %p155
      %p363 = pneg %p152
      %p364 = pneg %p176
      %p365 = pneg %p173
      %p366 = pneg %p197
      %p367 = pneg %p194
      %p368 = pneg %p218
      %p369 = pneg %p215
      %p370 = pneg %p246
      %p371 = pneg %p243
      %s372 = smul.u32 2, %s24
      %p373 = scmp.lt.s32.totalorder %s23, 1
      %s374 = scalar_select %p373, %s23, 1
      %p375 = scmp.lt.s32.totalorder %s372, 1
      %s376 = scalar_select %p375, %s372, 1
      %s377 = smul.addr %s374, 48
      %s378 = sadd.s32 %s376, %s377
      %s379 = smul.addr %s378, 4
      %s380 = scalar_lea.vmem %s8, %s379
      %s381 = smul.u32 2, %s24
      %p382 = scmp.lt.s32.totalorder %s23, 1
      %s383 = scalar_select %p382, %s23, 1
      %p384 = scmp.lt.s32.totalorder %s381, 1
      %s385 = scalar_select %p384, %s381, 1
      %s386 = smul.addr %s383, 16
      %s387 = sadd.s32 %s385, %s386
      %s388 = smul.addr %s387, 8
      %s389 = scalar_lea.vmem %s0, %s388
      %s390 = smul.u32 2, %s24
      %s391 = smul.u32 2, %s24
      %p392 = scmp.lt.s32.totalorder %s23, 1
      %s393 = scalar_select %p392, %s23, 1
      %p394 = scmp.lt.s32.totalorder %s391, 1
      %s395 = scalar_select %p394, %s391, 1
      %s396 = smul.addr %s393, 8
      %s397 = sadd.s32 %s395, %s396
      %s398 = smul.addr %s397, 4
      %s399 = scalar_lea.vmem %s1, %s398
      %s400 = smul.u32 2, %s24
      %p401 = scmp.lt.s32.totalorder %s23, 1
      %s402 = scalar_select %p401, %s23, 1
      %s403 = smul.addr %s402, 8
      %s404 = smul.addr %s403, 8
      %s405 = scalar_lea.vmem %s2, %s404
      %p406 = scmp.lt.s32.totalorder %s23, 1
      %s407 = scalar_select %p406, %s23, 1
      %s408 = smul.addr %s407, 8
      %s409 = smul.addr %s408, 8
      %s410 = scalar_lea.vmem %s3, %s409
      %s411 = smul.u32 2, %s24
      %p412 = scmp.lt.s32.totalorder %s23, 1
      %s413 = scalar_select %p412, %s23, 1
      %p414 = scmp.lt.s32.totalorder %s411, 1
      %s415 = scalar_select %p414, %s411, 1
      %s416 = smul.addr %s413, 48
      %s417 = sadd.s32 %s415, %s416
      %s418 = smul.addr %s417, 4
      %s419 = scalar_lea.vmem %s8, %s418
      %s420 = smul.u32 2, %s24
      %v422 = vld [vmem:[%s389] sm:$0xff]
      %v423 = vld [vmem:[%s389 + $0x8] sm:$0xff]
      %v424 = vld [vmem:[%s389 + $0x10] sm:$0xff]
      %v425 = vld [vmem:[%s389 + $0x18] sm:$0xff]
      %v426 = vld [vmem:[%s389 + $0x20] sm:$0xff]
      %v427 = vld [vmem:[%s389 + $0x28] sm:$0xff]
      %v428 = vld [vmem:[%s389 + $0x30] sm:$0xff]
      %v429 = vld [vmem:[%s389 + $0x38] sm:$0xff]
      %v430 = vld [vmem:[%s389 + $0x40] sm:$0xff]
      %v431 = vld [vmem:[%s389 + $0x48] sm:$0xff]
      %v432 = vld [vmem:[%s389 + $0x50] sm:$0xff]
      %v433 = vld [vmem:[%s389 + $0x58] sm:$0xff]
      %v434 = vld [vmem:[%s389 + $0x60] sm:$0xff]
      %v435 = vld [vmem:[%s389 + $0x68] sm:$0xff]
      %v436 = vld [vmem:[%s389 + $0x70] sm:$0xff]
      %v437 = vld [vmem:[%s389 + $0x78] sm:$0xff]
      %v438 = vld [vmem:[%s399] sm:$0xff]
      %v439 = vld [vmem:[%s399 + $0x8] sm:$0xff]
      %v440 = vld [vmem:[%s399 + $0x10] sm:$0xff]
      %v441 = vld [vmem:[%s399 + $0x18] sm:$0xff]
      %v442 = vld [vmem:[%s405] sm:$0xff]
      %v443 = vld [vmem:[%s405 + $0x8] sm:$0xff]
      %v444 = vld [vmem:[%s405 + $0x10] sm:$0xff]
      %v445 = vld [vmem:[%s405 + $0x18] sm:$0xff]
      %v446 = vld [vmem:[%s405 + $0x20] sm:$0xff]
      %v447 = vld [vmem:[%s405 + $0x28] sm:$0xff]
      %v448 = vld [vmem:[%s405 + $0x30] sm:$0xff]
      %v449 = vld [vmem:[%s405 + $0x38] sm:$0xff]
      %451 = vset.pattern.permute.xlu0 0
      %452 = vperm.xlu0 %451, %v442
      %v453 = vpop.permute.xlu0 %452
      %456 = vset.pattern.permute.xlu0 0
      %457 = vperm.xlu0 %456, %v443
      %v458 = vpop.permute.xlu0 %457
      %461 = vset.pattern.permute.xlu0 0
      %462 = vperm.xlu0 %461, %v444
      %v463 = vpop.permute.xlu0 %462
      %466 = vset.pattern.permute.xlu0 0
      %467 = vperm.xlu0 %466, %v445
      %v468 = vpop.permute.xlu0 %467
      %471 = vset.pattern.permute.xlu0 0
      %472 = vperm.xlu0 %471, %v446
      %v473 = vpop.permute.xlu0 %472
      %476 = vset.pattern.permute.xlu0 0
      %477 = vperm.xlu0 %476, %v447
      %v478 = vpop.permute.xlu0 %477
      %481 = vset.pattern.permute.xlu0 0
      %482 = vperm.xlu0 %481, %v448
      %v483 = vpop.permute.xlu0 %482
      %486 = vset.pattern.permute.xlu0 0
      %487 = vperm.xlu0 %486, %v449
      %v488 = vpop.permute.xlu0 %487
      %v490 = vmul.f32 %v422, %v453
      %v491 = vmul.f32 %v423, %v453
      %v492 = vmul.f32 %v424, %v458
      %v493 = vmul.f32 %v425, %v458
      %v494 = vmul.f32 %v426, %v463
      %v495 = vmul.f32 %v427, %v463
      %v496 = vmul.f32 %v428, %v468
      %v497 = vmul.f32 %v429, %v468
      %v498 = vmul.f32 %v430, %v473
      %v499 = vmul.f32 %v431, %v473
      %v500 = vmul.f32 %v432, %v478
      %v501 = vmul.f32 %v433, %v478
      %v502 = vmul.f32 %v434, %v483
      %v503 = vmul.f32 %v435, %v483
      %v504 = vmul.f32 %v436, %v488
      %v505 = vmul.f32 %v437, %v488
      %v506 = vld [vmem:[%s410] sm:$0xff]
      %v507 = vld [vmem:[%s410 + $0x8] sm:$0xff]
      %v508 = vld [vmem:[%s410 + $0x10] sm:$0xff]
      %v509 = vld [vmem:[%s410 + $0x18] sm:$0xff]
      %v510 = vld [vmem:[%s410 + $0x20] sm:$0xff]
      %v511 = vld [vmem:[%s410 + $0x28] sm:$0xff]
      %v512 = vld [vmem:[%s410 + $0x30] sm:$0xff]
      %v513 = vld [vmem:[%s410 + $0x38] sm:$0xff]
      %515 = vset.pattern.permute.xlu0 0
      %516 = vperm.xlu0 %515, %v506
      %v517 = vpop.permute.xlu0 %516
      %520 = vset.pattern.permute.xlu0 0
      %521 = vperm.xlu0 %520, %v507
      %v522 = vpop.permute.xlu0 %521
      %525 = vset.pattern.permute.xlu0 0
      %526 = vperm.xlu0 %525, %v508
      %v527 = vpop.permute.xlu0 %526
      %530 = vset.pattern.permute.xlu0 0
      %531 = vperm.xlu0 %530, %v509
      %v532 = vpop.permute.xlu0 %531
      %535 = vset.pattern.permute.xlu0 0
      %536 = vperm.xlu0 %535, %v510
      %v537 = vpop.permute.xlu0 %536
      %540 = vset.pattern.permute.xlu0 0
      %541 = vperm.xlu0 %540, %v511
      %v542 = vpop.permute.xlu0 %541
      %545 = vset.pattern.permute.xlu0 0
      %546 = vperm.xlu0 %545, %v512
      %v547 = vpop.permute.xlu0 %546
      %550 = vset.pattern.permute.xlu0 0
      %551 = vperm.xlu0 %550, %v513
      %v552 = vpop.permute.xlu0 %551
      %v554 = vadd.f32 %v490, %v517
      %v555 = vadd.f32 %v491, %v517
      %v556 = vadd.f32 %v492, %v522
      %v557 = vadd.f32 %v493, %v522
      %v558 = vadd.f32 %v494, %v527
      %v559 = vadd.f32 %v495, %v527
      %v560 = vadd.f32 %v496, %v532
      %v561 = vadd.f32 %v497, %v532
      %v562 = vadd.f32 %v498, %v537
      %v563 = vadd.f32 %v499, %v537
      %v564 = vadd.f32 %v500, %v542
      %v565 = vadd.f32 %v501, %v542
      %v566 = vadd.f32 %v502, %v547
      %v567 = vadd.f32 %v503, %v547
      %v568 = vadd.f32 %v504, %v552
      %v569 = vadd.f32 %v505, %v552
      %v570 = vld [vmem:[%s4] sm:$0xf]
      %v571 = vld [vmem:[%s4 + $0x4] sm:$0xf]
      %v572 = vld [vmem:[%s4 + $0x8] sm:$0xf]
      %v573 = vld [vmem:[%s4 + $0xc] sm:$0xf]
      %v574 = vld [vmem:[%s4 + $0x10] sm:$0xf]
      %v575 = vld [vmem:[%s4 + $0x14] sm:$0xf]
      %v576 = vld [vmem:[%s4 + $0x18] sm:$0xf]
      %v577 = vld [vmem:[%s4 + $0x1c] sm:$0xf]
      %v578 = vld [vmem:[%s4 + $0x20] sm:$0xf]
      %v579 = vld [vmem:[%s4 + $0x24] sm:$0xf]
      %v580 = vld [vmem:[%s4 + $0x28] sm:$0xf]
      %v581 = vld [vmem:[%s4 + $0x2c] sm:$0xf]
      %v582 = vld [vmem:[%s4 + $0x30] sm:$0xf]
      %v583 = vld [vmem:[%s4 + $0x34] sm:$0xf]
      %v584 = vld [vmem:[%s4 + $0x38] sm:$0xf]
      %v585 = vld [vmem:[%s4 + $0x3c] sm:$0xf]
      %v586 = vld [vmem:[%s5] sm:$0xff]
      %v587 = vld [vmem:[%s5 + $0x8] sm:$0xff]
      %v588 = vld [vmem:[%s5 + $0x10] sm:$0xff]
      %v589 = vld [vmem:[%s5 + $0x18] sm:$0xff]
      %v590 = vld [vmem:[%s5 + $0x20] sm:$0xff]
      %v591 = vld [vmem:[%s5 + $0x28] sm:$0xff]
      %v592 = vld [vmem:[%s5 + $0x30] sm:$0xff]
      %v593 = vld [vmem:[%s5 + $0x38] sm:$0xff]
      %v594 = vld [vmem:[%s5 + $0x40] sm:$0xff]
      %v595 = vld [vmem:[%s5 + $0x48] sm:$0xff]
      %v596 = vld [vmem:[%s5 + $0x50] sm:$0xff]
      %v597 = vld [vmem:[%s5 + $0x58] sm:$0xff]
      %v598 = vld [vmem:[%s5 + $0x60] sm:$0xff]
      %v599 = vld [vmem:[%s5 + $0x68] sm:$0xff]
      %v600 = vld [vmem:[%s5 + $0x70] sm:$0xff]
      %v601 = vld [vmem:[%s5 + $0x78] sm:$0xff]
      %603 = vset.pattern.permute.xlu0 0
      %604 = vperm.xlu0 %603, %v586
      %v605 = vpop.permute.xlu0 %604
      %608 = vset.pattern.permute.xlu0 0
      %609 = vperm.xlu0 %608, %v587
      %v610 = vpop.permute.xlu0 %609
      %613 = vset.pattern.permute.xlu0 0
      %614 = vperm.xlu0 %613, %v588
      %v615 = vpop.permute.xlu0 %614
      %618 = vset.pattern.permute.xlu0 0
      %619 = vperm.xlu0 %618, %v589
      %v620 = vpop.permute.xlu0 %619
      %623 = vset.pattern.permute.xlu0 0
      %624 = vperm.xlu0 %623, %v590
      %v625 = vpop.permute.xlu0 %624
      %628 = vset.pattern.permute.xlu0 0
      %629 = vperm.xlu0 %628, %v591
      %v630 = vpop.permute.xlu0 %629
      %633 = vset.pattern.permute.xlu0 0
      %634 = vperm.xlu0 %633, %v592
      %v635 = vpop.permute.xlu0 %634
      %638 = vset.pattern.permute.xlu0 0
      %639 = vperm.xlu0 %638, %v593
      %v640 = vpop.permute.xlu0 %639
      %643 = vset.pattern.permute.xlu0 0
      %644 = vperm.xlu0 %643, %v594
      %v645 = vpop.permute.xlu0 %644
      %648 = vset.pattern.permute.xlu0 0
      %649 = vperm.xlu0 %648, %v595
      %v650 = vpop.permute.xlu0 %649
      %653 = vset.pattern.permute.xlu0 0
      %654 = vperm.xlu0 %653, %v596
      %v655 = vpop.permute.xlu0 %654
      %658 = vset.pattern.permute.xlu0 0
      %659 = vperm.xlu0 %658, %v597
      %v660 = vpop.permute.xlu0 %659
      %663 = vset.pattern.permute.xlu0 0
      %664 = vperm.xlu0 %663, %v598
      %v665 = vpop.permute.xlu0 %664
      %668 = vset.pattern.permute.xlu0 0
      %669 = vperm.xlu0 %668, %v599
      %v670 = vpop.permute.xlu0 %669
      %673 = vset.pattern.permute.xlu0 0
      %674 = vperm.xlu0 %673, %v600
      %v675 = vpop.permute.xlu0 %674
      %678 = vset.pattern.permute.xlu0 0
      %679 = vperm.xlu0 %678, %v601
      %v680 = vpop.permute.xlu0 %679
      %v698 = vunpack.c.l.b16 %v570
      %v699 = vunpack.c.l.b16 %v571
      %v700 = vunpack.c.l.b16 %v572
      %v701 = vunpack.c.l.b16 %v573
      %v702 = vunpack.c.l.b16 %v574
      %v703 = vunpack.c.l.b16 %v575
      %v704 = vunpack.c.l.b16 %v576
      %v705 = vunpack.c.l.b16 %v577
      %v706 = vunpack.c.l.b16 %v578
      %v707 = vunpack.c.l.b16 %v579
      %v708 = vunpack.c.l.b16 %v580
      %v709 = vunpack.c.l.b16 %v581
      %v710 = vunpack.c.l.b16 %v582
      %v711 = vunpack.c.l.b16 %v583
      %v712 = vunpack.c.l.b16 %v584
      %v713 = vunpack.c.l.b16 %v585
      %v714 = vpack.c.b16 %v699, %v698
      %v715 = vpack.c.b16 %v701, %v700
      %v716 = vpack.c.b16 %v703, %v702
      %v717 = vpack.c.b16 %v705, %v704
      %v718 = vpack.c.b16 %v707, %v706
      %v719 = vpack.c.b16 %v709, %v708
      %v720 = vpack.c.b16 %v711, %v710
      %v721 = vpack.c.b16 %v713, %v712
      %v726 = vunpack.c.l.b16 %v438
      %v727 = vunpack.c.h.b16 %v438
      %v728 = vunpack.c.l.b16 %v439
      %v729 = vunpack.c.h.b16 %v439
      %v730 = vunpack.c.l.b16 %v440
      %v731 = vunpack.c.h.b16 %v440
      %v732 = vunpack.c.l.b16 %v441
      %v733 = vunpack.c.h.b16 %v441
      %v734 = vpack.c.b16 %v728, %v726
      %v735 = vpack.c.b16 %v729, %v727
      %v736 = vpack.c.b16 %v732, %v730
      %v737 = vpack.c.b16 %v733, %v731
      %vm742 = vcmask 261120
      %v744 = vsel %vm742, %v714, 0
      %v747 = vsel %vm742, %v715, 0
      %v750 = vsel %vm742, %v716, 0
      %v753 = vsel %vm742, %v717, 0
      %v756 = vsel %vm742, %v718, 0
      %v759 = vsel %vm742, %v719, 0
      %v762 = vsel %vm742, %v720, 0
      %v765 = vsel %vm742, %v721, 0
      %767 = vmatprep.subr.bf16.mxu0 %v735
      %768 = vmatpush1.bf16.msra.mxu0 %v734
      %769 = vmatprep.subr.bf16.mxu0 %v737
      %770 = vmatpush1.bf16.msra.mxu0 %v736
      %771 = vmatprep.subr.bf16.mxu0 0
      %772 = vmatpush1.bf16.msra.mxu0 0
      %773 = vmatprep.subr.bf16.mxu0 0
      %774 = vmatpush1.bf16.msra.mxu0 0
      %775 = vmatprep.subr.bf16.mxu0 0
      %776 = vmatpush1.bf16.msra.mxu0 0
      %777 = vmatprep.subr.bf16.mxu0 0
      %778 = vmatpush1.bf16.msra.mxu0 0
      %779 = vmatprep.subr.bf16.mxu0 0
      %780 = vmatpush1.bf16.msra.mxu0 0
      %781 = vmatprep.subr.bf16.mxu0 0
      %782 = vmatpush1.bf16.msra.mxu0 0
      %783 = vmatprep.subr.bf16.mxu0 0
      %784 = vmatpush1.bf16.msra.mxu0 0
      %785 = vmatprep.subr.bf16.mxu0 0
      %786 = vmatpush1.bf16.msra.mxu0 0
      %787 = vmatprep.subr.bf16.mxu0 0
      %788 = vmatpush1.bf16.msra.mxu0 0
      %789 = vmatprep.subr.bf16.mxu0 0
      %790 = vmatpush1.bf16.msra.mxu0 0
      %791 = vmatprep.subr.bf16.mxu0 0
      %792 = vmatpush1.bf16.msra.mxu0 0
      %793 = vmatprep.subr.bf16.mxu0 0
      %794 = vmatpush1.bf16.msra.mxu0 0
      %795 = vmatprep.subr.bf16.mxu0 0
      %796 = vmatpush1.bf16.msra.mxu0 0
      %797 = vmatprep.subr.bf16.mxu0 0
      %798 = vmatpush1.bf16.msra.mxu0 0
      %799 = vmatprep.mubr.bf16.mxu0 0
      %800 = vmatmul.mubr.bf16.gmra.mrb[0].mxu0 %v744
      %v801 = vpop.f32.mrb[0].mxu0
      %v802 = vadd.f32 %v605, %v801
      %v803 = vpop.f32.mrb[0].mxu0
      %v804 = vadd.f32 %v605, %v803
      %v805 = vpop.f32.mrb[0].mxu0
      %v806 = vadd.f32 %v610, %v805
      %v807 = vpop.f32.mrb[0].mxu0
      %v808 = vadd.f32 %v610, %v807
      %809 = vmatprep.mubr.bf16.mxu0 0
      %810 = vmatmul.mubr.bf16.gmra.mrb[0].mxu0 %v747
      %v811 = vpop.f32.mrb[0].mxu0
      %v812 = vadd.f32 %v615, %v811
      %v813 = vpop.f32.mrb[0].mxu0
      %v814 = vadd.f32 %v615, %v813
      %v815 = vpop.f32.mrb[0].mxu0
      %v816 = vadd.f32 %v620, %v815
      %v817 = vpop.f32.mrb[0].mxu0
      %v818 = vadd.f32 %v620, %v817
      %819 = vmatprep.mubr.bf16.mxu0 0
      %820 = vmatmul.mubr.bf16.gmra.mrb[0].mxu0 %v750
      %v821 = vpop.f32.mrb[0].mxu0
      %v822 = vadd.f32 %v625, %v821
      %v823 = vpop.f32.mrb[0].mxu0
      %v824 = vadd.f32 %v625, %v823
      %v825 = vpop.f32.mrb[0].mxu0
      %v826 = vadd.f32 %v630, %v825
      %v827 = vpop.f32.mrb[0].mxu0
      %v828 = vadd.f32 %v630, %v827
      %829 = vmatprep.mubr.bf16.mxu0 0
      %830 = vmatmul.mubr.bf16.gmra.mrb[0].mxu0 %v753
      %v831 = vpop.f32.mrb[0].mxu0
      %v832 = vadd.f32 %v635, %v831
      %v833 = vpop.f32.mrb[0].mxu0
      %v834 = vadd.f32 %v635, %v833
      %v835 = vpop.f32.mrb[0].mxu0
      %v836 = vadd.f32 %v640, %v835
      %v837 = vpop.f32.mrb[0].mxu0
      %v838 = vadd.f32 %v640, %v837
      %839 = vmatprep.mubr.bf16.mxu0 0
      %840 = vmatmul.mubr.bf16.gmra.mrb[0].mxu0 %v756
      %v841 = vpop.f32.mrb[0].mxu0
      %v842 = vadd.f32 %v645, %v841
      %v843 = vpop.f32.mrb[0].mxu0
      %v844 = vadd.f32 %v645, %v843
      %v845 = vpop.f32.mrb[0].mxu0
      %v846 = vadd.f32 %v650, %v845
      %v847 = vpop.f32.mrb[0].mxu0
      %v848 = vadd.f32 %v650, %v847
      %849 = vmatprep.mubr.bf16.mxu0 0
      %850 = vmatmul.mubr.bf16.gmra.mrb[0].mxu0 %v759
      %v851 = vpop.f32.mrb[0].mxu0
      %v852 = vadd.f32 %v655, %v851
      %v853 = vpop.f32.mrb[0].mxu0
      %v854 = vadd.f32 %v655, %v853
      %v855 = vpop.f32.mrb[0].mxu0
      %v856 = vadd.f32 %v660, %v855
      %v857 = vpop.f32.mrb[0].mxu0
      %v858 = vadd.f32 %v660, %v857
      %859 = vmatprep.mubr.bf16.mxu0 0
      %860 = vmatmul.mubr.bf16.gmra.mrb[0].mxu0 %v762
      %v861 = vpop.f32.mrb[0].mxu0
      %v862 = vadd.f32 %v665, %v861
      %v863 = vpop.f32.mrb[0].mxu0
      %v864 = vadd.f32 %v665, %v863
      %v865 = vpop.f32.mrb[0].mxu0
      %v866 = vadd.f32 %v670, %v865
      %v867 = vpop.f32.mrb[0].mxu0
      %v868 = vadd.f32 %v670, %v867
      %869 = vmatprep.mubr.bf16.mxu0 0
      %870 = vmatmul.mubr.bf16.gmra.mrb[0].mxu0 %v765
      %v871 = vpop.f32.mrb[0].mxu0
      %v872 = vadd.f32 %v675, %v871
      %v873 = vpop.f32.mrb[0].mxu0
      %v874 = vadd.f32 %v675, %v873
      %v875 = vpop.f32.mrb[0].mxu0
      %v876 = vadd.f32 %v680, %v875
      %v877 = vpop.f32.mrb[0].mxu0
      %v878 = vadd.f32 %v680, %v877
      %879 = vdwg.mxu0
      %v880 = vmul.f32 %v554, %v802
      %v881 = vmul.f32 %v555, %v804
      %v882 = vmul.f32 %v556, %v806
      %v883 = vmul.f32 %v557, %v808
      %v884 = vmul.f32 %v558, %v812
      %v885 = vmul.f32 %v559, %v814
      %v886 = vmul.f32 %v560, %v816
      %v887 = vmul.f32 %v561, %v818
      %v888 = vmul.f32 %v562, %v822
      %v889 = vmul.f32 %v563, %v824
      %v890 = vmul.f32 %v564, %v826
      %v891 = vmul.f32 %v565, %v828
      %v892 = vmul.f32 %v566, %v832
      %v893 = vmul.f32 %v567, %v834
      %v894 = vmul.f32 %v568, %v836
      %v895 = vmul.f32 %v569, %v838
      %v896 = vadd.f32 %v880, %v842
      %v897 = vadd.f32 %v881, %v844
      %v898 = vadd.f32 %v882, %v846
      %v899 = vadd.f32 %v883, %v848
      %v900 = vadd.f32 %v884, %v852
      %v901 = vadd.f32 %v885, %v854
      %v902 = vadd.f32 %v886, %v856
      %v903 = vadd.f32 %v887, %v858
      %v904 = vadd.f32 %v888, %v862
      %v905 = vadd.f32 %v889, %v864
      %v906 = vadd.f32 %v890, %v866
      %v907 = vadd.f32 %v891, %v868
      %v908 = vadd.f32 %v892, %v872
      %v909 = vadd.f32 %v893, %v874
      %v910 = vadd.f32 %v894, %v876
      %v911 = vadd.f32 %v895, %v878
      %v912 = vpack.c.bf16 %v898, %v896
      %v913 = vpack.c.bf16 %v899, %v897
      %v914 = vpack.c.bf16 %v902, %v900
      %v915 = vpack.c.bf16 %v903, %v901
      %v916 = vpack.c.bf16 %v906, %v904
      %v917 = vpack.c.bf16 %v907, %v905
      %v918 = vpack.c.bf16 %v910, %v908
      %v919 = vpack.c.bf16 %v911, %v909
      %v920 = vld [vmem:[%s6] sm:$0xf]
      %v921 = vld [vmem:[%s6 + $0x4] sm:$0xf]
      %v922 = vld [vmem:[%s6 + $0x8] sm:$0xf]
      %v923 = vld [vmem:[%s6 + $0xc] sm:$0xf]
      %v924 = vld [vmem:[%s6 + $0x10] sm:$0xf]
      %v925 = vld [vmem:[%s6 + $0x14] sm:$0xf]
      %v926 = vld [vmem:[%s6 + $0x18] sm:$0xf]
      %v927 = vld [vmem:[%s6 + $0x1c] sm:$0xf]
      %v928 = vld [vmem:[%s6 + $0x20] sm:$0xf]
      %v929 = vld [vmem:[%s6 + $0x24] sm:$0xf]
      %v930 = vld [vmem:[%s6 + $0x28] sm:$0xf]
      %v931 = vld [vmem:[%s6 + $0x2c] sm:$0xf]
      %v932 = vld [vmem:[%s6 + $0x30] sm:$0xf]
      %v933 = vld [vmem:[%s6 + $0x34] sm:$0xf]
      %v934 = vld [vmem:[%s6 + $0x38] sm:$0xf]
      %v935 = vld [vmem:[%s6 + $0x3c] sm:$0xf]
      %v936 = vld [vmem:[%s6 + $0x40] sm:$0xf]
      %v937 = vld [vmem:[%s6 + $0x44] sm:$0xf]
      %v938 = vld [vmem:[%s6 + $0x48] sm:$0xf]
      %v939 = vld [vmem:[%s6 + $0x4c] sm:$0xf]
      %v940 = vld [vmem:[%s6 + $0x50] sm:$0xf]
      %v941 = vld [vmem:[%s6 + $0x54] sm:$0xf]
      %v942 = vld [vmem:[%s6 + $0x58] sm:$0xf]
      %v943 = vld [vmem:[%s6 + $0x5c] sm:$0xf]
      %v944 = vld [vmem:[%s7] sm:$0xff]
      %v945 = vld [vmem:[%s7 + $0x8] sm:$0xff]
      %v946 = vld [vmem:[%s7 + $0x10] sm:$0xff]
      %v947 = vld [vmem:[%s7 + $0x18] sm:$0xff]
      %v948 = vld [vmem:[%s7 + $0x20] sm:$0xff]
      %v949 = vld [vmem:[%s7 + $0x28] sm:$0xff]
      %v950 = vld [vmem:[%s7 + $0x30] sm:$0xff]
      %v951 = vld [vmem:[%s7 + $0x38] sm:$0xff]
      %v952 = vld [vmem:[%s7 + $0x40] sm:$0xff]
      %v953 = vld [vmem:[%s7 + $0x48] sm:$0xff]
      %v954 = vld [vmem:[%s7 + $0x50] sm:$0xff]
      %v955 = vld [vmem:[%s7 + $0x58] sm:$0xff]
      %v956 = vld [vmem:[%s7 + $0x60] sm:$0xff]
      %v957 = vld [vmem:[%s7 + $0x68] sm:$0xff]
      %v958 = vld [vmem:[%s7 + $0x70] sm:$0xff]
      %v959 = vld [vmem:[%s7 + $0x78] sm:$0xff]
      %v960 = vld [vmem:[%s7 + $0x80] sm:$0xff]
      %v961 = vld [vmem:[%s7 + $0x88] sm:$0xff]
      %v962 = vld [vmem:[%s7 + $0x90] sm:$0xff]
      %v963 = vld [vmem:[%s7 + $0x98] sm:$0xff]
      %v964 = vld [vmem:[%s7 + $0xa0] sm:$0xff]
      %v965 = vld [vmem:[%s7 + $0xa8] sm:$0xff]
      %v966 = vld [vmem:[%s7 + $0xb0] sm:$0xff]
      %v967 = vld [vmem:[%s7 + $0xb8] sm:$0xff]
      %969 = vset.pattern.permute.xlu0 0
      %970 = vperm.xlu0 %969, %v944
      %v971 = vpop.permute.xlu0 %970
      %974 = vset.pattern.permute.xlu0 0
      %975 = vperm.xlu0 %974, %v945
      %v976 = vpop.permute.xlu0 %975
      %979 = vset.pattern.permute.xlu0 0
      %980 = vperm.xlu0 %979, %v946
      %v981 = vpop.permute.xlu0 %980
      %984 = vset.pattern.permute.xlu0 0
      %985 = vperm.xlu0 %984, %v947
      %v986 = vpop.permute.xlu0 %985
      %989 = vset.pattern.permute.xlu0 0
      %990 = vperm.xlu0 %989, %v948
      %v991 = vpop.permute.xlu0 %990
      %994 = vset.pattern.permute.xlu0 0
      %995 = vperm.xlu0 %994, %v949
      %v996 = vpop.permute.xlu0 %995
      %999 = vset.pattern.permute.xlu0 0
      %1000 = vperm.xlu0 %999, %v950
      %v1001 = vpop.permute.xlu0 %1000
      %1004 = vset.pattern.permute.xlu0 0
      %1005 = vperm.xlu0 %1004, %v951
      %v1006 = vpop.permute.xlu0 %1005
      %1009 = vset.pattern.permute.xlu0 0
      %1010 = vperm.xlu0 %1009, %v952
      %v1011 = vpop.permute.xlu0 %1010
      %1014 = vset.pattern.permute.xlu0 0
      %1015 = vperm.xlu0 %1014, %v953
      %v1016 = vpop.permute.xlu0 %1015
      %1019 = vset.pattern.permute.xlu0 0
      %1020 = vperm.xlu0 %1019, %v954
      %v1021 = vpop.permute.xlu0 %1020
      %1024 = vset.pattern.permute.xlu0 0
      %1025 = vperm.xlu0 %1024, %v955
      %v1026 = vpop.permute.xlu0 %1025
      %1029 = vset.pattern.permute.xlu0 0
      %1030 = vperm.xlu0 %1029, %v956
      %v1031 = vpop.permute.xlu0 %1030
      %1034 = vset.pattern.permute.xlu0 0
      %1035 = vperm.xlu0 %1034, %v957
      %v1036 = vpop.permute.xlu0 %1035
      %1039 = vset.pattern.permute.xlu0 0
      %1040 = vperm.xlu0 %1039, %v958
      %v1041 = vpop.permute.xlu0 %1040
      %1044 = vset.pattern.permute.xlu0 0
      %1045 = vperm.xlu0 %1044, %v959
      %v1046 = vpop.permute.xlu0 %1045
      %1049 = vset.pattern.permute.xlu0 0
      %1050 = vperm.xlu0 %1049, %v960
      %v1051 = vpop.permute.xlu0 %1050
      %1054 = vset.pattern.permute.xlu0 0
      %1055 = vperm.xlu0 %1054, %v961
      %v1056 = vpop.permute.xlu0 %1055
      %1059 = vset.pattern.permute.xlu0 0
      %1060 = vperm.xlu0 %1059, %v962
      %v1061 = vpop.permute.xlu0 %1060
      %1064 = vset.pattern.permute.xlu0 0
      %1065 = vperm.xlu0 %1064, %v963
      %v1066 = vpop.permute.xlu0 %1065
      %1069 = vset.pattern.permute.xlu0 0
      %1070 = vperm.xlu0 %1069, %v964
      %v1071 = vpop.permute.xlu0 %1070
      %1074 = vset.pattern.permute.xlu0 0
      %1075 = vperm.xlu0 %1074, %v965
      %v1076 = vpop.permute.xlu0 %1075
      %1079 = vset.pattern.permute.xlu0 0
      %1080 = vperm.xlu0 %1079, %v966
      %v1081 = vpop.permute.xlu0 %1080
      %1084 = vset.pattern.permute.xlu0 0
      %1085 = vperm.xlu0 %1084, %v967
      %v1086 = vpop.permute.xlu0 %1085
      %v1112 = vunpack.c.l.b16 %v920
      %v1113 = vunpack.c.l.b16 %v921
      %v1114 = vunpack.c.l.b16 %v922
      %v1115 = vunpack.c.l.b16 %v923
      %v1116 = vunpack.c.l.b16 %v924
      %v1117 = vunpack.c.l.b16 %v925
      %v1118 = vunpack.c.l.b16 %v926
      %v1119 = vunpack.c.l.b16 %v927
      %v1120 = vunpack.c.l.b16 %v928
      %v1121 = vunpack.c.l.b16 %v929
      %v1122 = vunpack.c.l.b16 %v930
      %v1123 = vunpack.c.l.b16 %v931
      %v1124 = vunpack.c.l.b16 %v932
      %v1125 = vunpack.c.l.b16 %v933
      %v1126 = vunpack.c.l.b16 %v934
      %v1127 = vunpack.c.l.b16 %v935
      %v1128 = vunpack.c.l.b16 %v936
      %v1129 = vunpack.c.l.b16 %v937
      %v1130 = vunpack.c.l.b16 %v938
      %v1131 = vunpack.c.l.b16 %v939
      %v1132 = vunpack.c.l.b16 %v940
      %v1133 = vunpack.c.l.b16 %v941
      %v1134 = vunpack.c.l.b16 %v942
      %v1135 = vunpack.c.l.b16 %v943
      %v1136 = vpack.c.b16 %v1113, %v1112
      %v1137 = vpack.c.b16 %v1115, %v1114
      %v1138 = vpack.c.b16 %v1117, %v1116
      %v1139 = vpack.c.b16 %v1119, %v1118
      %v1140 = vpack.c.b16 %v1121, %v1120
      %v1141 = vpack.c.b16 %v1123, %v1122
      %v1142 = vpack.c.b16 %v1125, %v1124
      %v1143 = vpack.c.b16 %v1127, %v1126
      %v1144 = vpack.c.b16 %v1129, %v1128
      %v1145 = vpack.c.b16 %v1131, %v1130
      %v1146 = vpack.c.b16 %v1133, %v1132
      %v1147 = vpack.c.b16 %v1135, %v1134
      %vm1148 = vcmask 523264
      %v1150 = vsel %vm1148, %v1136, 0
      %v1153 = vsel %vm1148, %v1137, 0
      %v1156 = vsel %vm1148, %v1138, 0
      %v1159 = vsel %vm1148, %v1139, 0
      %v1162 = vsel %vm1148, %v1140, 0
      %v1165 = vsel %vm1148, %v1141, 0
      %v1168 = vsel %vm1148, %v1142, 0
      %v1171 = vsel %vm1148, %v1143, 0
      %v1174 = vsel %vm1148, %v1144, 0
      %v1177 = vsel %vm1148, %v1145, 0
      %v1180 = vsel %vm1148, %v1146, 0
      %v1183 = vsel %vm1148, %v1147, 0
      %1185 = vmatprep.subr.bf16.mxu0 %v913
      %1186 = vmatpush1.bf16.msra.mxu0 %v912
      %1187 = vmatprep.subr.bf16.mxu0 %v915
      %1188 = vmatpush1.bf16.msra.mxu0 %v914
      %1189 = vmatprep.subr.bf16.mxu0 %v917
      %1190 = vmatpush1.bf16.msra.mxu0 %v916
      %1191 = vmatprep.subr.bf16.mxu0 %v919
      %1192 = vmatpush1.bf16.msra.mxu0 %v918
      %1193 = vmatprep.subr.bf16.mxu0 0
      %1194 = vmatpush1.bf16.msra.mxu0 0
      %1195 = vmatprep.subr.bf16.mxu0 0
      %1196 = vmatpush1.bf16.msra.mxu0 0
      %1197 = vmatprep.subr.bf16.mxu0 0
      %1198 = vmatpush1.bf16.msra.mxu0 0
      %1199 = vmatprep.subr.bf16.mxu0 0
      %1200 = vmatpush1.bf16.msra.mxu0 0
      %1201 = vmatprep.subr.bf16.mxu0 0
      %1202 = vmatpush1.bf16.msra.mxu0 0
      %1203 = vmatprep.subr.bf16.mxu0 0
      %1204 = vmatpush1.bf16.msra.mxu0 0
      %1205 = vmatprep.subr.bf16.mxu0 0
      %1206 = vmatpush1.bf16.msra.mxu0 0
      %1207 = vmatprep.subr.bf16.mxu0 0
      %1208 = vmatpush1.bf16.msra.mxu0 0
      %1209 = vmatprep.subr.bf16.mxu0 0
      %1210 = vmatpush1.bf16.msra.mxu0 0
      %1211 = vmatprep.subr.bf16.mxu0 0
      %1212 = vmatpush1.bf16.msra.mxu0 0
      %1213 = vmatprep.subr.bf16.mxu0 0
      %1214 = vmatpush1.bf16.msra.mxu0 0
      %1215 = vmatprep.subr.bf16.mxu0 0
      %1216 = vmatpush1.bf16.msra.mxu0 0
      %1217 = vmatprep.mubr.bf16.mxu0 0
      %1218 = vmatmul.mubr.bf16.gmra.mrb[0].mxu0 %v1150
      %v1219 = vpop.f32.mrb[0].mxu0
      %v1220 = vadd.f32 %v971, %v1219
      %v1221 = vpop.f32.mrb[0].mxu0
      %v1222 = vadd.f32 %v971, %v1221
      %v1223 = vpop.f32.mrb[0].mxu0
      %v1224 = vadd.f32 %v976, %v1223
      %v1225 = vpop.f32.mrb[0].mxu0
      %v1226 = vadd.f32 %v976, %v1225
      %1227 = vmatprep.mubr.bf16.mxu0 0
      %1228 = vmatmul.mubr.bf16.gmra.mrb[0].mxu0 %v1153
      %v1229 = vpop.f32.mrb[0].mxu0
      %v1230 = vadd.f32 %v981, %v1229
      %v1231 = vpop.f32.mrb[0].mxu0
      %v1232 = vadd.f32 %v981, %v1231
      %v1233 = vpop.f32.mrb[0].mxu0
      %v1234 = vadd.f32 %v986, %v1233
      %v1235 = vpop.f32.mrb[0].mxu0
      %v1236 = vadd.f32 %v986, %v1235
      %1237 = vmatprep.mubr.bf16.mxu0 0
      %1238 = vmatmul.mubr.bf16.gmra.mrb[0].mxu0 %v1156
      %v1239 = vpop.f32.mrb[0].mxu0
      %v1240 = vadd.f32 %v991, %v1239
      %v1241 = vpop.f32.mrb[0].mxu0
      %v1242 = vadd.f32 %v991, %v1241
      %v1243 = vpop.f32.mrb[0].mxu0
      %v1244 = vadd.f32 %v996, %v1243
      %v1245 = vpop.f32.mrb[0].mxu0
      %v1246 = vadd.f32 %v996, %v1245
      %1247 = vmatprep.mubr.bf16.mxu0 0
      %1248 = vmatmul.mubr.bf16.gmra.mrb[0].mxu0 %v1159
      %v1249 = vpop.f32.mrb[0].mxu0
      %v1250 = vadd.f32 %v1001, %v1249
      %v1251 = vpop.f32.mrb[0].mxu0
      %v1252 = vadd.f32 %v1001, %v1251
      %v1253 = vpop.f32.mrb[0].mxu0
      %v1254 = vadd.f32 %v1006, %v1253
      %v1255 = vpop.f32.mrb[0].mxu0
      %v1256 = vadd.f32 %v1006, %v1255
      %1257 = vmatprep.mubr.bf16.mxu0 0
      %1258 = vmatmul.mubr.bf16.gmra.mrb[0].mxu0 %v1162
      %v1259 = vpop.f32.mrb[0].mxu0
      %v1260 = vadd.f32 %v1011, %v1259
      %v1261 = vpop.f32.mrb[0].mxu0
      %v1262 = vadd.f32 %v1011, %v1261
      %v1263 = vpop.f32.mrb[0].mxu0
      %v1264 = vadd.f32 %v1016, %v1263
      %v1265 = vpop.f32.mrb[0].mxu0
      %v1266 = vadd.f32 %v1016, %v1265
      %1267 = vmatprep.mubr.bf16.mxu0 0
      %1268 = vmatmul.mubr.bf16.gmra.mrb[0].mxu0 %v1165
      %v1269 = vpop.f32.mrb[0].mxu0
      %v1270 = vadd.f32 %v1021, %v1269
      %v1271 = vpop.f32.mrb[0].mxu0
      %v1272 = vadd.f32 %v1021, %v1271
      %v1273 = vpop.f32.mrb[0].mxu0
      %v1274 = vadd.f32 %v1026, %v1273
      %v1275 = vpop.f32.mrb[0].mxu0
      %v1276 = vadd.f32 %v1026, %v1275
      %1277 = vmatprep.mubr.bf16.mxu0 0
      %1278 = vmatmul.mubr.bf16.gmra.mrb[0].mxu0 %v1168
      %v1279 = vpop.f32.mrb[0].mxu0
      %v1280 = vadd.f32 %v1031, %v1279
      %v1281 = vpop.f32.mrb[0].mxu0
      %v1282 = vadd.f32 %v1031, %v1281
      %v1283 = vpop.f32.mrb[0].mxu0
      %v1284 = vadd.f32 %v1036, %v1283
      %v1285 = vpop.f32.mrb[0].mxu0
      %v1286 = vadd.f32 %v1036, %v1285
      %1287 = vmatprep.mubr.bf16.mxu0 0
      %1288 = vmatmul.mubr.bf16.gmra.mrb[0].mxu0 %v1171
      %v1289 = vpop.f32.mrb[0].mxu0
      %v1290 = vadd.f32 %v1041, %v1289
      %v1291 = vpop.f32.mrb[0].mxu0
      %v1292 = vadd.f32 %v1041, %v1291
      %v1293 = vpop.f32.mrb[0].mxu0
      %v1294 = vadd.f32 %v1046, %v1293
      %v1295 = vpop.f32.mrb[0].mxu0
      %v1296 = vadd.f32 %v1046, %v1295
      %1297 = vmatprep.mubr.bf16.mxu0 0
      %1298 = vmatmul.mubr.bf16.gmra.mrb[0].mxu0 %v1174
      %v1299 = vpop.f32.mrb[0].mxu0
      %v1300 = vadd.f32 %v1051, %v1299
      %v1301 = vpop.f32.mrb[0].mxu0
      %v1302 = vadd.f32 %v1051, %v1301
      %v1303 = vpop.f32.mrb[0].mxu0
      %v1304 = vadd.f32 %v1056, %v1303
      %v1305 = vpop.f32.mrb[0].mxu0
      %v1306 = vadd.f32 %v1056, %v1305
      %1307 = vmatprep.mubr.bf16.mxu0 0
      %1308 = vmatmul.mubr.bf16.gmra.mrb[0].mxu0 %v1177
      %v1309 = vpop.f32.mrb[0].mxu0
      %v1310 = vadd.f32 %v1061, %v1309
      %v1311 = vpop.f32.mrb[0].mxu0
      %v1312 = vadd.f32 %v1061, %v1311
      %v1313 = vpop.f32.mrb[0].mxu0
      %v1314 = vadd.f32 %v1066, %v1313
      %v1315 = vpop.f32.mrb[0].mxu0
      %v1316 = vadd.f32 %v1066, %v1315
      %1317 = vmatprep.mubr.bf16.mxu0 0
      %1318 = vmatmul.mubr.bf16.gmra.mrb[0].mxu0 %v1180
      %v1319 = vpop.f32.mrb[0].mxu0
      %v1320 = vadd.f32 %v1071, %v1319
      %v1321 = vpop.f32.mrb[0].mxu0
      %v1322 = vadd.f32 %v1071, %v1321
      %v1323 = vpop.f32.mrb[0].mxu0
      %v1324 = vadd.f32 %v1076, %v1323
      %v1325 = vpop.f32.mrb[0].mxu0
      %v1326 = vadd.f32 %v1076, %v1325
      %1327 = vmatprep.mubr.bf16.mxu0 0
      %1328 = vmatmul.mubr.bf16.gmra.mrb[0].mxu0 %v1183
      %v1329 = vpop.f32.mrb[0].mxu0
      %v1330 = vadd.f32 %v1081, %v1329
      %v1331 = vpop.f32.mrb[0].mxu0
      %v1332 = vadd.f32 %v1081, %v1331
      %v1333 = vpop.f32.mrb[0].mxu0
      %v1334 = vadd.f32 %v1086, %v1333
      %v1335 = vpop.f32.mrb[0].mxu0
      %v1336 = vadd.f32 %v1086, %v1335
      %1337 = vdwg.mxu0
      %v1338 = vpack.c.bf16 %v1224, %v1220
      %v1339 = vpack.c.bf16 %v1226, %v1222
      %v1340 = vpack.c.bf16 %v1234, %v1230
      %v1341 = vpack.c.bf16 %v1236, %v1232
      %v1342 = vpack.c.bf16 %v1244, %v1240
      %v1343 = vpack.c.bf16 %v1246, %v1242
      %v1344 = vpack.c.bf16 %v1254, %v1250
      %v1345 = vpack.c.bf16 %v1256, %v1252
      %v1346 = vpack.c.bf16 %v1264, %v1260
      %v1347 = vpack.c.bf16 %v1266, %v1262
      %v1348 = vpack.c.bf16 %v1274, %v1270
      %v1349 = vpack.c.bf16 %v1276, %v1272
      %v1350 = vpack.c.bf16 %v1284, %v1280
      %v1351 = vpack.c.bf16 %v1286, %v1282
      %v1352 = vpack.c.bf16 %v1294, %v1290
      %v1353 = vpack.c.bf16 %v1296, %v1292
      %v1354 = vpack.c.bf16 %v1304, %v1300
      %v1355 = vpack.c.bf16 %v1306, %v1302
      %v1356 = vpack.c.bf16 %v1314, %v1310
      %v1357 = vpack.c.bf16 %v1316, %v1312
      %v1358 = vpack.c.bf16 %v1324, %v1320
      %v1359 = vpack.c.bf16 %v1326, %v1322
      %v1360 = vpack.c.bf16 %v1334, %v1330
      %v1361 = vpack.c.bf16 %v1336, %v1332
      %v1386 = vunpack.c.l.b16 %v1338
      %v1387 = vunpack.c.l.b16 %v1339
      %v1388 = vunpack.c.h.b16 %v1338
      %v1389 = vunpack.c.h.b16 %v1339
      %v1390 = vunpack.c.l.b16 %v1340
      %v1391 = vunpack.c.l.b16 %v1341
      %v1392 = vunpack.c.h.b16 %v1340
      %v1393 = vunpack.c.h.b16 %v1341
      %v1394 = vunpack.c.l.b16 %v1342
      %v1395 = vunpack.c.l.b16 %v1343
      %v1396 = vunpack.c.h.b16 %v1342
      %v1397 = vunpack.c.h.b16 %v1343
      %v1398 = vunpack.c.l.b16 %v1344
      %v1399 = vunpack.c.l.b16 %v1345
      %v1400 = vunpack.c.h.b16 %v1344
      %v1401 = vunpack.c.h.b16 %v1345
      %v1402 = vunpack.c.l.b16 %v1346
      %v1403 = vunpack.c.l.b16 %v1347
      %v1404 = vunpack.c.h.b16 %v1346
      %v1405 = vunpack.c.h.b16 %v1347
      %v1406 = vunpack.c.l.b16 %v1348
      %v1407 = vunpack.c.l.b16 %v1349
      %v1408 = vunpack.c.h.b16 %v1348
      %v1409 = vunpack.c.h.b16 %v1349
      %v1410 = vunpack.c.l.b16 %v1350
      %v1411 = vunpack.c.l.b16 %v1351
      %v1412 = vunpack.c.h.b16 %v1350
      %v1413 = vunpack.c.h.b16 %v1351
      %v1414 = vunpack.c.l.b16 %v1352
      %v1415 = vunpack.c.l.b16 %v1353
      %v1416 = vunpack.c.h.b16 %v1352
      %v1417 = vunpack.c.h.b16 %v1353
      %v1418 = vunpack.c.l.b16 %v1354
      %v1419 = vunpack.c.l.b16 %v1355
      %v1420 = vunpack.c.h.b16 %v1354
      %v1421 = vunpack.c.h.b16 %v1355
      %v1422 = vunpack.c.l.b16 %v1356
      %v1423 = vunpack.c.l.b16 %v1357
      %v1424 = vunpack.c.h.b16 %v1356
      %v1425 = vunpack.c.h.b16 %v1357
      %v1426 = vunpack.c.l.b16 %v1358
      %v1427 = vunpack.c.l.b16 %v1359
      %v1428 = vunpack.c.h.b16 %v1358
      %v1429 = vunpack.c.h.b16 %v1359
      %v1430 = vunpack.c.l.b16 %v1360
      %v1431 = vunpack.c.l.b16 %v1361
      %v1432 = vunpack.c.h.b16 %v1360
      %v1433 = vunpack.c.h.b16 %v1361
      %v1434 = vpack.c.b16 %v1387, %v1386
      %v1435 = vpack.c.b16 %v1389, %v1388
      %v1436 = vpack.c.b16 %v1391, %v1390
      %v1437 = vpack.c.b16 %v1393, %v1392
      %v1438 = vpack.c.b16 %v1395, %v1394
      %v1439 = vpack.c.b16 %v1397, %v1396
      %v1440 = vpack.c.b16 %v1399, %v1398
      %v1441 = vpack.c.b16 %v1401, %v1400
      %v1442 = vpack.c.b16 %v1403, %v1402
      %v1443 = vpack.c.b16 %v1405, %v1404
      %v1444 = vpack.c.b16 %v1407, %v1406
      %v1445 = vpack.c.b16 %v1409, %v1408
      %v1446 = vpack.c.b16 %v1411, %v1410
      %v1447 = vpack.c.b16 %v1413, %v1412
      %v1448 = vpack.c.b16 %v1415, %v1414
      %v1449 = vpack.c.b16 %v1417, %v1416
      %v1450 = vpack.c.b16 %v1419, %v1418
      %v1451 = vpack.c.b16 %v1421, %v1420
      %v1452 = vpack.c.b16 %v1423, %v1422
      %v1453 = vpack.c.b16 %v1425, %v1424
      %v1454 = vpack.c.b16 %v1427, %v1426
      %v1455 = vpack.c.b16 %v1429, %v1428
      %v1456 = vpack.c.b16 %v1431, %v1430
      %v1457 = vpack.c.b16 %v1433, %v1432
      %1482 = vst [vmem:[%s419] sm:$0xff] %v1434
      %1483 = vst [vmem:[%s419 + $0x8] sm:$0xff] %v1435
      %1484 = vst [vmem:[%s419 + $0x10] sm:$0xff] %v1436
      %1485 = vst [vmem:[%s419 + $0x18] sm:$0xff] %v1437
      %1486 = vst [vmem:[%s419 + $0x20] sm:$0xff] %v1438
      %1487 = vst [vmem:[%s419 + $0x28] sm:$0xff] %v1439
      %1488 = vst [vmem:[%s419 + $0x30] sm:$0xff] %v1440
      %1489 = vst [vmem:[%s419 + $0x38] sm:$0xff] %v1441
      %1490 = vst [vmem:[%s419 + $0x40] sm:$0xff] %v1442
      %1491 = vst [vmem:[%s419 + $0x48] sm:$0xff] %v1443
      %1492 = vst [vmem:[%s419 + $0x50] sm:$0xff] %v1444
      %1493 = vst [vmem:[%s419 + $0x58] sm:$0xff] %v1445
      %1494 = vst [vmem:[%s419 + $0x60] sm:$0xff] %v1446
      %1495 = vst [vmem:[%s419 + $0x68] sm:$0xff] %v1447
      %1496 = vst [vmem:[%s419 + $0x70] sm:$0xff] %v1448
      %1497 = vst [vmem:[%s419 + $0x78] sm:$0xff] %v1449
      %1498 = vst [vmem:[%s419 + $0x80] sm:$0xff] %v1450
      %1499 = vst [vmem:[%s419 + $0x88] sm:$0xff] %v1451
      %1500 = vst [vmem:[%s419 + $0x90] sm:$0xff] %v1452
      %1501 = vst [vmem:[%s419 + $0x98] sm:$0xff] %v1453
      %1502 = vst [vmem:[%s419 + $0xa0] sm:$0xff] %v1454
      %1503 = vst [vmem:[%s419 + $0xa8] sm:$0xff] %v1455
      %1504 = vst [vmem:[%s419 + $0xb0] sm:$0xff] %v1456
      %1505 = vst [vmem:[%s419 + $0xb8] sm:$0xff] %v1457
      %s1506 = smul.u32 2, %s24
      %p1507 = scmp.lt.s32.totalorder %s23, 1
      %s1508 = scalar_select %p1507, %s23, 1
      %p1509 = scmp.lt.s32.totalorder %s1506, 1
      %s1510 = scalar_select %p1509, %s1506, 1
      %s1511 = smul.addr %s1508, 48
      %s1512 = sadd.s32 %s1510, %s1511
      %s1513 = smul.addr %s1512, 4
      %s1514 = scalar_lea.vmem %s8, %s1513
      // Predicated region
      $region53: #{decoder_attn_block.4} parent=51 // pred_check
        %p1515 = pneg %p243
      $region54: #{decoder_attn_block.4} parent=51 // pred_check_branch
        %1517 = sbr.rel (%p1515) target = $region56
      $region55: #{decoder_attn_block.4} parent=51 // pred_region
        %s1518 = smul.u32 2, %s24
      $region56: #{decoder_attn_block.4} parent=51 // pred_fallthru
        _
    $region52: #{decoder_attn_block.4} parent=5 // pred_fallthru
      _
    %p1519 = scmp.le.s32.totalorder 2, %s14
    // Predicated region
    $region57: #{decoder_attn_block.4} parent=5 // pred_check
      %p1520 = pneg %p1519
    $region58: #{decoder_attn_block.4} parent=5 // pred_check_branch
      %1522 = sbr.rel (%p1520) target = $region60
    $region59: #{decoder_attn_block.4} parent=5 // pred_region
      %s1523 = ssub.s32 %s14, 2
      // Predicated region
      $region61: #{decoder_attn_block.4} parent=59 // pred_check
        %p1524 = pneg %p249
      $region62: #{decoder_attn_block.4} parent=59 // pred_check_branch
        %1526 = sbr.rel (%p1524) target = $region64
      $region63: #{decoder_attn_block.4} parent=59 // pred_region
        %s1527 = smul.u32 2, %s26
        %p1528 = scmp.lt.s32.totalorder %s25, 1
        %s1529 = scalar_select %p1528, %s25, 1
        %p1530 = scmp.lt.s32.totalorder %s1527, 1
        %s1531 = scalar_select %p1530, %s1527, 1
        %s1532 = smul.addr %s1529, 48
        %s1533 = sadd.s32 %s1531, %s1532
        %s1534 = smul.addr %s1533, 4
        %s1535 = scalar_lea.vmem %s8, %s1534
      $region64: #{decoder_attn_block.4} parent=59 // pred_fallthru
        _
    $region60: #{decoder_attn_block.4} parent=5 // pred_fallthru
      _
  $region6: #{decoder_attn_block.4} parent=0 // loop_footer
    %s18 = sadd.s32 1, %s14
  $region7: #{decoder_attn_block.4} parent=0 // loop_footer_branch
    %13 = sbr.rel target = $region3
  $region8: #{decoder_attn_block.4} parent=0 // loop_exit
    _

// kernel: decoder_attn_block.5
$region0: #{decoder_attn_block.5}
  #allocation0 [shape = 'u32[]', space=smem, size = 0x4, offset = 0x4, fixed_abs, tag = 'smem constant byte address 0x4 - core index']
  #allocation1 [shape = 'u32[144,128]{1,0:T(1,128)}', space=vmem, size = 0x12000, scoped, tag = 'internal scratch']
  %s0 = inlined_call_operand.vmem [shape: bf16[2,192,256], index: 0, kind: input, shape index: {}, may-alias: {0,1,2}]
  %s1 = inlined_call_operand.vmem [shape: bf16[2,192,256], index: 1, kind: input, shape index: {}, may-alias: {0,1,2}]
  %s2 = inlined_call_operand.vmem [shape: bf16[2,192,256], index: 2, kind: input, shape index: {}, may-alias: {0,1,2}]
  %s3 = inlined_call_operand.vmem [shape: f32[2,64,256], index: 3, kind: input, shape index: {}]
  %s4 = inlined_call_operand.vmem [shape: bf16[64,64], index: 4, kind: input, shape index: {}]
  %s5 = inlined_call_operand.vmem [shape: f32[64,1], index: 5, kind: input, shape index: {}]
  %s6 = inlined_call_operand.vmem [shape: f32[2,64,256], index: 6, kind: output, shape index: {}]
  %s7 = sld [smem:[#allocation0]]
  $region57: #{decoder_attn_block.5} parent=0
    _
  %s9 = ssub.s32 1, %s7
  %s10 = scalar_select 0, %s9, %s7
  loop: start=0, step=1, limit=4
  $region2: #{decoder_attn_block.5} parent=0 // loop_pre_header
    _
  $region3: #{decoder_attn_block.5} parent=0 // loop_header
    %s12 = sphi 0, %s16
    %p13 = scmp.ge.s32.totalorder %s12, 4
    %s19 = sphi 0, %s31
    %s20 = sphi 0, %s27
    %s21 = sphi 0, %s19
    %s22 = sphi 0, %s20
    %s23 = sphi 0, %s21
    %s24 = sphi 0, %s22
    %s36 = sphi 0, %s38
    %s39 = sphi 0, %s36
    %s40 = sphi 0, %s39
    %s56 = sphi 0, %s40
    %s62 = sphi 0, %s64
    %s65 = sphi 0, %s62
    %s66 = sphi 0, %s65
    %s82 = sphi 0, %s66
    %s88 = sphi 0, %s90
    %s91 = sphi 0, %s88
    %s92 = sphi 0, %s91
    %s108 = sphi 0, %s92
    %s116 = sphi 0, %s118
    %s119 = sphi 0, %s116
    %s120 = sphi 0, %s119
    %s136 = sphi 0, %s120
    %s140 = sphi 0, %s140
    %s142 = sphi 0, %s140
    %s143 = sphi 0, %s142
    %s157 = sphi 0, %s143
    %s161 = sphi 0, %s161
    %s163 = sphi 0, %s161
    %s164 = sphi 0, %s163
    %s178 = sphi 0, %s164
    %s186 = sphi 0, %s188
    %s189 = sphi 0, %s186
    %s190 = sphi 0, %s189
    %s206 = sphi 0, %s190
  $region4: #{decoder_attn_block.5} parent=0 // loop_header_branch
    %15 = sbr.rel (%p13) target = $region8
  $region5: #{decoder_attn_block.5} parent=0 // loop_body
    %s17 = ssub.s32 %s12, 1
    %s18 = ssub.s32 %s12, 2
    %s25 = sadd.s32 1, %s20
    %p26 = scmp.ge.s32.totalorder %s25, 1
    %s27 = scalar_select %p26, 0, %s25
    %s28 = sadd.s32 1, %s19
    %s29 = scalar_select %p26, %s28, %s19
    %p30 = scmp.ge.s32.totalorder %s29, 2
    %s31 = scalar_select %p30, 0, %s29
    %s32 = ssub.s32 %s19, %s31
    %s33 = ssub.s32 %s20, %s27
    %s34 = sor.u32 %s32, %s33
    %p35 = scmp.eq.s32.totalorder %s34, 0
    %s37 = sadd.s32 %s36, 1
    %s38 = scalar_select %p35, %s36, %s37
    %p41 = pneg %p35
    %p42 = scmp.eq.s32.totalorder %s12, 1
    %p43 = por %p41, %p42
    %p44 = scmp.ne.s32.totalorder %s36, %s39
    %p45 = scmp.eq.s32.totalorder %s12, 0
    %p46 = por %p44, %p45
    %p47 = scmp.ne.s32.totalorder %s36, %s39
    %p48 = scmp.eq.s32.totalorder %s17, 1
    %p49 = por %p47, %p48
    %p50 = scmp.ne.s32.totalorder %s39, %s40
    %p51 = scmp.eq.s32.totalorder %s17, 0
    %p52 = por %p50, %p51
    %p53 = scmp.ne.s32.totalorder %s39, %s40
    %p54 = scmp.eq.s32.totalorder %s18, 1
    %p55 = por %p53, %p54
    %p57 = scmp.ne.s32.totalorder %s40, %s56
    %p58 = scmp.eq.s32.totalorder %s18, 0
    %p59 = por %p57, %p58
    %s60 = ssub.s32 %s19, %s31
    %p61 = scmp.eq.s32.totalorder %s60, 0
    %s63 = sadd.s32 %s62, 1
    %s64 = scalar_select %p61, %s62, %s63
    %p67 = pneg %p61
    %p68 = scmp.eq.s32.totalorder %s12, 1
    %p69 = por %p67, %p68
    %p70 = scmp.ne.s32.totalorder %s62, %s65
    %p71 = scmp.eq.s32.totalorder %s12, 0
    %p72 = por %p70, %p71
    %p73 = scmp.ne.s32.totalorder %s62, %s65
    %p74 = scmp.eq.s32.totalorder %s17, 1
    %p75 = por %p73, %p74
    %p76 = scmp.ne.s32.totalorder %s65, %s66
    %p77 = scmp.eq.s32.totalorder %s17, 0
    %p78 = por %p76, %p77
    %p79 = scmp.ne.s32.totalorder %s65, %s66
    %p80 = scmp.eq.s32.totalorder %s18, 1
    %p81 = por %p79, %p80
    %p83 = scmp.ne.s32.totalorder %s66, %s82
    %p84 = scmp.eq.s32.totalorder %s18, 0
    %p85 = por %p83, %p84
    %s86 = ssub.s32 %s19, %s31
    %p87 = scmp.eq.s32.totalorder %s86, 0
    %s89 = sadd.s32 %s88, 1
    %s90 = scalar_select %p87, %s88, %s89
    %p93 = pneg %p87
    %p94 = scmp.eq.s32.totalorder %s12, 1
    %p95 = por %p93, %p94
    %p96 = scmp.ne.s32.totalorder %s88, %s91
    %p97 = scmp.eq.s32.totalorder %s12, 0
    %p98 = por %p96, %p97
    %p99 = scmp.ne.s32.totalorder %s88, %s91
    %p100 = scmp.eq.s32.totalorder %s17, 1
    %p101 = por %p99, %p100
    %p102 = scmp.ne.s32.totalorder %s91, %s92
    %p103 = scmp.eq.s32.totalorder %s17, 0
    %p104 = por %p102, %p103
    %p105 = scmp.ne.s32.totalorder %s91, %s92
    %p106 = scmp.eq.s32.totalorder %s18, 1
    %p107 = por %p105, %p106
    %p109 = scmp.ne.s32.totalorder %s92, %s108
    %p110 = scmp.eq.s32.totalorder %s18, 0
    %p111 = por %p109, %p110
    %s112 = ssub.s32 %s19, %s31
    %s113 = ssub.s32 %s20, %s27
    %s114 = sor.u32 %s112, %s113
    %p115 = scmp.eq.s32.totalorder %s114, 0
    %s117 = sadd.s32 %s116, 1
    %s118 = scalar_select %p115, %s116, %s117
    %p121 = pneg %p115
    %p122 = scmp.eq.s32.totalorder %s12, 1
    %p123 = por %p121, %p122
    %p124 = scmp.ne.s32.totalorder %s116, %s119
    %p125 = scmp.eq.s32.totalorder %s12, 0
    %p126 = por %p124, %p125
    %p127 = scmp.ne.s32.totalorder %s116, %s119
    %p128 = scmp.eq.s32.totalorder %s17, 1
    %p129 = por %p127, %p128
    %p130 = scmp.ne.s32.totalorder %s119, %s120
    %p131 = scmp.eq.s32.totalorder %s17, 0
    %p132 = por %p130, %p131
    %p133 = scmp.ne.s32.totalorder %s119, %s120
    %p134 = scmp.eq.s32.totalorder %s18, 1
    %p135 = por %p133, %p134
    %p137 = scmp.ne.s32.totalorder %s120, %s136
    %p138 = scmp.eq.s32.totalorder %s18, 0
    %p139 = por %p137, %p138
    %s141 = sadd.s32 %s140, 1
    %p144 = scmp.eq.s32.totalorder %s12, 1
    %p145 = scmp.ne.s32.totalorder %s140, %s142
    %p146 = scmp.eq.s32.totalorder %s12, 0
    %p147 = por %p145, %p146
    %p148 = scmp.ne.s32.totalorder %s140, %s142
    %p149 = scmp.eq.s32.totalorder %s17, 1
    %p150 = por %p148, %p149
    %p151 = scmp.ne.s32.totalorder %s142, %s143
    %p152 = scmp.eq.s32.totalorder %s17, 0
    %p153 = por %p151, %p152
    %p154 = scmp.ne.s32.totalorder %s142, %s143
    %p155 = scmp.eq.s32.totalorder %s18, 1
    %p156 = por %p154, %p155
    %p158 = scmp.ne.s32.totalorder %s143, %s157
    %p159 = scmp.eq.s32.totalorder %s18, 0
    %p160 = por %p158, %p159
    %s162 = sadd.s32 %s161, 1
    %p165 = scmp.eq.s32.totalorder %s12, 1
    %p166 = scmp.ne.s32.totalorder %s161, %s163
    %p167 = scmp.eq.s32.totalorder %s12, 0
    %p168 = por %p166, %p167
    %p169 = scmp.ne.s32.totalorder %s161, %s163
    %p170 = scmp.eq.s32.totalorder %s17, 1
    %p171 = por %p169, %p170
    %p172 = scmp.ne.s32.totalorder %s163, %s164
    %p173 = scmp.eq.s32.totalorder %s17, 0
    %p174 = por %p172, %p173
    %p175 = scmp.ne.s32.totalorder %s163, %s164
    %p176 = scmp.eq.s32.totalorder %s18, 1
    %p177 = por %p175, %p176
    %p179 = scmp.ne.s32.totalorder %s164, %s178
    %p180 = scmp.eq.s32.totalorder %s18, 0
    %p181 = por %p179, %p180
    %s182 = ssub.s32 %s19, %s31
    %s183 = ssub.s32 %s20, %s27
    %s184 = sor.u32 %s182, %s183
    %p185 = scmp.eq.s32.totalorder %s184, 0
    %s187 = sadd.s32 %s186, 1
    %s188 = scalar_select %p185, %s186, %s187
    %p191 = pneg %p185
    %p192 = scmp.eq.s32.totalorder %s12, 1
    %p193 = por %p191, %p192
    %p194 = scmp.ne.s32.totalorder %s186, %s189
    %p195 = scmp.eq.s32.totalorder %s12, 0
    %p196 = por %p194, %p195
    %p197 = scmp.ne.s32.totalorder %s186, %s189
    %p198 = scmp.eq.s32.totalorder %s17, 1
    %p199 = por %p197, %p198
    %p200 = scmp.ne.s32.totalorder %s189, %s190
    %p201 = scmp.eq.s32.totalorder %s17, 0
    %p202 = por %p200, %p201
    %p203 = scmp.ne.s32.totalorder %s189, %s190
    %p204 = scmp.eq.s32.totalorder %s18, 1
    %p205 = por %p203, %p204
    %p207 = scmp.ne.s32.totalorder %s190, %s206
    %p208 = scmp.eq.s32.totalorder %s18, 0
    %p209 = por %p207, %p208
    %p210 = scmp.le.s32.totalorder 1, %s12
    %p211 = scmp.lt.s32.totalorder %s12, 3
    %p212 = pnand %p210, %p211
    %p213 = pneg %p212
    // Predicated region
    $region9: #{decoder_attn_block.5} parent=5 // pred_check
      _
    $region10: #{decoder_attn_block.5} parent=5 // pred_check_branch
      %215 = sbr.rel (%p212) target = $region12
    $region11: #{decoder_attn_block.5} parent=5 // pred_region
      %s216 = ssub.s32 %s12, 1
      // Predicated region
      $region13: #{decoder_attn_block.5} parent=11 // pred_check
        %p217 = pneg %p153
      $region14: #{decoder_attn_block.5} parent=11 // pred_check_branch
        %219 = sbr.rel (%p217) target = $region16
      $region15: #{decoder_attn_block.5} parent=11 // pred_region
        _
      $region16: #{decoder_attn_block.5} parent=11 // pred_fallthru
        _
      // Predicated region
      $region17: #{decoder_attn_block.5} parent=11 // pred_check
        %p220 = pneg %p174
      $region18: #{decoder_attn_block.5} parent=11 // pred_check_branch
        %222 = sbr.rel (%p220) target = $region20
      $region19: #{decoder_attn_block.5} parent=11 // pred_region
        _
      $region20: #{decoder_attn_block.5} parent=11 // pred_fallthru
        _
    $region12: #{decoder_attn_block.5} parent=5 // pred_fallthru
      _
    %p223 = scmp.lt.s32.totalorder %s12, 2
    // Predicated region
    $region21: #{decoder_attn_block.5} parent=5 // pred_check
      %p224 = pneg %p223
    $region22: #{decoder_attn_block.5} parent=5 // pred_check_branch
      %226 = sbr.rel (%p224) target = $region24
    $region23: #{decoder_attn_block.5} parent=5 // pred_region
      // Predicated region
      $region25: #{decoder_attn_block.5} parent=23 // pred_check
        %p227 = pneg %p46
      $region26: #{decoder_attn_block.5} parent=23 // pred_check_branch
        %229 = sbr.rel (%p227) target = $region28
      $region27: #{decoder_attn_block.5} parent=23 // pred_region
        %s230 = smul.u32 2, %s20
        %p231 = scmp.lt.s32.totalorder %s19, 1
        %s232 = scalar_select %p231, %s19, 1
        %p233 = scmp.lt.s32.totalorder %s230, 1
        %s234 = scalar_select %p233, %s230, 1
        %s235 = smul.addr %s232, 48
        %s236 = sadd.s32 %s234, %s235
        %s237 = smul.addr %s236, 4
        %s238 = scalar_lea.vmem %s0, %s237
        %s239 = smul.u32 2, %s20
      $region28: #{decoder_attn_block.5} parent=23 // pred_fallthru
        _
      // Predicated region
      $region29: #{decoder_attn_block.5} parent=23 // pred_check
        %p240 = pneg %p72
      $region30: #{decoder_attn_block.5} parent=23 // pred_check_branch
        %242 = sbr.rel (%p240) target = $region32
      $region31: #{decoder_attn_block.5} parent=23 // pred_region
        %p243 = scmp.lt.s32.totalorder %s19, 1
        %s244 = scalar_select %p243, %s19, 1
        %s245 = smul.addr %s244, 48
        %s246 = sadd.s32 16, %s245
        %s247 = smul.addr %s246, 4
        %s248 = scalar_lea.vmem %s1, %s247
      $region32: #{decoder_attn_block.5} parent=23 // pred_fallthru
        _
      // Predicated region
      $region33: #{decoder_attn_block.5} parent=23 // pred_check
        %p249 = pneg %p98
      $region34: #{decoder_attn_block.5} parent=23 // pred_check_branch
        %251 = sbr.rel (%p249) target = $region36
      $region35: #{decoder_attn_block.5} parent=23 // pred_region
        %p252 = scmp.lt.s32.totalorder %s19, 1
        %s253 = scalar_select %p252, %s19, 1
        %s254 = smul.addr %s253, 48
        %s255 = sadd.s32 32, %s254
        %s256 = smul.addr %s255, 4
        %s257 = scalar_lea.vmem %s2, %s256
      $region36: #{decoder_attn_block.5} parent=23 // pred_fallthru
        _
      // Predicated region
      $region37: #{decoder_attn_block.5} parent=23 // pred_check
        %p258 = pneg %p126
      $region38: #{decoder_attn_block.5} parent=23 // pred_check_branch
        %260 = sbr.rel (%p258) target = $region40
      $region39: #{decoder_attn_block.5} parent=23 // pred_region
        %s261 = smul.u32 2, %s20
        %p262 = scmp.lt.s32.totalorder %s19, 1
        %s263 = scalar_select %p262, %s19, 1
        %p264 = scmp.lt.s32.totalorder %s261, 1
        %s265 = scalar_select %p264, %s261, 1
        %s266 = smul.addr %s263, 16
        %s267 = sadd.s32 %s265, %s266
        %s268 = smul.addr %s267, 8
        %s269 = scalar_lea.vmem %s3, %s268
        %s270 = smul.u32 2, %s20
      $region40: #{decoder_attn_block.5} parent=23 // pred_fallthru
        _
    $region24: #{decoder_attn_block.5} parent=5 // pred_fallthru
      _
    %p271 = scmp.le.s32.totalorder 1, %s12
    %p272 = scmp.lt.s32.totalorder %s12, 3
    %p273 = pnand %p271, %p272
    %p274 = pneg %p273
    // Predicated region
    $region41: #{decoder_attn_block.5} parent=5 // pred_check
      _
    $region42: #{decoder_attn_block.5} parent=5 // pred_check_branch
      %276 = sbr.rel (%p273) target = $region44
    $region43: #{decoder_attn_block.5} parent=5 // pred_region
      %s277 = ssub.s32 %s12, 1
      %s278 = smul.u32 2, %s22
      %p279 = scmp.lt.s32.totalorder %s21, 1
      %s280 = scalar_select %p279, %s21, 1
      %p281 = scmp.lt.s32.totalorder %s278, 1
      %s282 = scalar_select %p281, %s278, 1
      %s283 = smul.addr %s280, 48
      %s284 = sadd.s32 %s282, %s283
      %s285 = smul.addr %s284, 4
      %s286 = scalar_lea.vmem %s0, %s285
      %p287 = pneg %p52
      %p288 = pneg %p49
      %p289 = scmp.lt.s32.totalorder %s21, 1
      %s290 = scalar_select %p289, %s21, 1
      %s291 = smul.addr %s290, 48
      %s292 = sadd.s32 16, %s291
      %s293 = smul.addr %s292, 4
      %s294 = scalar_lea.vmem %s1, %s293
      %p295 = pneg %p78
      %p296 = pneg %p75
      %p297 = scmp.lt.s32.totalorder %s21, 1
      %s298 = scalar_select %p297, %s21, 1
      %s299 = smul.addr %s298, 48
      %s300 = sadd.s32 32, %s299
      %s301 = smul.addr %s300, 4
      %s302 = scalar_lea.vmem %s2, %s301
      %p303 = pneg %p104
      %p304 = pneg %p101
      %s305 = smul.u32 2, %s22
      %p306 = scmp.lt.s32.totalorder %s21, 1
      %s307 = scalar_select %p306, %s21, 1
      %p308 = scmp.lt.s32.totalorder %s305, 1
      %s309 = scalar_select %p308, %s305, 1
      %s310 = smul.addr %s307, 16
      %s311 = sadd.s32 %s309, %s310
      %s312 = smul.addr %s311, 8
      %s313 = scalar_lea.vmem %s3, %s312
      %p314 = pneg %p132
      %p315 = pneg %p129
      %p316 = pneg %p153
      %p317 = pneg %p150
      %p318 = pneg %p174
      %p319 = pneg %p171
      %p320 = pneg %p202
      %p321 = pneg %p199
      %s322 = smul.u32 2, %s22
      %p323 = scmp.lt.s32.totalorder %s21, 1
      %s324 = scalar_select %p323, %s21, 1
      %p325 = scmp.lt.s32.totalorder %s322, 1
      %s326 = scalar_select %p325, %s322, 1
      %s327 = smul.addr %s324, 16
      %s328 = sadd.s32 %s326, %s327
      %s329 = smul.addr %s328, 8
      %s330 = scalar_lea.vmem %s6, %s329
      %s331 = smul.u32 2, %s22
      %p332 = scmp.lt.s32.totalorder %s21, 1
      %s333 = scalar_select %p332, %s21, 1
      %p334 = scmp.lt.s32.totalorder %s331, 1
      %s335 = scalar_select %p334, %s331, 1
      %s336 = smul.addr %s333, 48
      %s337 = sadd.s32 %s335, %s336
      %s338 = smul.addr %s337, 4
      %s339 = scalar_lea.vmem %s0, %s338
      %s340 = smul.u32 2, %s22
      %p341 = scmp.lt.s32.totalorder %s21, 1
      %s342 = scalar_select %p341, %s21, 1
      %s343 = smul.addr %s342, 48
      %s344 = sadd.s32 16, %s343
      %s345 = smul.addr %s344, 4
      %s346 = scalar_lea.vmem %s1, %s345
      %p347 = scmp.lt.s32.totalorder %s21, 1
      %s348 = scalar_select %p347, %s21, 1
      %s349 = smul.addr %s348, 48
      %s350 = sadd.s32 32, %s349
      %s351 = smul.addr %s350, 4
      %s352 = scalar_lea.vmem %s2, %s351
      %s353 = smul.u32 2, %s22
      %p354 = scmp.lt.s32.totalorder %s21, 1
      %s355 = scalar_select %p354, %s21, 1
      %p356 = scmp.lt.s32.totalorder %s353, 1
      %s357 = scalar_select %p356, %s353, 1
      %s358 = smul.addr %s355, 16
      %s359 = sadd.s32 %s357, %s358
      %s360 = smul.addr %s359, 8
      %s361 = scalar_lea.vmem %s3, %s360
      %s362 = smul.u32 2, %s22
      %s363 = smul.u32 2, %s22
      %p364 = scmp.lt.s32.totalorder %s21, 1
      %s365 = scalar_select %p364, %s21, 1
      %p366 = scmp.lt.s32.totalorder %s363, 1
      %s367 = scalar_select %p366, %s363, 1
      %s368 = smul.addr %s365, 16
      %s369 = sadd.s32 %s367, %s368
      %s370 = smul.addr %s369, 8
      %s371 = scalar_lea.vmem %s6, %s370
      %s372 = smul.u32 2, %s22
      %v374 = vld [vmem:[%s339] sm:$0xff]
      %v375 = vld [vmem:[%s339 + $0x8] sm:$0xff]
      %v376 = vld [vmem:[%s339 + $0x10] sm:$0xff]
      %v377 = vld [vmem:[%s339 + $0x18] sm:$0xff]
      %v378 = vld [vmem:[%s339 + $0x20] sm:$0xff]
      %v379 = vld [vmem:[%s339 + $0x28] sm:$0xff]
      %v380 = vld [vmem:[%s339 + $0x30] sm:$0xff]
      %v381 = vld [vmem:[%s339 + $0x38] sm:$0xff]
      %v382 = vld [vmem:[%s346] sm:$0xff]
      %v383 = vld [vmem:[%s346 + $0x8] sm:$0xff]
      %v384 = vld [vmem:[%s346 + $0x10] sm:$0xff]
      %v385 = vld [vmem:[%s346 + $0x18] sm:$0xff]
      %v386 = vld [vmem:[%s346 + $0x20] sm:$0xff]
      %v387 = vld [vmem:[%s346 + $0x28] sm:$0xff]
      %v388 = vld [vmem:[%s346 + $0x30] sm:$0xff]
      %v389 = vld [vmem:[%s346 + $0x38] sm:$0xff]
      %v390 = vld [vmem:[%s352] sm:$0xff]
      %v391 = vld [vmem:[%s352 + $0x8] sm:$0xff]
      %v392 = vld [vmem:[%s352 + $0x10] sm:$0xff]
      %v393 = vld [vmem:[%s352 + $0x18] sm:$0xff]
      %v394 = vld [vmem:[%s352 + $0x20] sm:$0xff]
      %v395 = vld [vmem:[%s352 + $0x28] sm:$0xff]
      %v396 = vld [vmem:[%s352 + $0x30] sm:$0xff]
      %v397 = vld [vmem:[%s352 + $0x38] sm:$0xff]
      %v406 = vunpack.c.l.b16 %v374
      %v407 = vunpack.c.h.b16 %v374
      %v408 = vunpack.c.l.b16 %v375
      %v409 = vunpack.c.h.b16 %v375
      %v410 = vunpack.c.l.b16 %v376
      %v411 = vunpack.c.h.b16 %v376
      %v412 = vunpack.c.l.b16 %v377
      %v413 = vunpack.c.h.b16 %v377
      %v414 = vunpack.c.l.b16 %v378
      %v415 = vunpack.c.h.b16 %v378
      %v416 = vunpack.c.l.b16 %v379
      %v417 = vunpack.c.h.b16 %v379
      %v418 = vunpack.c.l.b16 %v380
      %v419 = vunpack.c.h.b16 %v380
      %v420 = vunpack.c.l.b16 %v381
      %v421 = vunpack.c.h.b16 %v381
      %v422 = vpack.c.b16 %v408, %v406
      %v423 = vpack.c.b16 %v409, %v407
      %v424 = vpack.c.b16 %v412, %v410
      %v425 = vpack.c.b16 %v413, %v411
      %v426 = vpack.c.b16 %v416, %v414
      %v427 = vpack.c.b16 %v417, %v415
      %v428 = vpack.c.b16 %v420, %v418
      %v429 = vpack.c.b16 %v421, %v419
      %438 = vxpose.xlu0.c.b16.start [1/8] %v422, 128
      %439 = vxpose.xlu0.c.b16.cont [2/8] %v424, 128
      %440 = vxpose.xlu0.c.b16.cont [3/8] %v426, 128
      %441 = vxpose.xlu0.c.b16.cont [4/8] %v428, 128
      %442 = vxpose.xlu0.c.b16.cont [5/8] 0, 128
      %443 = vxpose.xlu0.c.b16.cont [6/8] 0, 128
      %444 = vxpose.xlu0.c.b16.cont [7/8] 0, 128
      %445 = vxpose.xlu0.c.b16.end [8/8] 0, 128
      %v446 = vpop.trf.xlu0
      %v447 = vpop.trf.xlu0
      %v448 = vpop.trf.xlu0
      %v449 = vpop.trf.xlu0
      %v450 = vpop.trf.xlu0
      %v451 = vpop.trf.xlu0
      %v452 = vpop.trf.xlu0
      %v453 = vpop.trf.xlu0
      %454 = vxpose.xlu0.c.b16.start [1/8] %v423, 128
      %455 = vxpose.xlu0.c.b16.cont [2/8] %v425, 128
      %456 = vxpose.xlu0.c.b16.cont [3/8] %v427, 128
      %457 = vxpose.xlu0.c.b16.cont [4/8] %v429, 128
      %458 = vxpose.xlu0.c.b16.cont [5/8] 0, 128
      %459 = vxpose.xlu0.c.b16.cont [6/8] 0, 128
      %460 = vxpose.xlu0.c.b16.cont [7/8] 0, 128
      %461 = vxpose.xlu0.c.b16.end [8/8] 0, 128
      %v462 = vpop.trf.xlu0
      %v463 = vpop.trf.xlu0
      %v464 = vpop.trf.xlu0
      %v465 = vpop.trf.xlu0
      %v466 = vpop.trf.xlu0
      %v467 = vpop.trf.xlu0
      %v468 = vpop.trf.xlu0
      %v469 = vpop.trf.xlu0
      %v478 = vunpack.c.l.b16 %v382
      %v479 = vunpack.c.h.b16 %v382
      %v480 = vunpack.c.l.b16 %v383
      %v481 = vunpack.c.h.b16 %v383
      %v482 = vunpack.c.l.b16 %v384
      %v483 = vunpack.c.h.b16 %v384
      %v484 = vunpack.c.l.b16 %v385
      %v485 = vunpack.c.h.b16 %v385
      %v486 = vunpack.c.l.b16 %v386
      %v487 = vunpack.c.h.b16 %v386
      %v488 = vunpack.c.l.b16 %v387
      %v489 = vunpack.c.h.b16 %v387
      %v490 = vunpack.c.l.b16 %v388
      %v491 = vunpack.c.h.b16 %v388
      %v492 = vunpack.c.l.b16 %v389
      %v493 = vunpack.c.h.b16 %v389
      %v494 = vpack.c.b16 %v480, %v478
      %v495 = vpack.c.b16 %v481, %v479
      %v496 = vpack.c.b16 %v484, %v482
      %v497 = vpack.c.b16 %v485, %v483
      %v498 = vpack.c.b16 %v488, %v486
      %v499 = vpack.c.b16 %v489, %v487
      %v500 = vpack.c.b16 %v492, %v490
      %v501 = vpack.c.b16 %v493, %v491
      %vm510 = vcmask 523264
      %v512 = vsel %vm510, %v446, 0
      %v515 = vsel %vm510, %v447, 0
      %v518 = vsel %vm510, %v448, 0
      %v521 = vsel %vm510, %v449, 0
      %v524 = vsel %vm510, %v450, 0
      %v527 = vsel %vm510, %v451, 0
      %v530 = vsel %vm510, %v452, 0
      %v533 = vsel %vm510, %v453, 0
      %v536 = vsel %vm510, %v462, 0
      %v539 = vsel %vm510, %v463, 0
      %v542 = vsel %vm510, %v464, 0
      %v545 = vsel %vm510, %v465, 0
      %v548 = vsel %vm510, %v466, 0
      %v551 = vsel %vm510, %v467, 0
      %v554 = vsel %vm510, %v468, 0
      %v557 = vsel %vm510, %v469, 0
      %559 = vmatprep.subr.bf16.mxu0 %v495
      %560 = vmatpush1.bf16.msra.mxu0 %v494
      %561 = vmatprep.subr.bf16.mxu0 %v497
      %562 = vmatpush1.bf16.msra.mxu0 %v496
      %563 = vmatprep.subr.bf16.mxu0 %v499
      %564 = vmatpush1.bf16.msra.mxu0 %v498
      %565 = vmatprep.subr.bf16.mxu0 %v501
      %566 = vmatpush1.bf16.msra.mxu0 %v500
      %567 = vmatprep.subr.bf16.mxu0 0
      %568 = vmatpush1.bf16.msra.mxu0 0
      %569 = vmatprep.subr.bf16.mxu0 0
      %570 = vmatpush1.bf16.msra.mxu0 0
      %571 = vmatprep.subr.bf16.mxu0 0
      %572 = vmatpush1.bf16.msra.mxu0 0
      %573 = vmatprep.subr.bf16.mxu0 0
      %574 = vmatpush1.bf16.msra.mxu0 0
      %575 = vmatprep.subr.bf16.mxu0 0
      %576 = vmatpush1.bf16.msra.mxu0 0
      %577 = vmatprep.subr.bf16.mxu0 0
      %578 = vmatpush1.bf16.msra.mxu0 0
      %579 = vmatprep.subr.bf16.mxu0 0
      %580 = vmatpush1.bf16.msra.mxu0 0
      %581 = vmatprep.subr.bf16.mxu0 0
      %582 = vmatpush1.bf16.msra.mxu0 0
      %583 = vmatprep.subr.bf16.mxu0 0
      %584 = vmatpush1.bf16.msra.mxu0 0
      %585 = vmatprep.subr.bf16.mxu0 0
      %586 = vmatpush1.bf16.msra.mxu0 0
      %587 = vmatprep.subr.bf16.mxu0 0
      %588 = vmatpush1.bf16.msra.mxu0 0
      %589 = vmatprep.subr.bf16.mxu0 0
      %590 = vmatpush1.bf16.msra.mxu0 0
      %591 = vmatprep.mubr.bf16.mxu0 0
      %592 = vmatmul.mubr.bf16.gmra.mrb[0].mxu0 %v512
      %v593 = vpop.f32.mrb[0].mxu0
      %v594 = vadd.f32 0.0, %v593
      %v595 = vpop.f32.mrb[0].mxu0
      %v596 = vadd.f32 0.0, %v595
      %v597 = vpop.f32.mrb[0].mxu0
      %v598 = vadd.f32 0.0, %v597
      %v599 = vpop.f32.mrb[0].mxu0
      %v600 = vadd.f32 0.0, %v599
      %601 = vmatprep.mubr.bf16.mxu0 0
      %602 = vmatmul.mubr.bf16.gmra.mrb[0].mxu0 %v515
      %v603 = vpop.f32.mrb[0].mxu0
      %v604 = vadd.f32 0.0, %v603
      %v605 = vpop.f32.mrb[0].mxu0
      %v606 = vadd.f32 0.0, %v605
      %v607 = vpop.f32.mrb[0].mxu0
      %v608 = vadd.f32 0.0, %v607
      %v609 = vpop.f32.mrb[0].mxu0
      %v610 = vadd.f32 0.0, %v609
      %611 = vmatprep.mubr.bf16.mxu0 0
      %612 = vmatmul.mubr.bf16.gmra.mrb[0].mxu0 %v518
      %v613 = vpop.f32.mrb[0].mxu0
      %v614 = vadd.f32 0.0, %v613
      %v615 = vpop.f32.mrb[0].mxu0
      %v616 = vadd.f32 0.0, %v615
      %v617 = vpop.f32.mrb[0].mxu0
      %v618 = vadd.f32 0.0, %v617
      %v619 = vpop.f32.mrb[0].mxu0
      %v620 = vadd.f32 0.0, %v619
      %621 = vmatprep.mubr.bf16.mxu0 0
      %622 = vmatmul.mubr.bf16.gmra.mrb[0].mxu0 %v521
      %v623 = vpop.f32.mrb[0].mxu0
      %v624 = vadd.f32 0.0, %v623
      %v625 = vpop.f32.mrb[0].mxu0
      %v626 = vadd.f32 0.0, %v625
      %v627 = vpop.f32.mrb[0].mxu0
      %v628 = vadd.f32 0.0, %v627
      %v629 = vpop.f32.mrb[0].mxu0
      %v630 = vadd.f32 0.0, %v629
      %631 = vmatprep.mubr.bf16.mxu0 0
      %632 = vmatmul.mubr.bf16.gmra.mrb[0].mxu0 %v524
      %v633 = vpop.f32.mrb[0].mxu0
      %v634 = vadd.f32 0.0, %v633
      %v635 = vpop.f32.mrb[0].mxu0
      %v636 = vadd.f32 0.0, %v635
      %v637 = vpop.f32.mrb[0].mxu0
      %v638 = vadd.f32 0.0, %v637
      %v639 = vpop.f32.mrb[0].mxu0
      %v640 = vadd.f32 0.0, %v639
      %641 = vmatprep.mubr.bf16.mxu0 0
      %642 = vmatmul.mubr.bf16.gmra.mrb[0].mxu0 %v527
      %v643 = vpop.f32.mrb[0].mxu0
      %v644 = vadd.f32 0.0, %v643
      %v645 = vpop.f32.mrb[0].mxu0
      %v646 = vadd.f32 0.0, %v645
      %v647 = vpop.f32.mrb[0].mxu0
      %v648 = vadd.f32 0.0, %v647
      %v649 = vpop.f32.mrb[0].mxu0
      %v650 = vadd.f32 0.0, %v649
      %651 = vmatprep.mubr.bf16.mxu0 0
      %652 = vmatmul.mubr.bf16.gmra.mrb[0].mxu0 %v530
      %v653 = vpop.f32.mrb[0].mxu0
      %v654 = vadd.f32 0.0, %v653
      %v655 = vpop.f32.mrb[0].mxu0
      %v656 = vadd.f32 0.0, %v655
      %v657 = vpop.f32.mrb[0].mxu0
      %v658 = vadd.f32 0.0, %v657
      %v659 = vpop.f32.mrb[0].mxu0
      %v660 = vadd.f32 0.0, %v659
      %661 = vmatprep.mubr.bf16.mxu0 0
      %662 = vmatmul.mubr.bf16.gmra.mrb[0].mxu0 %v533
      %v663 = vpop.f32.mrb[0].mxu0
      %v664 = vadd.f32 0.0, %v663
      %v665 = vpop.f32.mrb[0].mxu0
      %v666 = vadd.f32 0.0, %v665
      %v667 = vpop.f32.mrb[0].mxu0
      %v668 = vadd.f32 0.0, %v667
      %v669 = vpop.f32.mrb[0].mxu0
      %v670 = vadd.f32 0.0, %v669
      %671 = vmatprep.mubr.bf16.mxu0 0
      %672 = vmatmul.mubr.bf16.gmra.mrb[0].mxu0 %v536
      %v673 = vpop.f32.mrb[0].mxu0
      %v674 = vadd.f32 0.0, %v673
      %v675 = vpop.f32.mrb[0].mxu0
      %v676 = vadd.f32 0.0, %v675
      %v677 = vpop.f32.mrb[0].mxu0
      %v678 = vadd.f32 0.0, %v677
      %v679 = vpop.f32.mrb[0].mxu0
      %v680 = vadd.f32 0.0, %v679
      %681 = vmatprep.mubr.bf16.mxu0 0
      %682 = vmatmul.mubr.bf16.gmra.mrb[0].mxu0 %v539
      %v683 = vpop.f32.mrb[0].mxu0
      %v684 = vadd.f32 0.0, %v683
      %v685 = vpop.f32.mrb[0].mxu0
      %v686 = vadd.f32 0.0, %v685
      %v687 = vpop.f32.mrb[0].mxu0
      %v688 = vadd.f32 0.0, %v687
      %v689 = vpop.f32.mrb[0].mxu0
      %v690 = vadd.f32 0.0, %v689
      %691 = vmatprep.mubr.bf16.mxu0 0
      %692 = vmatmul.mubr.bf16.gmra.mrb[0].mxu0 %v542
      %v693 = vpop.f32.mrb[0].mxu0
      %v694 = vadd.f32 0.0, %v693
      %v695 = vpop.f32.mrb[0].mxu0
      %v696 = vadd.f32 0.0, %v695
      %v697 = vpop.f32.mrb[0].mxu0
      %v698 = vadd.f32 0.0, %v697
      %v699 = vpop.f32.mrb[0].mxu0
      %v700 = vadd.f32 0.0, %v699
      %701 = vmatprep.mubr.bf16.mxu0 0
      %702 = vmatmul.mubr.bf16.gmra.mrb[0].mxu0 %v545
      %v703 = vpop.f32.mrb[0].mxu0
      %v704 = vadd.f32 0.0, %v703
      %v705 = vpop.f32.mrb[0].mxu0
      %v706 = vadd.f32 0.0, %v705
      %v707 = vpop.f32.mrb[0].mxu0
      %v708 = vadd.f32 0.0, %v707
      %v709 = vpop.f32.mrb[0].mxu0
      %v710 = vadd.f32 0.0, %v709
      %711 = vmatprep.mubr.bf16.mxu0 0
      %712 = vmatmul.mubr.bf16.gmra.mrb[0].mxu0 %v548
      %v713 = vpop.f32.mrb[0].mxu0
      %v714 = vadd.f32 0.0, %v713
      %v715 = vpop.f32.mrb[0].mxu0
      %v716 = vadd.f32 0.0, %v715
      %v717 = vpop.f32.mrb[0].mxu0
      %v718 = vadd.f32 0.0, %v717
      %v719 = vpop.f32.mrb[0].mxu0
      %v720 = vadd.f32 0.0, %v719
      %721 = vmatprep.mubr.bf16.mxu0 0
      %722 = vmatmul.mubr.bf16.gmra.mrb[0].mxu0 %v551
      %v723 = vpop.f32.mrb[0].mxu0
      %v724 = vadd.f32 0.0, %v723
      %v725 = vpop.f32.mrb[0].mxu0
      %v726 = vadd.f32 0.0, %v725
      %v727 = vpop.f32.mrb[0].mxu0
      %v728 = vadd.f32 0.0, %v727
      %v729 = vpop.f32.mrb[0].mxu0
      %v730 = vadd.f32 0.0, %v729
      %731 = vmatprep.mubr.bf16.mxu0 0
      %732 = vmatmul.mubr.bf16.gmra.mrb[0].mxu0 %v554
      %v733 = vpop.f32.mrb[0].mxu0
      %v734 = vadd.f32 0.0, %v733
      %v735 = vpop.f32.mrb[0].mxu0
      %v736 = vadd.f32 0.0, %v735
      %v737 = vpop.f32.mrb[0].mxu0
      %v738 = vadd.f32 0.0, %v737
      %v739 = vpop.f32.mrb[0].mxu0
      %v740 = vadd.f32 0.0, %v739
      %741 = vmatprep.mubr.bf16.mxu0 0
      %742 = vmatmul.mubr.bf16.gmra.mrb[0].mxu0 %v557
      %v743 = vpop.f32.mrb[0].mxu0
      %v744 = vadd.f32 0.0, %v743
      %v745 = vpop.f32.mrb[0].mxu0
      %v746 = vadd.f32 0.0, %v745
      %v747 = vpop.f32.mrb[0].mxu0
      %v748 = vadd.f32 0.0, %v747
      %v749 = vpop.f32.mrb[0].mxu0
      %v750 = vadd.f32 0.0, %v749
      %751 = vdwg.mxu0
      %v752 = vmax.f32 %v594, %v596
      %753 = vmax.xlane.f32.xlu0 %v752
      %v754 = vpop.xlane.xlu0 %753
      %v755 = vmax.f32 %v598, %v600
      %756 = vmax.xlane.f32.xlu0 %v755
      %v757 = vpop.xlane.xlu0 %756
      %v758 = vmax.f32 %v604, %v606
      %759 = vmax.xlane.f32.xlu0 %v758
      %v760 = vpop.xlane.xlu0 %759
      %v761 = vmax.f32 %v608, %v610
      %762 = vmax.xlane.f32.xlu0 %v761
      %v763 = vpop.xlane.xlu0 %762
      %v764 = vmax.f32 %v614, %v616
      %765 = vmax.xlane.f32.xlu0 %v764
      %v766 = vpop.xlane.xlu0 %765
      %v767 = vmax.f32 %v618, %v620
      %768 = vmax.xlane.f32.xlu0 %v767
      %v769 = vpop.xlane.xlu0 %768
      %v770 = vmax.f32 %v624, %v626
      %771 = vmax.xlane.f32.xlu0 %v770
      %v772 = vpop.xlane.xlu0 %771
      %v773 = vmax.f32 %v628, %v630
      %774 = vmax.xlane.f32.xlu0 %v773
      %v775 = vpop.xlane.xlu0 %774
      %v776 = vmax.f32 %v634, %v636
      %777 = vmax.xlane.f32.xlu0 %v776
      %v778 = vpop.xlane.xlu0 %777
      %v779 = vmax.f32 %v638, %v640
      %780 = vmax.xlane.f32.xlu0 %v779
      %v781 = vpop.xlane.xlu0 %780
      %v782 = vmax.f32 %v644, %v646
      %783 = vmax.xlane.f32.xlu0 %v782
      %v784 = vpop.xlane.xlu0 %783
      %v785 = vmax.f32 %v648, %v650
      %786 = vmax.xlane.f32.xlu0 %v785
      %v787 = vpop.xlane.xlu0 %786
      %v788 = vmax.f32 %v654, %v656
      %789 = vmax.xlane.f32.xlu0 %v788
      %v790 = vpop.xlane.xlu0 %789
      %v791 = vmax.f32 %v658, %v660
      %792 = vmax.xlane.f32.xlu0 %v791
      %v793 = vpop.xlane.xlu0 %792
      %v794 = vmax.f32 %v664, %v666
      %795 = vmax.xlane.f32.xlu0 %v794
      %v796 = vpop.xlane.xlu0 %795
      %v797 = vmax.f32 %v668, %v670
      %798 = vmax.xlane.f32.xlu0 %v797
      %v799 = vpop.xlane.xlu0 %798
      %v800 = vmax.f32 %v674, %v676
      %801 = vmax.xlane.f32.xlu0 %v800
      %v802 = vpop.xlane.xlu0 %801
      %v803 = vmax.f32 %v678, %v680
      %804 = vmax.xlane.f32.xlu0 %v803
      %v805 = vpop.xlane.xlu0 %804
      %v806 = vmax.f32 %v684, %v686
      %807 = vmax.xlane.f32.xlu0 %v806
      %v808 = vpop.xlane.xlu0 %807
      %v809 = vmax.f32 %v688, %v690
      %810 = vmax.xlane.f32.xlu0 %v809
      %v811 = vpop.xlane.xlu0 %810
      %v812 = vmax.f32 %v694, %v696
      %813 = vmax.xlane.f32.xlu0 %v812
      %v814 = vpop.xlane.xlu0 %813
      %v815 = vmax.f32 %v698, %v700
      %816 = vmax.xlane.f32.xlu0 %v815
      %v817 = vpop.xlane.xlu0 %816
      %v818 = vmax.f32 %v704, %v706
      %819 = vmax.xlane.f32.xlu0 %v818
      %v820 = vpop.xlane.xlu0 %819
      %v821 = vmax.f32 %v708, %v710
      %822 = vmax.xlane.f32.xlu0 %v821
      %v823 = vpop.xlane.xlu0 %822
      %v824 = vmax.f32 %v714, %v716
      %825 = vmax.xlane.f32.xlu0 %v824
      %v826 = vpop.xlane.xlu0 %825
      %v827 = vmax.f32 %v718, %v720
      %828 = vmax.xlane.f32.xlu0 %v827
      %v829 = vpop.xlane.xlu0 %828
      %v830 = vmax.f32 %v724, %v726
      %831 = vmax.xlane.f32.xlu0 %v830
      %v832 = vpop.xlane.xlu0 %831
      %v833 = vmax.f32 %v728, %v730
      %834 = vmax.xlane.f32.xlu0 %v833
      %v835 = vpop.xlane.xlu0 %834
      %v836 = vmax.f32 %v734, %v736
      %837 = vmax.xlane.f32.xlu0 %v836
      %v838 = vpop.xlane.xlu0 %837
      %v839 = vmax.f32 %v738, %v740
      %840 = vmax.xlane.f32.xlu0 %v839
      %v841 = vpop.xlane.xlu0 %840
      %v842 = vmax.f32 %v744, %v746
      %843 = vmax.xlane.f32.xlu0 %v842
      %v844 = vpop.xlane.xlu0 %843
      %v845 = vmax.f32 %v748, %v750
      %846 = vmax.xlane.f32.xlu0 %v845
      %v847 = vpop.xlane.xlu0 %846
      %v848 = vsub.f32 %v594, %v754
      %v849 = vsub.f32 %v596, %v754
      %v850 = vsub.f32 %v598, %v757
      %v851 = vsub.f32 %v600, %v757
      %v852 = vsub.f32 %v604, %v760
      %v853 = vsub.f32 %v606, %v760
      %v854 = vsub.f32 %v608, %v763
      %v855 = vsub.f32 %v610, %v763
      %v856 = vsub.f32 %v614, %v766
      %v857 = vsub.f32 %v616, %v766
      %v858 = vsub.f32 %v618, %v769
      %v859 = vsub.f32 %v620, %v769
      %v860 = vsub.f32 %v624, %v772
      %v861 = vsub.f32 %v626, %v772
      %v862 = vsub.f32 %v628, %v775
      %v863 = vsub.f32 %v630, %v775
      %v864 = vsub.f32 %v634, %v778
      %v865 = vsub.f32 %v636, %v778
      %v866 = vsub.f32 %v638, %v781
      %v867 = vsub.f32 %v640, %v781
      %v868 = vsub.f32 %v644, %v784
      %v869 = vsub.f32 %v646, %v784
      %v870 = vsub.f32 %v648, %v787
      %v871 = vsub.f32 %v650, %v787
      %v872 = vsub.f32 %v654, %v790
      %v873 = vsub.f32 %v656, %v790
      %v874 = vsub.f32 %v658, %v793
      %v875 = vsub.f32 %v660, %v793
      %v876 = vsub.f32 %v664, %v796
      %v877 = vsub.f32 %v666, %v796
      %v878 = vsub.f32 %v668, %v799
      %v879 = vsub.f32 %v670, %v799
      %v880 = vsub.f32 %v674, %v802
      %v881 = vsub.f32 %v676, %v802
      %v882 = vsub.f32 %v678, %v805
      %v883 = vsub.f32 %v680, %v805
      %v884 = vsub.f32 %v684, %v808
      %v885 = vsub.f32 %v686, %v808
      %v886 = vsub.f32 %v688, %v811
      %v887 = vsub.f32 %v690, %v811
      %v888 = vsub.f32 %v694, %v814
      %v889 = vsub.f32 %v696, %v814
      %v890 = vsub.f32 %v698, %v817
      %v891 = vsub.f32 %v700, %v817
      %v892 = vsub.f32 %v704, %v820
      %v893 = vsub.f32 %v706, %v820
      %v894 = vsub.f32 %v708, %v823
      %v895 = vsub.f32 %v710, %v823
      %v896 = vsub.f32 %v714, %v826
      %v897 = vsub.f32 %v716, %v826
      %v898 = vsub.f32 %v718, %v829
      %v899 = vsub.f32 %v720, %v829
      %v900 = vsub.f32 %v724, %v832
      %v901 = vsub.f32 %v726, %v832
      %v902 = vsub.f32 %v728, %v835
      %v903 = vsub.f32 %v730, %v835
      %v904 = vsub.f32 %v734, %v838
      %v905 = vsub.f32 %v736, %v838
      %v906 = vsub.f32 %v738, %v841
      %v907 = vsub.f32 %v740, %v841
      %v908 = vsub.f32 %v744, %v844
      %v909 = vsub.f32 %v746, %v844
      %v910 = vsub.f32 %v748, %v847
      %v911 = vsub.f32 %v750, %v847
      %v912 = vmul.f32 %v848, 1.442695
      %v913 = vpow.pop %v912
      %v914 = vmul.f32 %v849, 1.442695
      %v915 = vpow.pop %v914
      %v916 = vmul.f32 %v850, 1.442695
      %v917 = vpow.pop %v916
      %v918 = vmul.f32 %v851, 1.442695
      %v919 = vpow.pop %v918
      %v920 = vmul.f32 %v852, 1.442695
      %v921 = vpow.pop %v920
      %v922 = vmul.f32 %v853, 1.442695
      %v923 = vpow.pop %v922
      %v924 = vmul.f32 %v854, 1.442695
      %v925 = vpow.pop %v924
      %v926 = vmul.f32 %v855, 1.442695
      %v927 = vpow.pop %v926
      %v928 = vmul.f32 %v856, 1.442695
      %v929 = vpow.pop %v928
      %v930 = vmul.f32 %v857, 1.442695
      %v931 = vpow.pop %v930
      %v932 = vmul.f32 %v858, 1.442695
      %v933 = vpow.pop %v932
      %v934 = vmul.f32 %v859, 1.442695
      %v935 = vpow.pop %v934
      %v936 = vmul.f32 %v860, 1.442695
      %v937 = vpow.pop %v936
      %v938 = vmul.f32 %v861, 1.442695
      %v939 = vpow.pop %v938
      %v940 = vmul.f32 %v862, 1.442695
      %v941 = vpow.pop %v940
      %v942 = vmul.f32 %v863, 1.442695
      %v943 = vpow.pop %v942
      %v944 = vmul.f32 %v864, 1.442695
      %v945 = vpow.pop %v944
      %v946 = vmul.f32 %v865, 1.442695
      %v947 = vpow.pop %v946
      %v948 = vmul.f32 %v866, 1.442695
      %v949 = vpow.pop %v948
      %v950 = vmul.f32 %v867, 1.442695
      %v951 = vpow.pop %v950
      %v952 = vmul.f32 %v868, 1.442695
      %v953 = vpow.pop %v952
      %v954 = vmul.f32 %v869, 1.442695
      %v955 = vpow.pop %v954
      %v956 = vmul.f32 %v870, 1.442695
      %v957 = vpow.pop %v956
      %v958 = vmul.f32 %v871, 1.442695
      %v959 = vpow.pop %v958
      %v960 = vmul.f32 %v872, 1.442695
      %v961 = vpow.pop %v960
      %v962 = vmul.f32 %v873, 1.442695
      %v963 = vpow.pop %v962
      %v964 = vmul.f32 %v874, 1.442695
      %v965 = vpow.pop %v964
      %v966 = vmul.f32 %v875, 1.442695
      %v967 = vpow.pop %v966
      %v968 = vmul.f32 %v876, 1.442695
      %v969 = vpow.pop %v968
      %v970 = vmul.f32 %v877, 1.442695
      %v971 = vpow.pop %v970
      %v972 = vmul.f32 %v878, 1.442695
      %v973 = vpow.pop %v972
      %v974 = vmul.f32 %v879, 1.442695
      %v975 = vpow.pop %v974
      %v976 = vmul.f32 %v880, 1.442695
      %v977 = vpow.pop %v976
      %v978 = vmul.f32 %v881, 1.442695
      %v979 = vpow.pop %v978
      %v980 = vmul.f32 %v882, 1.442695
      %v981 = vpow.pop %v980
      %v982 = vmul.f32 %v883, 1.442695
      %v983 = vpow.pop %v982
      %v984 = vmul.f32 %v884, 1.442695
      %v985 = vpow.pop %v984
      %v986 = vmul.f32 %v885, 1.442695
      %v987 = vpow.pop %v986
      %v988 = vmul.f32 %v886, 1.442695
      %v989 = vpow.pop %v988
      %v990 = vmul.f32 %v887, 1.442695
      %v991 = vpow.pop %v990
      %v992 = vmul.f32 %v888, 1.442695
      %v993 = vpow.pop %v992
      %v994 = vmul.f32 %v889, 1.442695
      %v995 = vpow.pop %v994
      %v996 = vmul.f32 %v890, 1.442695
      %v997 = vpow.pop %v996
      %v998 = vmul.f32 %v891, 1.442695
      %v999 = vpow.pop %v998
      %v1000 = vmul.f32 %v892, 1.442695
      %v1001 = vpow.pop %v1000
      %v1002 = vmul.f32 %v893, 1.442695
      %v1003 = vpow.pop %v1002
      %v1004 = vmul.f32 %v894, 1.442695
      %v1005 = vpow.pop %v1004
      %v1006 = vmul.f32 %v895, 1.442695
      %v1007 = vpow.pop %v1006
      %v1008 = vmul.f32 %v896, 1.442695
      %v1009 = vpow.pop %v1008
      %v1010 = vmul.f32 %v897, 1.442695
      %v1011 = vpow.pop %v1010
      %v1012 = vmul.f32 %v898, 1.442695
      %v1013 = vpow.pop %v1012
      %v1014 = vmul.f32 %v899, 1.442695
      %v1015 = vpow.pop %v1014
      %v1016 = vmul.f32 %v900, 1.442695
      %v1017 = vpow.pop %v1016
      %v1018 = vmul.f32 %v901, 1.442695
      %v1019 = vpow.pop %v1018
      %v1020 = vmul.f32 %v902, 1.442695
      %v1021 = vpow.pop %v1020
      %v1022 = vmul.f32 %v903, 1.442695
      %v1023 = vpow.pop %v1022
      %v1024 = vmul.f32 %v904, 1.442695
      %v1025 = vpow.pop %v1024
      %v1026 = vmul.f32 %v905, 1.442695
      %v1027 = vpow.pop %v1026
      %v1028 = vmul.f32 %v906, 1.442695
      %v1029 = vpow.pop %v1028
      %v1030 = vmul.f32 %v907, 1.442695
      %v1031 = vpow.pop %v1030
      %v1032 = vmul.f32 %v908, 1.442695
      %v1033 = vpow.pop %v1032
      %v1034 = vmul.f32 %v909, 1.442695
      %v1035 = vpow.pop %v1034
      %v1036 = vmul.f32 %v910, 1.442695
      %v1037 = vpow.pop %v1036
      %v1038 = vmul.f32 %v911, 1.442695
      %v1039 = vpow.pop %v1038
      %v1040 = vadd.f32 %v913, %v915
      %1041 = vadd.xlane.f32.xlu0 %v1040
      %v1042 = vpop.xlane.xlu0 %1041
      %v1043 = vadd.f32 %v917, %v919
      %1044 = vadd.xlane.f32.xlu0 %v1043
      %v1045 = vpop.xlane.xlu0 %1044
      %v1046 = vadd.f32 %v921, %v923
      %1047 = vadd.xlane.f32.xlu0 %v1046
      %v1048 = vpop.xlane.xlu0 %1047
      %v1049 = vadd.f32 %v925, %v927
      %1050 = vadd.xlane.f32.xlu0 %v1049
      %v1051 = vpop.xlane.xlu0 %1050
      %v1052 = vadd.f32 %v929, %v931
      %1053 = vadd.xlane.f32.xlu0 %v1052
      %v1054 = vpop.xlane.xlu0 %1053
      %v1055 = vadd.f32 %v933, %v935
      %1056 = vadd.xlane.f32.xlu0 %v1055
      %v1057 = vpop.xlane.xlu0 %1056
      %v1058 = vadd.f32 %v937, %v939
      %1059 = vadd.xlane.f32.xlu0 %v1058
      %v1060 = vpop.xlane.xlu0 %1059
      %v1061 = vadd.f32 %v941, %v943
      %1062 = vadd.xlane.f32.xlu0 %v1061
      %v1063 = vpop.xlane.xlu0 %1062
      %v1064 = vadd.f32 %v945, %v947
      %1065 = vadd.xlane.f32.xlu0 %v1064
      %v1066 = vpop.xlane.xlu0 %1065
      %v1067 = vadd.f32 %v949, %v951
      %1068 = vadd.xlane.f32.xlu0 %v1067
      %v1069 = vpop.xlane.xlu0 %1068
      %v1070 = vadd.f32 %v953, %v955
      %1071 = vadd.xlane.f32.xlu0 %v1070
      %v1072 = vpop.xlane.xlu0 %1071
      %v1073 = vadd.f32 %v957, %v959
      %1074 = vadd.xlane.f32.xlu0 %v1073
      %v1075 = vpop.xlane.xlu0 %1074
      %v1076 = vadd.f32 %v961, %v963
      %1077 = vadd.xlane.f32.xlu0 %v1076
      %v1078 = vpop.xlane.xlu0 %1077
      %v1079 = vadd.f32 %v965, %v967
      %1080 = vadd.xlane.f32.xlu0 %v1079
      %v1081 = vpop.xlane.xlu0 %1080
      %v1082 = vadd.f32 %v969, %v971
      %1083 = vadd.xlane.f32.xlu0 %v1082
      %v1084 = vpop.xlane.xlu0 %1083
      %v1085 = vadd.f32 %v973, %v975
      %1086 = vadd.xlane.f32.xlu0 %v1085
      %v1087 = vpop.xlane.xlu0 %1086
      %v1088 = vadd.f32 %v977, %v979
      %1089 = vadd.xlane.f32.xlu0 %v1088
      %v1090 = vpop.xlane.xlu0 %1089
      %v1091 = vadd.f32 %v981, %v983
      %1092 = vadd.xlane.f32.xlu0 %v1091
      %v1093 = vpop.xlane.xlu0 %1092
      %v1094 = vadd.f32 %v985, %v987
      %1095 = vadd.xlane.f32.xlu0 %v1094
      %v1096 = vpop.xlane.xlu0 %1095
      %v1097 = vadd.f32 %v989, %v991
      %1098 = vadd.xlane.f32.xlu0 %v1097
      %v1099 = vpop.xlane.xlu0 %1098
      %v1100 = vadd.f32 %v993, %v995
      %1101 = vadd.xlane.f32.xlu0 %v1100
      %v1102 = vpop.xlane.xlu0 %1101
      %v1103 = vadd.f32 %v997, %v999
      %1104 = vadd.xlane.f32.xlu0 %v1103
      %v1105 = vpop.xlane.xlu0 %1104
      %v1106 = vadd.f32 %v1001, %v1003
      %1107 = vadd.xlane.f32.xlu0 %v1106
      %v1108 = vpop.xlane.xlu0 %1107
      %v1109 = vadd.f32 %v1005, %v1007
      %1110 = vadd.xlane.f32.xlu0 %v1109
      %v1111 = vpop.xlane.xlu0 %1110
      %v1112 = vadd.f32 %v1009, %v1011
      %1113 = vadd.xlane.f32.xlu0 %v1112
      %v1114 = vpop.xlane.xlu0 %1113
      %v1115 = vadd.f32 %v1013, %v1015
      %1116 = vadd.xlane.f32.xlu0 %v1115
      %v1117 = vpop.xlane.xlu0 %1116
      %v1118 = vadd.f32 %v1017, %v1019
      %1119 = vadd.xlane.f32.xlu0 %v1118
      %v1120 = vpop.xlane.xlu0 %1119
      %v1121 = vadd.f32 %v1021, %v1023
      %1122 = vadd.xlane.f32.xlu0 %v1121
      %v1123 = vpop.xlane.xlu0 %1122
      %v1124 = vadd.f32 %v1025, %v1027
      %1125 = vadd.xlane.f32.xlu0 %v1124
      %v1126 = vpop.xlane.xlu0 %1125
      %v1127 = vadd.f32 %v1029, %v1031
      %1128 = vadd.xlane.f32.xlu0 %v1127
      %v1129 = vpop.xlane.xlu0 %1128
      %v1130 = vadd.f32 %v1033, %v1035
      %1131 = vadd.xlane.f32.xlu0 %v1130
      %v1132 = vpop.xlane.xlu0 %1131
      %v1133 = vadd.f32 %v1037, %v1039
      %1134 = vadd.xlane.f32.xlu0 %v1133
      %v1135 = vpop.xlane.xlu0 %1134
      %v1136 = vrcp.pop %v1042
      %v1137 = vrcp.pop %v1045
      %v1138 = vrcp.pop %v1048
      %v1139 = vrcp.pop %v1051
      %v1140 = vrcp.pop %v1054
      %v1141 = vrcp.pop %v1057
      %v1142 = vrcp.pop %v1060
      %v1143 = vrcp.pop %v1063
      %v1144 = vrcp.pop %v1066
      %v1145 = vrcp.pop %v1069
      %v1146 = vrcp.pop %v1072
      %v1147 = vrcp.pop %v1075
      %v1148 = vrcp.pop %v1078
      %v1149 = vrcp.pop %v1081
      %v1150 = vrcp.pop %v1084
      %v1151 = vrcp.pop %v1087
      %v1152 = vrcp.pop %v1090
      %v1153 = vrcp.pop %v1093
      %v1154 = vrcp.pop %v1096
      %v1155 = vrcp.pop %v1099
      %v1156 = vrcp.pop %v1102
      %v1157 = vrcp.pop %v1105
      %v1158 = vrcp.pop %v1108
      %v1159 = vrcp.pop %v1111
      %v1160 = vrcp.pop %v1114
      %v1161 = vrcp.pop %v1117
      %v1162 = vrcp.pop %v1120
      %v1163 = vrcp.pop %v1123
      %v1164 = vrcp.pop %v1126
      %v1165 = vrcp.pop %v1129
      %v1166 = vrcp.pop %v1132
      %v1167 = vrcp.pop %v1135
      %v1168 = vmul.f32 %v913, %v1136
      %v1169 = vmul.f32 %v915, %v1136
      %v1170 = vmul.f32 %v917, %v1137
      %v1171 = vmul.f32 %v919, %v1137
      %v1172 = vmul.f32 %v921, %v1138
      %v1173 = vmul.f32 %v923, %v1138
      %v1174 = vmul.f32 %v925, %v1139
      %v1175 = vmul.f32 %v927, %v1139
      %v1176 = vmul.f32 %v929, %v1140
      %v1177 = vmul.f32 %v931, %v1140
      %v1178 = vmul.f32 %v933, %v1141
      %v1179 = vmul.f32 %v935, %v1141
      %v1180 = vmul.f32 %v937, %v1142
      %v1181 = vmul.f32 %v939, %v1142
      %v1182 = vmul.f32 %v941, %v1143
      %v1183 = vmul.f32 %v943, %v1143
      %v1184 = vmul.f32 %v945, %v1144
      %v1185 = vmul.f32 %v947, %v1144
      %v1186 = vmul.f32 %v949, %v1145
      %v1187 = vmul.f32 %v951, %v1145
      %v1188 = vmul.f32 %v953, %v1146
      %v1189 = vmul.f32 %v955, %v1146
      %v1190 = vmul.f32 %v957, %v1147
      %v1191 = vmul.f32 %v959, %v1147
      %v1192 = vmul.f32 %v961, %v1148
      %v1193 = vmul.f32 %v963, %v1148
      %v1194 = vmul.f32 %v965, %v1149
      %v1195 = vmul.f32 %v967, %v1149
      %v1196 = vmul.f32 %v969, %v1150
      %v1197 = vmul.f32 %v971, %v1150
      %v1198 = vmul.f32 %v973, %v1151
      %v1199 = vmul.f32 %v975, %v1151
      %v1200 = vmul.f32 %v977, %v1152
      %v1201 = vmul.f32 %v979, %v1152
      %v1202 = vmul.f32 %v981, %v1153
      %v1203 = vmul.f32 %v983, %v1153
      %v1204 = vmul.f32 %v985, %v1154
      %v1205 = vmul.f32 %v987, %v1154
      %v1206 = vmul.f32 %v989, %v1155
      %v1207 = vmul.f32 %v991, %v1155
      %v1208 = vmul.f32 %v993, %v1156
      %v1209 = vmul.f32 %v995, %v1156
      %v1210 = vmul.f32 %v997, %v1157
      %v1211 = vmul.f32 %v999, %v1157
      %v1212 = vmul.f32 %v1001, %v1158
      %v1213 = vmul.f32 %v1003, %v1158
      %v1214 = vmul.f32 %v1005, %v1159
      %v1215 = vmul.f32 %v1007, %v1159
      %v1216 = vmul.f32 %v1009, %v1160
      %v1217 = vmul.f32 %v1011, %v1160
      %v1218 = vmul.f32 %v1013, %v1161
      %v1219 = vmul.f32 %v1015, %v1161
      %v1220 = vmul.f32 %v1017, %v1162
      %v1221 = vmul.f32 %v1019, %v1162
      %v1222 = vmul.f32 %v1021, %v1163
      %v1223 = vmul.f32 %v1023, %v1163
      %v1224 = vmul.f32 %v1025, %v1164
      %v1225 = vmul.f32 %v1027, %v1164
      %v1226 = vmul.f32 %v1029, %v1165
      %v1227 = vmul.f32 %v1031, %v1165
      %v1228 = vmul.f32 %v1033, %v1166
      %v1229 = vmul.f32 %v1035, %v1166
      %v1230 = vmul.f32 %v1037, %v1167
      %v1231 = vmul.f32 %v1039, %v1167
      %v1232 = vpack.c.bf16 %v1170, %v1168
      %v1233 = vpack.c.bf16 %v1171, %v1169
      %v1234 = vpack.c.bf16 %v1174, %v1172
      %v1235 = vpack.c.bf16 %v1175, %v1173
      %v1236 = vpack.c.bf16 %v1178, %v1176
      %v1237 = vpack.c.bf16 %v1179, %v1177
      %v1238 = vpack.c.bf16 %v1182, %v1180
      %v1239 = vpack.c.bf16 %v1183, %v1181
      %v1240 = vpack.c.bf16 %v1186, %v1184
      %v1241 = vpack.c.bf16 %v1187, %v1185
      %v1242 = vpack.c.bf16 %v1190, %v1188
      %v1243 = vpack.c.bf16 %v1191, %v1189
      %v1244 = vpack.c.bf16 %v1194, %v1192
      %v1245 = vpack.c.bf16 %v1195, %v1193
      %v1246 = vpack.c.bf16 %v1198, %v1196
      %v1247 = vpack.c.bf16 %v1199, %v1197
      %v1248 = vpack.c.bf16 %v1202, %v1200
      %v1249 = vpack.c.bf16 %v1203, %v1201
      %v1250 = vpack.c.bf16 %v1206, %v1204
      %v1251 = vpack.c.bf16 %v1207, %v1205
      %v1252 = vpack.c.bf16 %v1210, %v1208
      %v1253 = vpack.c.bf16 %v1211, %v1209
      %v1254 = vpack.c.bf16 %v1214, %v1212
      %v1255 = vpack.c.bf16 %v1215, %v1213
      %v1256 = vpack.c.bf16 %v1218, %v1216
      %v1257 = vpack.c.bf16 %v1219, %v1217
      %v1258 = vpack.c.bf16 %v1222, %v1220
      %v1259 = vpack.c.bf16 %v1223, %v1221
      %v1260 = vpack.c.bf16 %v1226, %v1224
      %v1261 = vpack.c.bf16 %v1227, %v1225
      %v1262 = vpack.c.bf16 %v1230, %v1228
      %v1263 = vpack.c.bf16 %v1231, %v1229
      %v1272 = vunpack.c.l.b16 %v390
      %v1273 = vunpack.c.h.b16 %v390
      %v1274 = vunpack.c.l.b16 %v391
      %v1275 = vunpack.c.h.b16 %v391
      %v1276 = vunpack.c.l.b16 %v392
      %v1277 = vunpack.c.h.b16 %v392
      %v1278 = vunpack.c.l.b16 %v393
      %v1279 = vunpack.c.h.b16 %v393
      %v1280 = vunpack.c.l.b16 %v394
      %v1281 = vunpack.c.h.b16 %v394
      %v1282 = vunpack.c.l.b16 %v395
      %v1283 = vunpack.c.h.b16 %v395
      %v1284 = vunpack.c.l.b16 %v396
      %v1285 = vunpack.c.h.b16 %v396
      %v1286 = vunpack.c.l.b16 %v397
      %v1287 = vunpack.c.h.b16 %v397
      %v1288 = vpack.c.b16 %v1274, %v1272
      %v1289 = vpack.c.b16 %v1275, %v1273
      %v1290 = vpack.c.b16 %v1278, %v1276
      %v1291 = vpack.c.b16 %v1279, %v1277
      %v1292 = vpack.c.b16 %v1282, %v1280
      %v1293 = vpack.c.b16 %v1283, %v1281
      %v1294 = vpack.c.b16 %v1286, %v1284
      %v1295 = vpack.c.b16 %v1287, %v1285
      %1304 = vmatprep.subr.bf16.mxu0 %v1233
      %1305 = vmatpush1.bf16.xpose.msra.mxu0 %v1232
      %1306 = vmatprep.subr.bf16.mxu0 %v1235
      %1307 = vmatpush1.bf16.xpose.msra.mxu0 %v1234
      %1308 = vmatprep.subr.bf16.mxu0 %v1237
      %1309 = vmatpush1.bf16.xpose.msra.mxu0 %v1236
      %1310 = vmatprep.subr.bf16.mxu0 %v1239
      %1311 = vmatpush1.bf16.xpose.msra.mxu0 %v1238
      %1312 = vmatprep.subr.bf16.mxu0 %v1241
      %1313 = vmatpush1.bf16.xpose.msra.mxu0 %v1240
      %1314 = vmatprep.subr.bf16.mxu0 %v1243
      %1315 = vmatpush1.bf16.xpose.msra.mxu0 %v1242
      %1316 = vmatprep.subr.bf16.mxu0 %v1245
      %1317 = vmatpush1.bf16.xpose.msra.mxu0 %v1244
      %1318 = vmatprep.subr.bf16.mxu0 %v1247
      %1319 = vmatpush1.bf16.xpose.msra.mxu0 %v1246
      %1320 = vmatprep.subr.bf16.mxu0 %v1249
      %1321 = vmatpush1.bf16.xpose.msra.mxu0 %v1248
      %1322 = vmatprep.subr.bf16.mxu0 %v1251
      %1323 = vmatpush1.bf16.xpose.msra.mxu0 %v1250
      %1324 = vmatprep.subr.bf16.mxu0 %v1253
      %1325 = vmatpush1.bf16.xpose.msra.mxu0 %v1252
      %1326 = vmatprep.subr.bf16.mxu0 %v1255
      %1327 = vmatpush1.bf16.xpose.msra.mxu0 %v1254
      %1328 = vmatprep.subr.bf16.mxu0 %v1257
      %1329 = vmatpush1.bf16.xpose.msra.mxu0 %v1256
      %1330 = vmatprep.subr.bf16.mxu0 %v1259
      %1331 = vmatpush1.bf16.xpose.msra.mxu0 %v1258
      %1332 = vmatprep.subr.bf16.mxu0 %v1261
      %1333 = vmatpush1.bf16.xpose.msra.mxu0 %v1260
      %1334 = vmatprep.subr.bf16.mxu0 %v1263
      %1335 = vmatpush1.bf16.xpose.msra.mxu0 %v1262
      %1336 = vmatprep.mubr.bf16.mxu0 %v1289
      %1337 = vmatmul.mubr.bf16.gmra.mrb[0].mxu0 %v1288
      %v1338 = vpop.f32.mrb[0].mxu0
      %v1339 = vadd.f32 0.0, %v1338
      %v1340 = vpop.f32.mrb[0].mxu0
      %v1341 = vadd.f32 0.0, %v1340
      %v1342 = vpop.f32.mrb[0].mxu0
      %v1343 = vadd.f32 0.0, %v1342
      %v1344 = vpop.f32.mrb[0].mxu0
      %v1345 = vadd.f32 0.0, %v1344
      %1346 = vmatprep.mubr.bf16.mxu0 %v1291
      %1347 = vmatmul.mubr.bf16.gmra.mrb[0].mxu0 %v1290
      %v1348 = vpop.f32.mrb[0].mxu0
      %v1349 = vadd.f32 0.0, %v1348
      %v1350 = vpop.f32.mrb[0].mxu0
      %v1351 = vadd.f32 0.0, %v1350
      %v1352 = vpop.f32.mrb[0].mxu0
      %v1353 = vadd.f32 0.0, %v1352
      %v1354 = vpop.f32.mrb[0].mxu0
      %v1355 = vadd.f32 0.0, %v1354
      %1356 = vmatprep.mubr.bf16.mxu0 %v1293
      %1357 = vmatmul.mubr.bf16.gmra.mrb[0].mxu0 %v1292
      %v1358 = vpop.f32.mrb[0].mxu0
      %v1359 = vadd.f32 0.0, %v1358
      %v1360 = vpop.f32.mrb[0].mxu0
      %v1361 = vadd.f32 0.0, %v1360
      %v1362 = vpop.f32.mrb[0].mxu0
      %v1363 = vadd.f32 0.0, %v1362
      %v1364 = vpop.f32.mrb[0].mxu0
      %v1365 = vadd.f32 0.0, %v1364
      %1366 = vmatprep.mubr.bf16.mxu0 %v1295
      %1367 = vmatmul.mubr.bf16.gmra.mrb[0].mxu0 %v1294
      %v1368 = vpop.f32.mrb[0].mxu0
      %v1369 = vadd.f32 0.0, %v1368
      %v1370 = vpop.f32.mrb[0].mxu0
      %v1371 = vadd.f32 0.0, %v1370
      %v1372 = vpop.f32.mrb[0].mxu0
      %v1373 = vadd.f32 0.0, %v1372
      %v1374 = vpop.f32.mrb[0].mxu0
      %v1375 = vadd.f32 0.0, %v1374
      %1376 = vdwg.mxu0
      %v1377 = vld [vmem:[%s4] sm:$0xf]
      %v1378 = vld [vmem:[%s4 + $0x4] sm:$0xf]
      %v1379 = vld [vmem:[%s4 + $0x8] sm:$0xf]
      %v1380 = vld [vmem:[%s4 + $0xc] sm:$0xf]
      %v1381 = vld [vmem:[%s4 + $0x10] sm:$0xf]
      %v1382 = vld [vmem:[%s4 + $0x14] sm:$0xf]
      %v1383 = vld [vmem:[%s4 + $0x18] sm:$0xf]
      %v1384 = vld [vmem:[%s4 + $0x1c] sm:$0xf]
      %v1385 = vpack.c.bf16 %v1343, %v1339
      %v1386 = vpack.c.bf16 %v1345, %v1341
      %v1387 = vpack.c.bf16 %v1353, %v1349
      %v1388 = vpack.c.bf16 %v1355, %v1351
      %v1389 = vpack.c.bf16 %v1363, %v1359
      %v1390 = vpack.c.bf16 %v1365, %v1361
      %v1391 = vpack.c.bf16 %v1373, %v1369
      %v1392 = vpack.c.bf16 %v1375, %v1371
      %v1401 = vunpack.c.l.b16 %v1377
      %v1402 = vunpack.c.l.b16 %v1378
      %v1403 = vunpack.c.l.b16 %v1379
      %v1404 = vunpack.c.l.b16 %v1380
      %v1405 = vunpack.c.l.b16 %v1381
      %v1406 = vunpack.c.l.b16 %v1382
      %v1407 = vunpack.c.l.b16 %v1383
      %v1408 = vunpack.c.l.b16 %v1384
      %v1409 = vpack.c.b16 %v1402, %v1401
      %v1410 = vpack.c.b16 %v1404, %v1403
      %v1411 = vpack.c.b16 %v1406, %v1405
      %v1412 = vpack.c.b16 %v1408, %v1407
      %v1414 = vsel %vm510, %v1409, 0
      %v1417 = vsel %vm510, %v1410, 0
      %v1420 = vsel %vm510, %v1411, 0
      %v1423 = vsel %vm510, %v1412, 0
      %1425 = vmatprep.subr.bf16.mxu0 %v1386
      %1426 = vmatpush1.bf16.msra.mxu0 %v1385
      %1427 = vmatprep.subr.bf16.mxu0 %v1388
      %1428 = vmatpush1.bf16.msra.mxu0 %v1387
      %1429 = vmatprep.subr.bf16.mxu0 %v1390
      %1430 = vmatpush1.bf16.msra.mxu0 %v1389
      %1431 = vmatprep.subr.bf16.mxu0 %v1392
      %1432 = vmatpush1.bf16.msra.mxu0 %v1391
      %1433 = vmatprep.subr.bf16.mxu0 0
      %1434 = vmatpush1.bf16.msra.mxu0 0
      %1435 = vmatprep.subr.bf16.mxu0 0
      %1436 = vmatpush1.bf16.msra.mxu0 0
      %1437 = vmatprep.subr.bf16.mxu0 0
      %1438 = vmatpush1.bf16.msra.mxu0 0
      %1439 = vmatprep.subr.bf16.mxu0 0
      %1440 = vmatpush1.bf16.msra.mxu0 0
      %1441 = vmatprep.subr.bf16.mxu0 0
      %1442 = vmatpush1.bf16.msra.mxu0 0
      %1443 = vmatprep.subr.bf16.mxu0 0
      %1444 = vmatpush1.bf16.msra.mxu0 0
      %1445 = vmatprep.subr.bf16.mxu0 0
      %1446 = vmatpush1.bf16.msra.mxu0 0
      %1447 = vmatprep.subr.bf16.mxu0 0
      %1448 = vmatpush1.bf16.msra.mxu0 0
      %1449 = vmatprep.subr.bf16.mxu0 0
      %1450 = vmatpush1.bf16.msra.mxu0 0
      %1451 = vmatprep.subr.bf16.mxu0 0
      %1452 = vmatpush1.bf16.msra.mxu0 0
      %1453 = vmatprep.subr.bf16.mxu0 0
      %1454 = vmatpush1.bf16.msra.mxu0 0
      %1455 = vmatprep.subr.bf16.mxu0 0
      %1456 = vmatpush1.bf16.msra.mxu0 0
      %1457 = vmatprep.mubr.bf16.mxu0 0
      %1458 = vmatmul.mubr.bf16.gmra.mrb[0].mxu0 %v1414
      %v1459 = vpop.f32.mrb[0].mxu0
      %v1460 = vadd.f32 0.0, %v1459
      %v1461 = vpop.f32.mrb[0].mxu0
      %v1462 = vadd.f32 0.0, %v1461
      %v1463 = vpop.f32.mrb[0].mxu0
      %v1464 = vadd.f32 0.0, %v1463
      %v1465 = vpop.f32.mrb[0].mxu0
      %v1466 = vadd.f32 0.0, %v1465
      %1467 = vmatprep.mubr.bf16.mxu0 0
      %1468 = vmatmul.mubr.bf16.gmra.mrb[0].mxu0 %v1417
      %v1469 = vpop.f32.mrb[0].mxu0
      %v1470 = vadd.f32 0.0, %v1469
      %v1471 = vpop.f32.mrb[0].mxu0
      %v1472 = vadd.f32 0.0, %v1471
      %v1473 = vpop.f32.mrb[0].mxu0
      %v1474 = vadd.f32 0.0, %v1473
      %v1475 = vpop.f32.mrb[0].mxu0
      %v1476 = vadd.f32 0.0, %v1475
      %1477 = vmatprep.mubr.bf16.mxu0 0
      %1478 = vmatmul.mubr.bf16.gmra.mrb[0].mxu0 %v1420
      %v1479 = vpop.f32.mrb[0].mxu0
      %v1480 = vadd.f32 0.0, %v1479
      %v1481 = vpop.f32.mrb[0].mxu0
      %v1482 = vadd.f32 0.0, %v1481
      %v1483 = vpop.f32.mrb[0].mxu0
      %v1484 = vadd.f32 0.0, %v1483
      %v1485 = vpop.f32.mrb[0].mxu0
      %v1486 = vadd.f32 0.0, %v1485
      %1487 = vmatprep.mubr.bf16.mxu0 0
      %1488 = vmatmul.mubr.bf16.gmra.mrb[0].mxu0 %v1423
      %v1489 = vpop.f32.mrb[0].mxu0
      %v1490 = vadd.f32 0.0, %v1489
      %v1491 = vpop.f32.mrb[0].mxu0
      %v1492 = vadd.f32 0.0, %v1491
      %v1493 = vpop.f32.mrb[0].mxu0
      %v1494 = vadd.f32 0.0, %v1493
      %v1495 = vpop.f32.mrb[0].mxu0
      %v1496 = vadd.f32 0.0, %v1495
      %1497 = vdwg.mxu0
      %v1498 = vld [vmem:[%s361] sm:$0xff]
      %v1499 = vld [vmem:[%s361 + $0x8] sm:$0xff]
      %v1500 = vld [vmem:[%s361 + $0x10] sm:$0xff]
      %v1501 = vld [vmem:[%s361 + $0x18] sm:$0xff]
      %v1502 = vld [vmem:[%s361 + $0x20] sm:$0xff]
      %v1503 = vld [vmem:[%s361 + $0x28] sm:$0xff]
      %v1504 = vld [vmem:[%s361 + $0x30] sm:$0xff]
      %v1505 = vld [vmem:[%s361 + $0x38] sm:$0xff]
      %v1506 = vld [vmem:[%s361 + $0x40] sm:$0xff]
      %v1507 = vld [vmem:[%s361 + $0x48] sm:$0xff]
      %v1508 = vld [vmem:[%s361 + $0x50] sm:$0xff]
      %v1509 = vld [vmem:[%s361 + $0x58] sm:$0xff]
      %v1510 = vld [vmem:[%s361 + $0x60] sm:$0xff]
      %v1511 = vld [vmem:[%s361 + $0x68] sm:$0xff]
      %v1512 = vld [vmem:[%s361 + $0x70] sm:$0xff]
      %v1513 = vld [vmem:[%s361 + $0x78] sm:$0xff]
      %v1514 = vadd.f32 %v1498, %v1460
      %v1515 = vadd.f32 %v1499, %v1462
      %v1516 = vadd.f32 %v1500, %v1464
      %v1517 = vadd.f32 %v1501, %v1466
      %v1518 = vadd.f32 %v1502, %v1470
      %v1519 = vadd.f32 %v1503, %v1472
      %v1520 = vadd.f32 %v1504, %v1474
      %v1521 = vadd.f32 %v1505, %v1476
      %v1522 = vadd.f32 %v1506, %v1480
      %v1523 = vadd.f32 %v1507, %v1482
      %v1524 = vadd.f32 %v1508, %v1484
      %v1525 = vadd.f32 %v1509, %v1486
      %v1526 = vadd.f32 %v1510, %v1490
      %v1527 = vadd.f32 %v1511, %v1492
      %v1528 = vadd.f32 %v1512, %v1494
      %v1529 = vadd.f32 %v1513, %v1496
      %v1530 = vld [vmem:[%s5] sm:$0xff]
      %v1531 = vld [vmem:[%s5 + $0x8] sm:$0xff]
      %v1532 = vld [vmem:[%s5 + $0x10] sm:$0xff]
      %v1533 = vld [vmem:[%s5 + $0x18] sm:$0xff]
      %v1534 = vld [vmem:[%s5 + $0x20] sm:$0xff]
      %v1535 = vld [vmem:[%s5 + $0x28] sm:$0xff]
      %v1536 = vld [vmem:[%s5 + $0x30] sm:$0xff]
      %v1537 = vld [vmem:[%s5 + $0x38] sm:$0xff]
      %1539 = vset.pattern.permute.xlu0 0
      %1540 = vperm.xlu0 %1539, %v1530
      %v1541 = vpop.permute.xlu0 %1540
      %1544 = vset.pattern.permute.xlu0 0
      %1545 = vperm.xlu0 %1544, %v1531
      %v1546 = vpop.permute.xlu0 %1545
      %1549 = vset.pattern.permute.xlu0 0
      %1550 = vperm.xlu0 %1549, %v1532
      %v1551 = vpop.permute.xlu0 %1550
      %1554 = vset.pattern.permute.xlu0 0
      %1555 = vperm.xlu0 %1554, %v1533
      %v1556 = vpop.permute.xlu0 %1555
      %1559 = vset.pattern.permute.xlu0 0
      %1560 = vperm.xlu0 %1559, %v1534
      %v1561 = vpop.permute.xlu0 %1560
      %1564 = vset.pattern.permute.xlu0 0
      %1565 = vperm.xlu0 %1564, %v1535
      %v1566 = vpop.permute.xlu0 %1565
      %1569 = vset.pattern.permute.xlu0 0
      %1570 = vperm.xlu0 %1569, %v1536
      %v1571 = vpop.permute.xlu0 %1570
      %1574 = vset.pattern.permute.xlu0 0
      %1575 = vperm.xlu0 %1574, %v1537
      %v1576 = vpop.permute.xlu0 %1575
      %v1578 = vadd.f32 %v1514, %v1541
      %v1579 = vadd.f32 %v1515, %v1541
      %v1580 = vadd.f32 %v1516, %v1546
      %v1581 = vadd.f32 %v1517, %v1546
      %v1582 = vadd.f32 %v1518, %v1551
      %v1583 = vadd.f32 %v1519, %v1551
      %v1584 = vadd.f32 %v1520, %v1556
      %v1585 = vadd.f32 %v1521, %v1556
      %v1586 = vadd.f32 %v1522, %v1561
      %v1587 = vadd.f32 %v1523, %v1561
      %v1588 = vadd.f32 %v1524, %v1566
      %v1589 = vadd.f32 %v1525, %v1566
      %v1590 = vadd.f32 %v1526, %v1571
      %v1591 = vadd.f32 %v1527, %v1571
      %v1592 = vadd.f32 %v1528, %v1576
      %v1593 = vadd.f32 %v1529, %v1576
      %1594 = vst [vmem:[%s371] sm:$0xff] %v1578
      %1595 = vst [vmem:[%s371 + $0x8] sm:$0xff] %v1579
      %1596 = vst [vmem:[%s371 + $0x10] sm:$0xff] %v1580
      %1597 = vst [vmem:[%s371 + $0x18] sm:$0xff] %v1581
      %1598 = vst [vmem:[%s371 + $0x20] sm:$0xff] %v1582
      %1599 = vst [vmem:[%s371 + $0x28] sm:$0xff] %v1583
      %1600 = vst [vmem:[%s371 + $0x30] sm:$0xff] %v1584
      %1601 = vst [vmem:[%s371 + $0x38] sm:$0xff] %v1585
      %1602 = vst [vmem:[%s371 + $0x40] sm:$0xff] %v1586
      %1603 = vst [vmem:[%s371 + $0x48] sm:$0xff] %v1587
      %1604 = vst [vmem:[%s371 + $0x50] sm:$0xff] %v1588
      %1605 = vst [vmem:[%s371 + $0x58] sm:$0xff] %v1589
      %1606 = vst [vmem:[%s371 + $0x60] sm:$0xff] %v1590
      %1607 = vst [vmem:[%s371 + $0x68] sm:$0xff] %v1591
      %1608 = vst [vmem:[%s371 + $0x70] sm:$0xff] %v1592
      %1609 = vst [vmem:[%s371 + $0x78] sm:$0xff] %v1593
      %s1610 = smul.u32 2, %s22
      %p1611 = scmp.lt.s32.totalorder %s21, 1
      %s1612 = scalar_select %p1611, %s21, 1
      %p1613 = scmp.lt.s32.totalorder %s1610, 1
      %s1614 = scalar_select %p1613, %s1610, 1
      %s1615 = smul.addr %s1612, 16
      %s1616 = sadd.s32 %s1614, %s1615
      %s1617 = smul.addr %s1616, 8
      %s1618 = scalar_lea.vmem %s6, %s1617
      // Predicated region
      $region45: #{decoder_attn_block.5} parent=43 // pred_check
        %p1619 = pneg %p199
      $region46: #{decoder_attn_block.5} parent=43 // pred_check_branch
        %1621 = sbr.rel (%p1619) target = $region48
      $region47: #{decoder_attn_block.5} parent=43 // pred_region
        %s1622 = smul.u32 2, %s22
      $region48: #{decoder_attn_block.5} parent=43 // pred_fallthru
        _
    $region44: #{decoder_attn_block.5} parent=5 // pred_fallthru
      _
    %p1623 = scmp.le.s32.totalorder 2, %s12
    // Predicated region
    $region49: #{decoder_attn_block.5} parent=5 // pred_check
      %p1624 = pneg %p1623
    $region50: #{decoder_attn_block.5} parent=5 // pred_check_branch
      %1626 = sbr.rel (%p1624) target = $region52
    $region51: #{decoder_attn_block.5} parent=5 // pred_region
      %s1627 = ssub.s32 %s12, 2
      // Predicated region
      $region53: #{decoder_attn_block.5} parent=51 // pred_check
        %p1628 = pneg %p205
      $region54: #{decoder_attn_block.5} parent=51 // pred_check_branch
        %1630 = sbr.rel (%p1628) target = $region56
      $region55: #{decoder_attn_block.5} parent=51 // pred_region
        %s1631 = smul.u32 2, %s24
        %p1632 = scmp.lt.s32.totalorder %s23, 1
        %s1633 = scalar_select %p1632, %s23, 1
        %p1634 = scmp.lt.s32.totalorder %s1631, 1
        %s1635 = scalar_select %p1634, %s1631, 1
        %s1636 = smul.addr %s1633, 16
        %s1637 = sadd.s32 %s1635, %s1636
        %s1638 = smul.addr %s1637, 8
        %s1639 = scalar_lea.vmem %s6, %s1638
      $region56: #{decoder_attn_block.5} parent=51 // pred_fallthru
        _
    $region52: #{decoder_attn_block.5} parent=5 // pred_fallthru
      _
  $region6: #{decoder_attn_block.5} parent=0 // loop_footer
    %s16 = sadd.s32 1, %s12
  $region7: #{decoder_attn_block.5} parent=0 // loop_footer_branch
    %11 = sbr.rel target = $region3
  $region8: #{decoder_attn_block.5} parent=0 // loop_exit
    _

</llo_original>
